<compile_context>
chip_gen: v7x
topology: tpu7x:2x2x1
jax: 0.10.0
libtpu: 0.0.40
codegen_flags: <defaults>
</compile_context>

<pallas_src>
import functools

import jax
import jax.numpy as jnp
from jax.experimental import pallas as pl
from jax.experimental.pallas import tpu as pltpu


def _round_up(x, m):
    return ((x + m - 1) // m) * m


# ---------------------------------------------------------------------------
# Single fused DMN forward kernel
# ---------------------------------------------------------------------------
def _dmn_kernel(
        s_ids_ref, s_msk_ref, q_ids_ref, q_msk_ref, fact_msk_ref,
        emb_ref,
        iw_ih_ref, iw_hh_ref, ib_ih_ref, ib_hh_ref,          # input GRU
        qw_ih_ref, qw_hh_ref, qb_ih_ref, qb_hh_ref,          # question GRU
        w1q_ref, w1m_ref, b1_ref, w2_ref, b2_ref,            # attention MLP
        mw_ih_ref, mw_hh_ref, mb_ih_ref, mb_hh_ref,          # m_cell GRUCell
        wa_ref, ba_ref,                                      # answer linear
        gates_ref, logits_ref,
        *, B, T, Ls, Ns, Lq, Nq, E):
    Hg = iw_hh_ref.shape[0]            # per-gate lane-padded hidden width (multiple of 128)
    vocab = emb_ref.shape[0]
    A = w1q_ref.shape[1]
    Tp = gates_ref.shape[2]

    emb = emb_ref[...]                                       # (vocab, D)

    def onehot(ids):                                         # (R, 1) int32 -> (R, vocab) f32
        R = ids.shape[0]
        lanes = jax.lax.broadcasted_iota(jnp.int32, (R, vocab), 1)
        return (lanes == ids).astype(jnp.float32)

    def gru_seq(ids_ref, msk_ref, w_ih, w_hh, b_ih, b_hh, L, N):
        # Token gather + per-step input projection fused: onehot @ (emb @ w_ih).
        emb_w = jnp.dot(emb, w_ih, preferred_element_type=jnp.float32)        # (vocab, 3Hg)
        gi_all = jnp.dot(onehot(ids_ref[...]), emb_w,
                         preferred_element_type=jnp.float32) + b_ih           # (L*N, 3Hg)
        msk_all = msk_ref[...]                                                # (L*N, 1)
        h = jnp.zeros((N, Hg), jnp.float32)
        # TODO(synk): switch to lax.fori_loop(unroll=True) + pl.ds once L grows.
        for t in range(L):
            gi = gi_all[t * N:(t + 1) * N]                    # sublane-aligned row slice
            m = msk_all[t * N:(t + 1) * N]                    # (N, 1) precomputed validity
            gh = jnp.dot(h, w_hh, preferred_element_type=jnp.float32) + b_hh
            r = jax.nn.sigmoid(gi[:, :Hg] + gh[:, :Hg])       # 128-lane aligned gate slices
            z = jax.nn.sigmoid(gi[:, Hg:2 * Hg] + gh[:, Hg:2 * Hg])
            n = jnp.tanh(gi[:, 2 * Hg:] + r * gh[:, 2 * Hg:])
            h_new = (1.0 - z) * n + z * h
            h = h + m * (h_new - h)                           # hold last valid state
        return h

    # InputModule (all B*T sentences in one batch) and QuestionModule
    facts = gru_seq(s_ids_ref, s_msk_ref, iw_ih_ref[...], iw_hh_ref[...],
                    ib_ih_ref[...], ib_hh_ref[...], Ls, Ns)                   # (Ns, Hg)
    q_all = gru_seq(q_ids_ref, q_msk_ref, qw_ih_ref[...], qw_hh_ref[...],
                    qb_ih_ref[...], qb_hh_ref[...], Lq, Nq)                   # (Nq, Hg)

    f3 = facts[:B * T].reshape(B, T, Hg)
    q = q_all[:B]                                                             # (B, Hg)
    mask = fact_msk_ref[...]                                                  # (B, T)

    # Question-dependent half of the attention MLP is episode-invariant: hoist,
    # one 2Hg-deep matmul (lane concat at a 128 boundary is tile-aligned).
    q3 = q[:, None, :]
    feat_q = jnp.concatenate([(f3 * q3).reshape(B * T, Hg),
                              jnp.abs(f3 - q3).reshape(B * T, Hg)], axis=-1)  # (B*T, 2Hg)
    hid_q = jnp.dot(feat_q, w1q_ref[...],
                    preferred_element_type=jnp.float32) + b1_ref[...]         # (B*T, A)

    w1m = w1m_ref[...]
    w2 = w2_ref[...]
    b2 = b2_ref[...]
    mw_ih = mw_ih_ref[...]
    mw_hh = mw_hh_ref[...]
    mb_ih = mb_ih_ref[...]
    mb_hh = mb_hh_ref[...]

    memory = q
    for ep in range(E):                                       # E static & small -> unrolled
        m3 = memory[:, None, :]
        feat_m = jnp.concatenate([(f3 * m3).reshape(B * T, Hg),
                                  jnp.abs(f3 - m3).reshape(B * T, Hg)], axis=-1)
        hid = jnp.tanh(hid_q + jnp.dot(feat_m, w1m,
                                       preferred_element_type=jnp.float32))   # (B*T, A)
        # width-1 output head: lane reduction instead of another MXU pass
        score = jnp.sum(hid.reshape(B, T, A) * w2, axis=-1) + b2              # (B, T)
        score = jnp.where(mask > 0.0, score, -1e30)
        score = score - jnp.max(score, axis=-1, keepdims=True)
        expv = jnp.exp(score)
        gates = expv / jnp.sum(expv, axis=-1, keepdims=True)                  # (B, T)
        # lane-dense per-episode store into the (E, B, Tp) output slab
        gates_ref[ep] = jnp.concatenate(
            [gates, jnp.zeros((B, Tp - T), jnp.float32)], axis=-1)
        e_rep = jnp.sum(gates[:, :, None] * f3, axis=1)                       # (B, Hg)

        # m_cell: PyTorch GRUCell(e_rep, memory), gate order [r, z, n]
        gi = jnp.dot(e_rep, mw_ih, preferred_element_type=jnp.float32) + mb_ih
        gh = jnp.dot(memory, mw_hh, preferred_element_type=jnp.float32) + mb_hh
        r = jax.nn.sigmoid(gi[:, :Hg] + gh[:, :Hg])
        z = jax.nn.sigmoid(gi[:, Hg:2 * Hg] + gh[:, Hg:2 * Hg])
        n = jnp.tanh(gi[:, 2 * Hg:] + r * gh[:, 2 * Hg:])
        memory = (1.0 - z) * n + z * memory

    # AnswerModule: Linear on concat([memory, q_rep]) as one 2Hg-deep matmul,
    # lane-dense (Vp-padded) logits store.
    cat = jnp.concatenate([memory, q], axis=-1)                               # (B, 2Hg)
    logits_ref[...] = jnp.dot(cat, wa_ref[...],
                              preferred_element_type=jnp.float32) + ba_ref[...]


# ---------------------------------------------------------------------------
# Wrapper: one-time weight repacking into the lane-padded kernel layout
# ---------------------------------------------------------------------------
def _pad_gate_cols(w, H, Hg):
    """(R, 3H) -> (R, 3Hg): each gate block [r|z|n] gets its own Hg-lane block."""
    R = w.shape[0]
    out = jnp.zeros((R, 3 * Hg), w.dtype)
    for g in range(3):
        out = out.at[:, g * Hg:g * Hg + H].set(w[:, g * H:(g + 1) * H])
    return out


def _pad_gru(p, H, Hg, pad_rows):
    w_ih = _pad_gate_cols(p["w_ih"], H, Hg)
    if pad_rows:
        w_ih = jnp.pad(w_ih, ((0, Hg - H), (0, 0)))
    return {
        "w_ih": w_ih,
        "w_hh": jnp.pad(_pad_gate_cols(p["w_hh"], H, Hg), ((0, Hg - H), (0, 0))),
        "b_ih": _pad_gate_cols(p["b_ih"], H, Hg),
        "b_hh": _pad_gate_cols(p["b_hh"], H, Hg),
    }


def prepare_params(params):
    """Repack logical weights into the padded per-gate-128-lane kernel layout."""
    H = params["m_cell"]["w_hh"].shape[0]
    Hg = _round_up(H, 128)
    V = params["answer"]["w"].shape[1]
    Vp = _round_up(V, 128)
    A = params["attention"]["w1"].shape[1]

    w1 = params["attention"]["w1"]                    # (4H, A): [f*q, f*m, |f-q|, |f-m|]

    def _stack2(blk_a, blk_b):
        out = jnp.zeros((2 * Hg, A), w1.dtype)
        out = out.at[:H].set(blk_a)
        out = out.at[Hg:Hg + H].set(blk_b)
        return out

    w1q = _stack2(w1[:H], w1[2 * H:3 * H])            # question-dependent half
    w1m = _stack2(w1[H:2 * H], w1[3 * H:])            # memory-dependent half

    wa = params["answer"]["w"]                        # (2H, V): [memory ; q_rep]
    wa_p = jnp.zeros((2 * Hg, Vp), wa.dtype)
    wa_p = wa_p.at[:H, :V].set(wa[:H])
    wa_p = wa_p.at[Hg:Hg + H, :V].set(wa[H:])
    ba_p = jnp.zeros((1, Vp), wa.dtype).at[:, :V].set(params["answer"]["b"])

    return {
        "embedding": params["embedding"],
        "input_gru": _pad_gru(params["input_gru"], H, Hg, pad_rows=False),
        "question_gru": _pad_gru(params["question_gru"], H, Hg, pad_rows=False),
        "m_cell": _pad_gru(params["m_cell"], H, Hg, pad_rows=True),
        "attention": {"w1q": w1q, "w1m": w1m,
                      "b1": params["attention"]["b1"],
                      "w2": params["attention"]["w2"].reshape(1, A),
                      "b2": params["attention"]["b2"]},
        "answer": {"w": wa_p, "b": ba_p},
    }


# ---------------------------------------------------------------------------
# DMN forward (single pallas_call)
# ---------------------------------------------------------------------------
def dmn_forward(pp, stories, questions, s_lens, q_lens, e_lens, max_episode):
    B, T, Ls = stories.shape
    Lq = questions.shape[1]
    V = pp["embedding"].shape[0]
    Vp = pp["answer"]["w"].shape[1]
    Tp = _round_up(T, 128)
    Ns = _round_up(B * T, 8)
    Nq = _round_up(B, 8)

    def time_major(ids2d, lens1d, N, L):
        rows = ids2d.shape[0]
        ids_p = jnp.pad(ids2d, ((0, N - rows), (0, 0)))
        lens_p = jnp.pad(lens1d, ((0, N - rows),))
        ids_tm = jnp.transpose(ids_p, (1, 0)).reshape(L * N, 1).astype(jnp.int32)
        step = jnp.arange(L, dtype=jnp.int32)[:, None]
        msk = (step < lens_p[None, :]).astype(jnp.float32).reshape(L * N, 1)
        return ids_tm, msk

    s_ids, s_msk = time_major(stories.reshape(B * T, Ls), s_lens.reshape(B * T), Ns, Ls)
    q_ids, q_msk = time_major(questions, q_lens, Nq, Lq)
    fact_msk = (jnp.arange(T)[None, :] < e_lens[:, None]).astype(jnp.float32)

    inputs = (
        s_ids, s_msk, q_ids, q_msk, fact_msk,
        pp["embedding"],
        pp["input_gru"]["w_ih"], pp["input_gru"]["w_hh"],
        pp["input_gru"]["b_ih"], pp["input_gru"]["b_hh"],
        pp["question_gru"]["w_ih"], pp["question_gru"]["w_hh"],
        pp["question_gru"]["b_ih"], pp["question_gru"]["b_hh"],
        pp["attention"]["w1q"], pp["attention"]["w1m"], pp["attention"]["b1"],
        pp["attention"]["w2"], pp["attention"]["b2"],
        pp["m_cell"]["w_ih"], pp["m_cell"]["w_hh"],
        pp["m_cell"]["b_ih"], pp["m_cell"]["b_hh"],
        pp["answer"]["w"], pp["answer"]["b"],
    )

    kernel = functools.partial(_dmn_kernel, B=B, T=T, Ls=Ls, Ns=Ns, Lq=Lq, Nq=Nq,
                               E=max_episode)
    vmem = pl.BlockSpec(memory_space=pltpu.MemorySpace.VMEM)
    gates_raw, logits_raw = pl.pallas_call(
        kernel,
        out_shape=(jax.ShapeDtypeStruct((max_episode, B, Tp), jnp.float32),
                   jax.ShapeDtypeStruct((B, Vp), jnp.float32)),
        in_specs=[vmem] * len(inputs),
        out_specs=(vmem, vmem),
    )(*inputs)

    outputs = logits_raw[:, :V]
    gates = jnp.transpose(gates_raw[:, :, :T], (1, 0, 2))     # (B, E, T)
    return outputs, gates


# ---------------------------------------------------------------------------
# Deterministic parameter construction (logical / unpadded layout)
# ---------------------------------------------------------------------------
def init_gru_params(key, in_dim, hidden):
    k1, k2, k3, k4 = jax.random.split(key, 4)
    s = 1.0 / jnp.sqrt(jnp.float32(hidden))
    return {
        "w_ih": jax.random.uniform(k1, (in_dim, 3 * hidden), jnp.float32, -s, s),
        "w_hh": jax.random.uniform(k2, (hidden, 3 * hidden), jnp.float32, -s, s),
        "b_ih": jax.random.uniform(k3, (1, 3 * hidden), jnp.float32, -s, s),
        "b_hh": jax.random.uniform(k4, (1, 3 * hidden), jnp.float32, -s, s),
    }


def init_params(key, vocab, embed_dim, hidden, attn_hidden):
    ks = jax.random.split(key, 10)
    embedding = jax.random.normal(ks[0], (vocab, embed_dim), jnp.float32) * 0.1
    embedding = embedding.at[0].set(0.0)                  # padding_idx = 0, frozen idx2vec
    return {
        "embedding": embedding,
        "input_gru": init_gru_params(ks[1], embed_dim, hidden),
        "question_gru": init_gru_params(ks[2], embed_dim, hidden),
        "m_cell": init_gru_params(ks[3], hidden, hidden),
        "attention": {
            "w1": jax.random.normal(ks[4], (4 * hidden, attn_hidden), jnp.float32) * 0.1,
            "b1": jnp.zeros((1, attn_hidden), jnp.float32),
            "w2": jax.random.normal(ks[5], (attn_hidden, 1), jnp.float32) * 0.1,
            "b2": jnp.zeros((1, 1), jnp.float32),
        },
        "answer": {
            "w": jax.random.normal(ks[6], (2 * hidden, vocab), jnp.float32) * 0.1,
            "b": jnp.zeros((1, vocab), jnp.float32),
        },
    }


# ---------------------------------------------------------------------------
if __name__ == "__main__":
    B, T_SENT, SENT_LEN, Q_LEN = 2, 4, 6, 5
    VOCAB, EMBED_DIM, HIDDEN, ATTN_HIDDEN = 32, 16, 32, 32
    MAX_EPISODE = 3

    root = jax.random.PRNGKey(0)
    k_par, k_s, k_q = jax.random.split(root, 3)

    params = init_params(k_par, VOCAB, EMBED_DIM, HIDDEN, ATTN_HIDDEN)
    padded_params = prepare_params(params)                # one-time repack

    stories = jax.random.randint(k_s, (B, T_SENT, SENT_LEN), 1, VOCAB, dtype=jnp.int32)
    questions = jax.random.randint(k_q, (B, Q_LEN), 1, VOCAB, dtype=jnp.int32)
    s_lens = jnp.array([[6, 5, 4, 3], [4, 6, 2, 5]], jnp.int32)   # words per sentence
    q_lens = jnp.array([5, 4], jnp.int32)                         # words per question
    e_lens = jnp.array([4, 3], jnp.int32)                         # valid facts per story

    fwd = jax.jit(dmn_forward, static_argnums=(6,))
    outputs, gates = fwd(padded_params, stories, questions, s_lens, q_lens, e_lens,
                         MAX_EPISODE)
    jax.block_until_ready((outputs, gates))

    assert outputs.shape == (B, VOCAB)
    assert gates.shape == (B, MAX_EPISODE, T_SENT)
    print("KERNEL_OK")
</pallas_src>

<mosaic_0001>
module attributes {stable_mosaic.version = 11 : i64} {
  func.func @_dmn_kernel(%arg0: memref<48x1xi32, #tpu.memory_space<vmem>>, %arg1: memref<48x1xf32, #tpu.memory_space<vmem>>, %arg2: memref<40x1xi32, #tpu.memory_space<vmem>>, %arg3: memref<40x1xf32, #tpu.memory_space<vmem>>, %arg4: memref<2x4xf32, #tpu.memory_space<vmem>>, %arg5: memref<32x16xf32, #tpu.memory_space<vmem>>, %arg6: memref<16x384xf32, #tpu.memory_space<vmem>>, %arg7: memref<128x384xf32, #tpu.memory_space<vmem>>, %arg8: memref<1x384xf32, #tpu.memory_space<vmem>>, %arg9: memref<1x384xf32, #tpu.memory_space<vmem>>, %arg10: memref<16x384xf32, #tpu.memory_space<vmem>>, %arg11: memref<128x384xf32, #tpu.memory_space<vmem>>, %arg12: memref<1x384xf32, #tpu.memory_space<vmem>>, %arg13: memref<1x384xf32, #tpu.memory_space<vmem>>, %arg14: memref<256x32xf32, #tpu.memory_space<vmem>>, %arg15: memref<256x32xf32, #tpu.memory_space<vmem>>, %arg16: memref<1x32xf32, #tpu.memory_space<vmem>>, %arg17: memref<1x32xf32, #tpu.memory_space<vmem>>, %arg18: memref<1x1xf32, #tpu.memory_space<vmem>>, %arg19: memref<128x384xf32, #tpu.memory_space<vmem>>, %arg20: memref<128x384xf32, #tpu.memory_space<vmem>>, %arg21: memref<1x384xf32, #tpu.memory_space<vmem>>, %arg22: memref<1x384xf32, #tpu.memory_space<vmem>>, %arg23: memref<256x128xf32, #tpu.memory_space<vmem>>, %arg24: memref<1x128xf32, #tpu.memory_space<vmem>>, %arg25: memref<3x2x128xf32, #tpu.memory_space<vmem>>, %arg26: memref<2x128xf32, #tpu.memory_space<vmem>>) attributes {dimension_semantics = [], scalar_prefetch = 0 : i64, scratch_operands = 0 : i64, tpu.core_type = #tpu.core_type<tc>} {
    %c0 = arith.constant 0 : index
    %c0_0 = arith.constant 0 : index
    %0 = vector.load %arg5[%c0, %c0_0] : memref<32x16xf32, #tpu.memory_space<vmem>>, vector<32x16xf32>
    %c0_1 = arith.constant 0 : index
    %c0_2 = arith.constant 0 : index
    %1 = vector.load %arg6[%c0_1, %c0_2] : memref<16x384xf32, #tpu.memory_space<vmem>>, vector<16x384xf32>
    %c0_3 = arith.constant 0 : index
    %c0_4 = arith.constant 0 : index
    %2 = vector.load %arg7[%c0_3, %c0_4] : memref<128x384xf32, #tpu.memory_space<vmem>>, vector<128x384xf32>
    %c0_5 = arith.constant 0 : index
    %c0_6 = arith.constant 0 : index
    %3 = vector.load %arg8[%c0_5, %c0_6] : memref<1x384xf32, #tpu.memory_space<vmem>>, vector<1x384xf32>
    %c0_7 = arith.constant 0 : index
    %c0_8 = arith.constant 0 : index
    %4 = vector.load %arg9[%c0_7, %c0_8] : memref<1x384xf32, #tpu.memory_space<vmem>>, vector<1x384xf32>
    %cst = arith.constant dense<0.000000e+00> : vector<32x384xf32>
    %5 = tpu.matmul %0, %1, %cst {dimension_numbers = #tpu.dot_dimension_numbers<[1], [0], [0], [1], [0, 0, 1, 1], [], []>} : vector<32x16xf32>, vector<16x384xf32>, vector<32x384xf32> -> vector<32x384xf32>
    %c0_9 = arith.constant 0 : index
    %c0_10 = arith.constant 0 : index
    %6 = vector.load %arg0[%c0_9, %c0_10] : memref<48x1xi32, #tpu.memory_space<vmem>>, vector<48x1xi32>
    %7 = tpu.iota {dimensions = array<i32: 1>} : vector<48x32xi32>
    %8 = vector.broadcast %6 : vector<48x1xi32> to vector<48x32xi32>
    %9 = arith.cmpi eq, %7, %8 : vector<48x32xi32>
    %10 = arith.extui %9 : vector<48x32xi1> to vector<48x32xi32>
    %11 = arith.sitofp %10 : vector<48x32xi32> to vector<48x32xf32>
    %cst_11 = arith.constant dense<0.000000e+00> : vector<48x384xf32>
    %12 = tpu.matmul %11, %5, %cst_11 {dimension_numbers = #tpu.dot_dimension_numbers<[1], [0], [0], [1], [0, 0, 1, 1], [], []>} : vector<48x32xf32>, vector<32x384xf32>, vector<48x384xf32> -> vector<48x384xf32>
    %13 = vector.broadcast %3 : vector<1x384xf32> to vector<48x384xf32>
    %14 = arith.addf %12, %13 : vector<48x384xf32>
    %c0_12 = arith.constant 0 : index
    %c0_13 = arith.constant 0 : index
    %15 = vector.load %arg1[%c0_12, %c0_13] : memref<48x1xf32, #tpu.memory_space<vmem>>, vector<48x1xf32>
    %cst_14 = arith.constant 0.000000e+00 : f32
    %16 = vector.broadcast %cst_14 : f32 to vector<8x128xf32>
    %17 = vector.extract_strided_slice %14 {offsets = [0, 0], sizes = [8, 384], strides = [1, 1]} : vector<48x384xf32> to vector<8x384xf32>
    %18 = vector.extract_strided_slice %15 {offsets = [0, 0], sizes = [8, 1], strides = [1, 1]} : vector<48x1xf32> to vector<8x1xf32>
    %cst_15 = arith.constant dense<0.000000e+00> : vector<8x384xf32>
    %19 = tpu.matmul %16, %2, %cst_15 {dimension_numbers = #tpu.dot_dimension_numbers<[1], [0], [0], [1], [0, 0, 1, 1], [], []>} : vector<8x128xf32>, vector<128x384xf32>, vector<8x384xf32> -> vector<8x384xf32>
    %20 = vector.broadcast %4 : vector<1x384xf32> to vector<8x384xf32>
    %21 = arith.addf %19, %20 : vector<8x384xf32>
    %22 = vector.extract_strided_slice %17 {offsets = [0, 0], sizes = [8, 128], strides = [1, 1]} : vector<8x384xf32> to vector<8x128xf32>
    %23 = vector.extract_strided_slice %21 {offsets = [0, 0], sizes = [8, 128], strides = [1, 1]} : vector<8x384xf32> to vector<8x128xf32>
    %24 = arith.addf %22, %23 : vector<8x128xf32>
    %25 = arith.negf %24 : vector<8x128xf32>
    %26 = math.exp %25 : vector<8x128xf32>
    %cst_16 = arith.constant 1.000000e+00 : f32
    %27 = vector.broadcast %cst_16 : f32 to vector<8x128xf32>
    %28 = arith.addf %27, %26 : vector<8x128xf32>
    %29 = arith.divf %27, %28 : vector<8x128xf32>
    %30 = vector.extract_strided_slice %17 {offsets = [0, 128], sizes = [8, 128], strides = [1, 1]} : vector<8x384xf32> to vector<8x128xf32>
    %31 = vector.extract_strided_slice %21 {offsets = [0, 128], sizes = [8, 128], strides = [1, 1]} : vector<8x384xf32> to vector<8x128xf32>
    %32 = arith.addf %30, %31 : vector<8x128xf32>
    %33 = arith.negf %32 : vector<8x128xf32>
    %34 = math.exp %33 : vector<8x128xf32>
    %cst_17 = arith.constant 1.000000e+00 : f32
    %35 = vector.broadcast %cst_17 : f32 to vector<8x128xf32>
    %36 = arith.addf %35, %34 : vector<8x128xf32>
    %37 = arith.divf %35, %36 : vector<8x128xf32>
    %38 = vector.extract_strided_slice %17 {offsets = [0, 256], sizes = [8, 128], strides = [1, 1]} : vector<8x384xf32> to vector<8x128xf32>
    %39 = vector.extract_strided_slice %21 {offsets = [0, 256], sizes = [8, 128], strides = [1, 1]} : vector<8x384xf32> to vector<8x128xf32>
    %40 = arith.mulf %29, %39 : vector<8x128xf32>
    %41 = arith.addf %38, %40 : vector<8x128xf32>
    %42 = math.tanh %41 : vector<8x128xf32>
    %cst_18 = arith.constant 1.000000e+00 : f32
    %43 = vector.broadcast %cst_18 : f32 to vector<8x128xf32>
    %44 = arith.subf %43, %37 : vector<8x128xf32>
    %45 = arith.mulf %44, %42 : vector<8x128xf32>
    %46 = arith.mulf %37, %16 : vector<8x128xf32>
    %47 = arith.addf %45, %46 : vector<8x128xf32>
    %48 = arith.subf %47, %16 : vector<8x128xf32>
    %49 = vector.broadcast %18 : vector<8x1xf32> to vector<8x128xf32>
    %50 = arith.mulf %49, %48 : vector<8x128xf32>
    %51 = arith.addf %16, %50 : vector<8x128xf32>
    %52 = vector.extract_strided_slice %14 {offsets = [8, 0], sizes = [8, 384], strides = [1, 1]} : vector<48x384xf32> to vector<8x384xf32>
    %53 = vector.extract_strided_slice %15 {offsets = [8, 0], sizes = [8, 1], strides = [1, 1]} : vector<48x1xf32> to vector<8x1xf32>
    %cst_19 = arith.constant dense<0.000000e+00> : vector<8x384xf32>
    %54 = tpu.matmul %51, %2, %cst_19 {dimension_numbers = #tpu.dot_dimension_numbers<[1], [0], [0], [1], [0, 0, 1, 1], [], []>} : vector<8x128xf32>, vector<128x384xf32>, vector<8x384xf32> -> vector<8x384xf32>
    %55 = vector.broadcast %4 : vector<1x384xf32> to vector<8x384xf32>
    %56 = arith.addf %54, %55 : vector<8x384xf32>
    %57 = vector.extract_strided_slice %52 {offsets = [0, 0], sizes = [8, 128], strides = [1, 1]} : vector<8x384xf32> to vector<8x128xf32>
    %58 = vector.extract_strided_slice %56 {offsets = [0, 0], sizes = [8, 128], strides = [1, 1]} : vector<8x384xf32> to vector<8x128xf32>
    %59 = arith.addf %57, %58 : vector<8x128xf32>
    %60 = arith.negf %59 : vector<8x128xf32>
    %61 = math.exp %60 : vector<8x128xf32>
    %cst_20 = arith.constant 1.000000e+00 : f32
    %62 = vector.broadcast %cst_20 : f32 to vector<8x128xf32>
    %63 = arith.addf %62, %61 : vector<8x128xf32>
    %64 = arith.divf %62, %63 : vector<8x128xf32>
    %65 = vector.extract_strided_slice %52 {offsets = [0, 128], sizes = [8, 128], strides = [1, 1]} : vector<8x384xf32> to vector<8x128xf32>
    %66 = vector.extract_strided_slice %56 {offsets = [0, 128], sizes = [8, 128], strides = [1, 1]} : vector<8x384xf32> to vector<8x128xf32>
    %67 = arith.addf %65, %66 : vector<8x128xf32>
    %68 = arith.negf %67 : vector<8x128xf32>
    %69 = math.exp %68 : vector<8x128xf32>
    %cst_21 = arith.constant 1.000000e+00 : f32
    %70 = vector.broadcast %cst_21 : f32 to vector<8x128xf32>
    %71 = arith.addf %70, %69 : vector<8x128xf32>
    %72 = arith.divf %70, %71 : vector<8x128xf32>
    %73 = vector.extract_strided_slice %52 {offsets = [0, 256], sizes = [8, 128], strides = [1, 1]} : vector<8x384xf32> to vector<8x128xf32>
    %74 = vector.extract_strided_slice %56 {offsets = [0, 256], sizes = [8, 128], strides = [1, 1]} : vector<8x384xf32> to vector<8x128xf32>
    %75 = arith.mulf %64, %74 : vector<8x128xf32>
    %76 = arith.addf %73, %75 : vector<8x128xf32>
    %77 = math.tanh %76 : vector<8x128xf32>
    %cst_22 = arith.constant 1.000000e+00 : f32
    %78 = vector.broadcast %cst_22 : f32 to vector<8x128xf32>
    %79 = arith.subf %78, %72 : vector<8x128xf32>
    %80 = arith.mulf %79, %77 : vector<8x128xf32>
    %81 = arith.mulf %72, %51 : vector<8x128xf32>
    %82 = arith.addf %80, %81 : vector<8x128xf32>
    %83 = arith.subf %82, %51 : vector<8x128xf32>
    %84 = vector.broadcast %53 : vector<8x1xf32> to vector<8x128xf32>
    %85 = arith.mulf %84, %83 : vector<8x128xf32>
    %86 = arith.addf %51, %85 : vector<8x128xf32>
    %87 = vector.extract_strided_slice %14 {offsets = [16, 0], sizes = [8, 384], strides = [1, 1]} : vector<48x384xf32> to vector<8x384xf32>
    %88 = vector.extract_strided_slice %15 {offsets = [16, 0], sizes = [8, 1], strides = [1, 1]} : vector<48x1xf32> to vector<8x1xf32>
    %cst_23 = arith.constant dense<0.000000e+00> : vector<8x384xf32>
    %89 = tpu.matmul %86, %2, %cst_23 {dimension_numbers = #tpu.dot_dimension_numbers<[1], [0], [0], [1], [0, 0, 1, 1], [], []>} : vector<8x128xf32>, vector<128x384xf32>, vector<8x384xf32> -> vector<8x384xf32>
    %90 = vector.broadcast %4 : vector<1x384xf32> to vector<8x384xf32>
    %91 = arith.addf %89, %90 : vector<8x384xf32>
    %92 = vector.extract_strided_slice %87 {offsets = [0, 0], sizes = [8, 128], strides = [1, 1]} : vector<8x384xf32> to vector<8x128xf32>
    %93 = vector.extract_strided_slice %91 {offsets = [0, 0], sizes = [8, 128], strides = [1, 1]} : vector<8x384xf32> to vector<8x128xf32>
    %94 = arith.addf %92, %93 : vector<8x128xf32>
    %95 = arith.negf %94 : vector<8x128xf32>
    %96 = math.exp %95 : vector<8x128xf32>
    %cst_24 = arith.constant 1.000000e+00 : f32
    %97 = vector.broadcast %cst_24 : f32 to vector<8x128xf32>
    %98 = arith.addf %97, %96 : vector<8x128xf32>
    %99 = arith.divf %97, %98 : vector<8x128xf32>
    %100 = vector.extract_strided_slice %87 {offsets = [0, 128], sizes = [8, 128], strides = [1, 1]} : vector<8x384xf32> to vector<8x128xf32>
    %101 = vector.extract_strided_slice %91 {offsets = [0, 128], sizes = [8, 128], strides = [1, 1]} : vector<8x384xf32> to vector<8x128xf32>
    %102 = arith.addf %100, %101 : vector<8x128xf32>
    %103 = arith.negf %102 : vector<8x128xf32>
    %104 = math.exp %103 : vector<8x128xf32>
    %cst_25 = arith.constant 1.000000e+00 : f32
    %105 = vector.broadcast %cst_25 : f32 to vector<8x128xf32>
    %106 = arith.addf %105, %104 : vector<8x128xf32>
    %107 = arith.divf %105, %106 : vector<8x128xf32>
    %108 = vector.extract_strided_slice %87 {offsets = [0, 256], sizes = [8, 128], strides = [1, 1]} : vector<8x384xf32> to vector<8x128xf32>
    %109 = vector.extract_strided_slice %91 {offsets = [0, 256], sizes = [8, 128], strides = [1, 1]} : vector<8x384xf32> to vector<8x128xf32>
    %110 = arith.mulf %99, %109 : vector<8x128xf32>
    %111 = arith.addf %108, %110 : vector<8x128xf32>
    %112 = math.tanh %111 : vector<8x128xf32>
    %cst_26 = arith.constant 1.000000e+00 : f32
    %113 = vector.broadcast %cst_26 : f32 to vector<8x128xf32>
    %114 = arith.subf %113, %107 : vector<8x128xf32>
    %115 = arith.mulf %114, %112 : vector<8x128xf32>
    %116 = arith.mulf %107, %86 : vector<8x128xf32>
    %117 = arith.addf %115, %116 : vector<8x128xf32>
    %118 = arith.subf %117, %86 : vector<8x128xf32>
    %119 = vector.broadcast %88 : vector<8x1xf32> to vector<8x128xf32>
    %120 = arith.mulf %119, %118 : vector<8x128xf32>
    %121 = arith.addf %86, %120 : vector<8x128xf32>
    %122 = vector.extract_strided_slice %14 {offsets = [24, 0], sizes = [8, 384], strides = [1, 1]} : vector<48x384xf32> to vector<8x384xf32>
    %123 = vector.extract_strided_slice %15 {offsets = [24, 0], sizes = [8, 1], strides = [1, 1]} : vector<48x1xf32> to vector<8x1xf32>
    %cst_27 = arith.constant dense<0.000000e+00> : vector<8x384xf32>
    %124 = tpu.matmul %121, %2, %cst_27 {dimension_numbers = #tpu.dot_dimension_numbers<[1], [0], [0], [1], [0, 0, 1, 1], [], []>} : vector<8x128xf32>, vector<128x384xf32>, vector<8x384xf32> -> vector<8x384xf32>
    %125 = vector.broadcast %4 : vector<1x384xf32> to vector<8x384xf32>
    %126 = arith.addf %124, %125 : vector<8x384xf32>
    %127 = vector.extract_strided_slice %122 {offsets = [0, 0], sizes = [8, 128], strides = [1, 1]} : vector<8x384xf32> to vector<8x128xf32>
    %128 = vector.extract_strided_slice %126 {offsets = [0, 0], sizes = [8, 128], strides = [1, 1]} : vector<8x384xf32> to vector<8x128xf32>
    %129 = arith.addf %127, %128 : vector<8x128xf32>
    %130 = arith.negf %129 : vector<8x128xf32>
    %131 = math.exp %130 : vector<8x128xf32>
    %cst_28 = arith.constant 1.000000e+00 : f32
    %132 = vector.broadcast %cst_28 : f32 to vector<8x128xf32>
    %133 = arith.addf %132, %131 : vector<8x128xf32>
    %134 = arith.divf %132, %133 : vector<8x128xf32>
    %135 = vector.extract_strided_slice %122 {offsets = [0, 128], sizes = [8, 128], strides = [1, 1]} : vector<8x384xf32> to vector<8x128xf32>
    %136 = vector.extract_strided_slice %126 {offsets = [0, 128], sizes = [8, 128], strides = [1, 1]} : vector<8x384xf32> to vector<8x128xf32>
    %137 = arith.addf %135, %136 : vector<8x128xf32>
    %138 = arith.negf %137 : vector<8x128xf32>
    %139 = math.exp %138 : vector<8x128xf32>
    %cst_29 = arith.constant 1.000000e+00 : f32
    %140 = vector.broadcast %cst_29 : f32 to vector<8x128xf32>
    %141 = arith.addf %140, %139 : vector<8x128xf32>
    %142 = arith.divf %140, %141 : vector<8x128xf32>
    %143 = vector.extract_strided_slice %122 {offsets = [0, 256], sizes = [8, 128], strides = [1, 1]} : vector<8x384xf32> to vector<8x128xf32>
    %144 = vector.extract_strided_slice %126 {offsets = [0, 256], sizes = [8, 128], strides = [1, 1]} : vector<8x384xf32> to vector<8x128xf32>
    %145 = arith.mulf %134, %144 : vector<8x128xf32>
    %146 = arith.addf %143, %145 : vector<8x128xf32>
    %147 = math.tanh %146 : vector<8x128xf32>
    %cst_30 = arith.constant 1.000000e+00 : f32
    %148 = vector.broadcast %cst_30 : f32 to vector<8x128xf32>
    %149 = arith.subf %148, %142 : vector<8x128xf32>
    %150 = arith.mulf %149, %147 : vector<8x128xf32>
    %151 = arith.mulf %142, %121 : vector<8x128xf32>
    %152 = arith.addf %150, %151 : vector<8x128xf32>
    %153 = arith.subf %152, %121 : vector<8x128xf32>
    %154 = vector.broadcast %123 : vector<8x1xf32> to vector<8x128xf32>
    %155 = arith.mulf %154, %153 : vector<8x128xf32>
    %156 = arith.addf %121, %155 : vector<8x128xf32>
    %157 = vector.extract_strided_slice %14 {offsets = [32, 0], sizes = [8, 384], strides = [1, 1]} : vector<48x384xf32> to vector<8x384xf32>
    %158 = vector.extract_strided_slice %15 {offsets = [32, 0], sizes = [8, 1], strides = [1, 1]} : vector<48x1xf32> to vector<8x1xf32>
    %cst_31 = arith.constant dense<0.000000e+00> : vector<8x384xf32>
    %159 = tpu.matmul %156, %2, %cst_31 {dimension_numbers = #tpu.dot_dimension_numbers<[1], [0], [0], [1], [0, 0, 1, 1], [], []>} : vector<8x128xf32>, vector<128x384xf32>, vector<8x384xf32> -> vector<8x384xf32>
    %160 = vector.broadcast %4 : vector<1x384xf32> to vector<8x384xf32>
    %161 = arith.addf %159, %160 : vector<8x384xf32>
    %162 = vector.extract_strided_slice %157 {offsets = [0, 0], sizes = [8, 128], strides = [1, 1]} : vector<8x384xf32> to vector<8x128xf32>
    %163 = vector.extract_strided_slice %161 {offsets = [0, 0], sizes = [8, 128], strides = [1, 1]} : vector<8x384xf32> to vector<8x128xf32>
    %164 = arith.addf %162, %163 : vector<8x128xf32>
    %165 = arith.negf %164 : vector<8x128xf32>
    %166 = math.exp %165 : vector<8x128xf32>
    %cst_32 = arith.constant 1.000000e+00 : f32
    %167 = vector.broadcast %cst_32 : f32 to vector<8x128xf32>
    %168 = arith.addf %167, %166 : vector<8x128xf32>
    %169 = arith.divf %167, %168 : vector<8x128xf32>
    %170 = vector.extract_strided_slice %157 {offsets = [0, 128], sizes = [8, 128], strides = [1, 1]} : vector<8x384xf32> to vector<8x128xf32>
    %171 = vector.extract_strided_slice %161 {offsets = [0, 128], sizes = [8, 128], strides = [1, 1]} : vector<8x384xf32> to vector<8x128xf32>
    %172 = arith.addf %170, %171 : vector<8x128xf32>
    %173 = arith.negf %172 : vector<8x128xf32>
    %174 = math.exp %173 : vector<8x128xf32>
    %cst_33 = arith.constant 1.000000e+00 : f32
    %175 = vector.broadcast %cst_33 : f32 to vector<8x128xf32>
    %176 = arith.addf %175, %174 : vector<8x128xf32>
    %177 = arith.divf %175, %176 : vector<8x128xf32>
    %178 = vector.extract_strided_slice %157 {offsets = [0, 256], sizes = [8, 128], strides = [1, 1]} : vector<8x384xf32> to vector<8x128xf32>
    %179 = vector.extract_strided_slice %161 {offsets = [0, 256], sizes = [8, 128], strides = [1, 1]} : vector<8x384xf32> to vector<8x128xf32>
    %180 = arith.mulf %169, %179 : vector<8x128xf32>
    %181 = arith.addf %178, %180 : vector<8x128xf32>
    %182 = math.tanh %181 : vector<8x128xf32>
    %cst_34 = arith.constant 1.000000e+00 : f32
    %183 = vector.broadcast %cst_34 : f32 to vector<8x128xf32>
    %184 = arith.subf %183, %177 : vector<8x128xf32>
    %185 = arith.mulf %184, %182 : vector<8x128xf32>
    %186 = arith.mulf %177, %156 : vector<8x128xf32>
    %187 = arith.addf %185, %186 : vector<8x128xf32>
    %188 = arith.subf %187, %156 : vector<8x128xf32>
    %189 = vector.broadcast %158 : vector<8x1xf32> to vector<8x128xf32>
    %190 = arith.mulf %189, %188 : vector<8x128xf32>
    %191 = arith.addf %156, %190 : vector<8x128xf32>
    %192 = vector.extract_strided_slice %14 {offsets = [40, 0], sizes = [8, 384], strides = [1, 1]} : vector<48x384xf32> to vector<8x384xf32>
    %193 = vector.extract_strided_slice %15 {offsets = [40, 0], sizes = [8, 1], strides = [1, 1]} : vector<48x1xf32> to vector<8x1xf32>
    %cst_35 = arith.constant dense<0.000000e+00> : vector<8x384xf32>
    %194 = tpu.matmul %191, %2, %cst_35 {dimension_numbers = #tpu.dot_dimension_numbers<[1], [0], [0], [1], [0, 0, 1, 1], [], []>} : vector<8x128xf32>, vector<128x384xf32>, vector<8x384xf32> -> vector<8x384xf32>
    %195 = vector.broadcast %4 : vector<1x384xf32> to vector<8x384xf32>
    %196 = arith.addf %194, %195 : vector<8x384xf32>
    %197 = vector.extract_strided_slice %192 {offsets = [0, 0], sizes = [8, 128], strides = [1, 1]} : vector<8x384xf32> to vector<8x128xf32>
    %198 = vector.extract_strided_slice %196 {offsets = [0, 0], sizes = [8, 128], strides = [1, 1]} : vector<8x384xf32> to vector<8x128xf32>
    %199 = arith.addf %197, %198 : vector<8x128xf32>
    %200 = arith.negf %199 : vector<8x128xf32>
    %201 = math.exp %200 : vector<8x128xf32>
    %cst_36 = arith.constant 1.000000e+00 : f32
    %202 = vector.broadcast %cst_36 : f32 to vector<8x128xf32>
    %203 = arith.addf %202, %201 : vector<8x128xf32>
    %204 = arith.divf %202, %203 : vector<8x128xf32>
    %205 = vector.extract_strided_slice %192 {offsets = [0, 128], sizes = [8, 128], strides = [1, 1]} : vector<8x384xf32> to vector<8x128xf32>
    %206 = vector.extract_strided_slice %196 {offsets = [0, 128], sizes = [8, 128], strides = [1, 1]} : vector<8x384xf32> to vector<8x128xf32>
    %207 = arith.addf %205, %206 : vector<8x128xf32>
    %208 = arith.negf %207 : vector<8x128xf32>
    %209 = math.exp %208 : vector<8x128xf32>
    %cst_37 = arith.constant 1.000000e+00 : f32
    %210 = vector.broadcast %cst_37 : f32 to vector<8x128xf32>
    %211 = arith.addf %210, %209 : vector<8x128xf32>
    %212 = arith.divf %210, %211 : vector<8x128xf32>
    %213 = vector.extract_strided_slice %192 {offsets = [0, 256], sizes = [8, 128], strides = [1, 1]} : vector<8x384xf32> to vector<8x128xf32>
    %214 = vector.extract_strided_slice %196 {offsets = [0, 256], sizes = [8, 128], strides = [1, 1]} : vector<8x384xf32> to vector<8x128xf32>
    %215 = arith.mulf %204, %214 : vector<8x128xf32>
    %216 = arith.addf %213, %215 : vector<8x128xf32>
    %217 = math.tanh %216 : vector<8x128xf32>
    %cst_38 = arith.constant 1.000000e+00 : f32
    %218 = vector.broadcast %cst_38 : f32 to vector<8x128xf32>
    %219 = arith.subf %218, %212 : vector<8x128xf32>
    %220 = arith.mulf %219, %217 : vector<8x128xf32>
    %221 = arith.mulf %212, %191 : vector<8x128xf32>
    %222 = arith.addf %220, %221 : vector<8x128xf32>
    %223 = arith.subf %222, %191 : vector<8x128xf32>
    %224 = vector.broadcast %193 : vector<8x1xf32> to vector<8x128xf32>
    %225 = arith.mulf %224, %223 : vector<8x128xf32>
    %226 = arith.addf %191, %225 : vector<8x128xf32>
    %c0_39 = arith.constant 0 : index
    %c0_40 = arith.constant 0 : index
    %227 = vector.load %arg10[%c0_39, %c0_40] : memref<16x384xf32, #tpu.memory_space<vmem>>, vector<16x384xf32>
    %c0_41 = arith.constant 0 : index
    %c0_42 = arith.constant 0 : index
    %228 = vector.load %arg11[%c0_41, %c0_42] : memref<128x384xf32, #tpu.memory_space<vmem>>, vector<128x384xf32>
    %c0_43 = arith.constant 0 : index
    %c0_44 = arith.constant 0 : index
    %229 = vector.load %arg12[%c0_43, %c0_44] : memref<1x384xf32, #tpu.memory_space<vmem>>, vector<1x384xf32>
    %c0_45 = arith.constant 0 : index
    %c0_46 = arith.constant 0 : index
    %230 = vector.load %arg13[%c0_45, %c0_46] : memref<1x384xf32, #tpu.memory_space<vmem>>, vector<1x384xf32>
    %cst_47 = arith.constant dense<0.000000e+00> : vector<32x384xf32>
    %231 = tpu.matmul %0, %227, %cst_47 {dimension_numbers = #tpu.dot_dimension_numbers<[1], [0], [0], [1], [0, 0, 1, 1], [], []>} : vector<32x16xf32>, vector<16x384xf32>, vector<32x384xf32> -> vector<32x384xf32>
    %c0_48 = arith.constant 0 : index
    %c0_49 = arith.constant 0 : index
    %232 = vector.load %arg2[%c0_48, %c0_49] : memref<40x1xi32, #tpu.memory_space<vmem>>, vector<40x1xi32>
    %233 = tpu.iota {dimensions = array<i32: 1>} : vector<40x32xi32>
    %234 = vector.broadcast %232 : vector<40x1xi32> to vector<40x32xi32>
    %235 = arith.cmpi eq, %233, %234 : vector<40x32xi32>
    %236 = arith.extui %235 : vector<40x32xi1> to vector<40x32xi32>
    %237 = arith.sitofp %236 : vector<40x32xi32> to vector<40x32xf32>
    %cst_50 = arith.constant dense<0.000000e+00> : vector<40x384xf32>
    %238 = tpu.matmul %237, %231, %cst_50 {dimension_numbers = #tpu.dot_dimension_numbers<[1], [0], [0], [1], [0, 0, 1, 1], [], []>} : vector<40x32xf32>, vector<32x384xf32>, vector<40x384xf32> -> vector<40x384xf32>
    %239 = vector.broadcast %229 : vector<1x384xf32> to vector<40x384xf32>
    %240 = arith.addf %238, %239 : vector<40x384xf32>
    %c0_51 = arith.constant 0 : index
    %c0_52 = arith.constant 0 : index
    %241 = vector.load %arg3[%c0_51, %c0_52] : memref<40x1xf32, #tpu.memory_space<vmem>>, vector<40x1xf32>
    %cst_53 = arith.constant 0.000000e+00 : f32
    %242 = vector.broadcast %cst_53 : f32 to vector<8x128xf32>
    %243 = vector.extract_strided_slice %240 {offsets = [0, 0], sizes = [8, 384], strides = [1, 1]} : vector<40x384xf32> to vector<8x384xf32>
    %244 = vector.extract_strided_slice %241 {offsets = [0, 0], sizes = [8, 1], strides = [1, 1]} : vector<40x1xf32> to vector<8x1xf32>
    %cst_54 = arith.constant dense<0.000000e+00> : vector<8x384xf32>
    %245 = tpu.matmul %242, %228, %cst_54 {dimension_numbers = #tpu.dot_dimension_numbers<[1], [0], [0], [1], [0, 0, 1, 1], [], []>} : vector<8x128xf32>, vector<128x384xf32>, vector<8x384xf32> -> vector<8x384xf32>
    %246 = vector.broadcast %230 : vector<1x384xf32> to vector<8x384xf32>
    %247 = arith.addf %245, %246 : vector<8x384xf32>
    %248 = vector.extract_strided_slice %243 {offsets = [0, 0], sizes = [8, 128], strides = [1, 1]} : vector<8x384xf32> to vector<8x128xf32>
    %249 = vector.extract_strided_slice %247 {offsets = [0, 0], sizes = [8, 128], strides = [1, 1]} : vector<8x384xf32> to vector<8x128xf32>
    %250 = arith.addf %248, %249 : vector<8x128xf32>
    %251 = arith.negf %250 : vector<8x128xf32>
    %252 = math.exp %251 : vector<8x128xf32>
    %cst_55 = arith.constant 1.000000e+00 : f32
    %253 = vector.broadcast %cst_55 : f32 to vector<8x128xf32>
    %254 = arith.addf %253, %252 : vector<8x128xf32>
    %255 = arith.divf %253, %254 : vector<8x128xf32>
    %256 = vector.extract_strided_slice %243 {offsets = [0, 128], sizes = [8, 128], strides = [1, 1]} : vector<8x384xf32> to vector<8x128xf32>
    %257 = vector.extract_strided_slice %247 {offsets = [0, 128], sizes = [8, 128], strides = [1, 1]} : vector<8x384xf32> to vector<8x128xf32>
    %258 = arith.addf %256, %257 : vector<8x128xf32>
    %259 = arith.negf %258 : vector<8x128xf32>
    %260 = math.exp %259 : vector<8x128xf32>
    %cst_56 = arith.constant 1.000000e+00 : f32
    %261 = vector.broadcast %cst_56 : f32 to vector<8x128xf32>
    %262 = arith.addf %261, %260 : vector<8x128xf32>
    %263 = arith.divf %261, %262 : vector<8x128xf32>
    %264 = vector.extract_strided_slice %243 {offsets = [0, 256], sizes = [8, 128], strides = [1, 1]} : vector<8x384xf32> to vector<8x128xf32>
    %265 = vector.extract_strided_slice %247 {offsets = [0, 256], sizes = [8, 128], strides = [1, 1]} : vector<8x384xf32> to vector<8x128xf32>
    %266 = arith.mulf %255, %265 : vector<8x128xf32>
    %267 = arith.addf %264, %266 : vector<8x128xf32>
    %268 = math.tanh %267 : vector<8x128xf32>
    %cst_57 = arith.constant 1.000000e+00 : f32
    %269 = vector.broadcast %cst_57 : f32 to vector<8x128xf32>
    %270 = arith.subf %269, %263 : vector<8x128xf32>
    %271 = arith.mulf %270, %268 : vector<8x128xf32>
    %272 = arith.mulf %263, %242 : vector<8x128xf32>
    %273 = arith.addf %271, %272 : vector<8x128xf32>
    %274 = arith.subf %273, %242 : vector<8x128xf32>
    %275 = vector.broadcast %244 : vector<8x1xf32> to vector<8x128xf32>
    %276 = arith.mulf %275, %274 : vector<8x128xf32>
    %277 = arith.addf %242, %276 : vector<8x128xf32>
    %278 = vector.extract_strided_slice %240 {offsets = [8, 0], sizes = [8, 384], strides = [1, 1]} : vector<40x384xf32> to vector<8x384xf32>
    %279 = vector.extract_strided_slice %241 {offsets = [8, 0], sizes = [8, 1], strides = [1, 1]} : vector<40x1xf32> to vector<8x1xf32>
    %cst_58 = arith.constant dense<0.000000e+00> : vector<8x384xf32>
    %280 = tpu.matmul %277, %228, %cst_58 {dimension_numbers = #tpu.dot_dimension_numbers<[1], [0], [0], [1], [0, 0, 1, 1], [], []>} : vector<8x128xf32>, vector<128x384xf32>, vector<8x384xf32> -> vector<8x384xf32>
    %281 = vector.broadcast %230 : vector<1x384xf32> to vector<8x384xf32>
    %282 = arith.addf %280, %281 : vector<8x384xf32>
    %283 = vector.extract_strided_slice %278 {offsets = [0, 0], sizes = [8, 128], strides = [1, 1]} : vector<8x384xf32> to vector<8x128xf32>
    %284 = vector.extract_strided_slice %282 {offsets = [0, 0], sizes = [8, 128], strides = [1, 1]} : vector<8x384xf32> to vector<8x128xf32>
    %285 = arith.addf %283, %284 : vector<8x128xf32>
    %286 = arith.negf %285 : vector<8x128xf32>
    %287 = math.exp %286 : vector<8x128xf32>
    %cst_59 = arith.constant 1.000000e+00 : f32
    %288 = vector.broadcast %cst_59 : f32 to vector<8x128xf32>
    %289 = arith.addf %288, %287 : vector<8x128xf32>
    %290 = arith.divf %288, %289 : vector<8x128xf32>
    %291 = vector.extract_strided_slice %278 {offsets = [0, 128], sizes = [8, 128], strides = [1, 1]} : vector<8x384xf32> to vector<8x128xf32>
    %292 = vector.extract_strided_slice %282 {offsets = [0, 128], sizes = [8, 128], strides = [1, 1]} : vector<8x384xf32> to vector<8x128xf32>
    %293 = arith.addf %291, %292 : vector<8x128xf32>
    %294 = arith.negf %293 : vector<8x128xf32>
    %295 = math.exp %294 : vector<8x128xf32>
    %cst_60 = arith.constant 1.000000e+00 : f32
    %296 = vector.broadcast %cst_60 : f32 to vector<8x128xf32>
    %297 = arith.addf %296, %295 : vector<8x128xf32>
    %298 = arith.divf %296, %297 : vector<8x128xf32>
    %299 = vector.extract_strided_slice %278 {offsets = [0, 256], sizes = [8, 128], strides = [1, 1]} : vector<8x384xf32> to vector<8x128xf32>
    %300 = vector.extract_strided_slice %282 {offsets = [0, 256], sizes = [8, 128], strides = [1, 1]} : vector<8x384xf32> to vector<8x128xf32>
    %301 = arith.mulf %290, %300 : vector<8x128xf32>
    %302 = arith.addf %299, %301 : vector<8x128xf32>
    %303 = math.tanh %302 : vector<8x128xf32>
    %cst_61 = arith.constant 1.000000e+00 : f32
    %304 = vector.broadcast %cst_61 : f32 to vector<8x128xf32>
    %305 = arith.subf %304, %298 : vector<8x128xf32>
    %306 = arith.mulf %305, %303 : vector<8x128xf32>
    %307 = arith.mulf %298, %277 : vector<8x128xf32>
    %308 = arith.addf %306, %307 : vector<8x128xf32>
    %309 = arith.subf %308, %277 : vector<8x128xf32>
    %310 = vector.broadcast %279 : vector<8x1xf32> to vector<8x128xf32>
    %311 = arith.mulf %310, %309 : vector<8x128xf32>
    %312 = arith.addf %277, %311 : vector<8x128xf32>
    %313 = vector.extract_strided_slice %240 {offsets = [16, 0], sizes = [8, 384], strides = [1, 1]} : vector<40x384xf32> to vector<8x384xf32>
    %314 = vector.extract_strided_slice %241 {offsets = [16, 0], sizes = [8, 1], strides = [1, 1]} : vector<40x1xf32> to vector<8x1xf32>
    %cst_62 = arith.constant dense<0.000000e+00> : vector<8x384xf32>
    %315 = tpu.matmul %312, %228, %cst_62 {dimension_numbers = #tpu.dot_dimension_numbers<[1], [0], [0], [1], [0, 0, 1, 1], [], []>} : vector<8x128xf32>, vector<128x384xf32>, vector<8x384xf32> -> vector<8x384xf32>
    %316 = vector.broadcast %230 : vector<1x384xf32> to vector<8x384xf32>
    %317 = arith.addf %315, %316 : vector<8x384xf32>
    %318 = vector.extract_strided_slice %313 {offsets = [0, 0], sizes = [8, 128], strides = [1, 1]} : vector<8x384xf32> to vector<8x128xf32>
    %319 = vector.extract_strided_slice %317 {offsets = [0, 0], sizes = [8, 128], strides = [1, 1]} : vector<8x384xf32> to vector<8x128xf32>
    %320 = arith.addf %318, %319 : vector<8x128xf32>
    %321 = arith.negf %320 : vector<8x128xf32>
    %322 = math.exp %321 : vector<8x128xf32>
    %cst_63 = arith.constant 1.000000e+00 : f32
    %323 = vector.broadcast %cst_63 : f32 to vector<8x128xf32>
    %324 = arith.addf %323, %322 : vector<8x128xf32>
    %325 = arith.divf %323, %324 : vector<8x128xf32>
    %326 = vector.extract_strided_slice %313 {offsets = [0, 128], sizes = [8, 128], strides = [1, 1]} : vector<8x384xf32> to vector<8x128xf32>
    %327 = vector.extract_strided_slice %317 {offsets = [0, 128], sizes = [8, 128], strides = [1, 1]} : vector<8x384xf32> to vector<8x128xf32>
    %328 = arith.addf %326, %327 : vector<8x128xf32>
    %329 = arith.negf %328 : vector<8x128xf32>
    %330 = math.exp %329 : vector<8x128xf32>
    %cst_64 = arith.constant 1.000000e+00 : f32
    %331 = vector.broadcast %cst_64 : f32 to vector<8x128xf32>
    %332 = arith.addf %331, %330 : vector<8x128xf32>
    %333 = arith.divf %331, %332 : vector<8x128xf32>
    %334 = vector.extract_strided_slice %313 {offsets = [0, 256], sizes = [8, 128], strides = [1, 1]} : vector<8x384xf32> to vector<8x128xf32>
    %335 = vector.extract_strided_slice %317 {offsets = [0, 256], sizes = [8, 128], strides = [1, 1]} : vector<8x384xf32> to vector<8x128xf32>
    %336 = arith.mulf %325, %335 : vector<8x128xf32>
    %337 = arith.addf %334, %336 : vector<8x128xf32>
    %338 = math.tanh %337 : vector<8x128xf32>
    %cst_65 = arith.constant 1.000000e+00 : f32
    %339 = vector.broadcast %cst_65 : f32 to vector<8x128xf32>
    %340 = arith.subf %339, %333 : vector<8x128xf32>
    %341 = arith.mulf %340, %338 : vector<8x128xf32>
    %342 = arith.mulf %333, %312 : vector<8x128xf32>
    %343 = arith.addf %341, %342 : vector<8x128xf32>
    %344 = arith.subf %343, %312 : vector<8x128xf32>
    %345 = vector.broadcast %314 : vector<8x1xf32> to vector<8x128xf32>
    %346 = arith.mulf %345, %344 : vector<8x128xf32>
    %347 = arith.addf %312, %346 : vector<8x128xf32>
    %348 = vector.extract_strided_slice %240 {offsets = [24, 0], sizes = [8, 384], strides = [1, 1]} : vector<40x384xf32> to vector<8x384xf32>
    %349 = vector.extract_strided_slice %241 {offsets = [24, 0], sizes = [8, 1], strides = [1, 1]} : vector<40x1xf32> to vector<8x1xf32>
    %cst_66 = arith.constant dense<0.000000e+00> : vector<8x384xf32>
    %350 = tpu.matmul %347, %228, %cst_66 {dimension_numbers = #tpu.dot_dimension_numbers<[1], [0], [0], [1], [0, 0, 1, 1], [], []>} : vector<8x128xf32>, vector<128x384xf32>, vector<8x384xf32> -> vector<8x384xf32>
    %351 = vector.broadcast %230 : vector<1x384xf32> to vector<8x384xf32>
    %352 = arith.addf %350, %351 : vector<8x384xf32>
    %353 = vector.extract_strided_slice %348 {offsets = [0, 0], sizes = [8, 128], strides = [1, 1]} : vector<8x384xf32> to vector<8x128xf32>
    %354 = vector.extract_strided_slice %352 {offsets = [0, 0], sizes = [8, 128], strides = [1, 1]} : vector<8x384xf32> to vector<8x128xf32>
    %355 = arith.addf %353, %354 : vector<8x128xf32>
    %356 = arith.negf %355 : vector<8x128xf32>
    %357 = math.exp %356 : vector<8x128xf32>
    %cst_67 = arith.constant 1.000000e+00 : f32
    %358 = vector.broadcast %cst_67 : f32 to vector<8x128xf32>
    %359 = arith.addf %358, %357 : vector<8x128xf32>
    %360 = arith.divf %358, %359 : vector<8x128xf32>
    %361 = vector.extract_strided_slice %348 {offsets = [0, 128], sizes = [8, 128], strides = [1, 1]} : vector<8x384xf32> to vector<8x128xf32>
    %362 = vector.extract_strided_slice %352 {offsets = [0, 128], sizes = [8, 128], strides = [1, 1]} : vector<8x384xf32> to vector<8x128xf32>
    %363 = arith.addf %361, %362 : vector<8x128xf32>
    %364 = arith.negf %363 : vector<8x128xf32>
    %365 = math.exp %364 : vector<8x128xf32>
    %cst_68 = arith.constant 1.000000e+00 : f32
    %366 = vector.broadcast %cst_68 : f32 to vector<8x128xf32>
    %367 = arith.addf %366, %365 : vector<8x128xf32>
    %368 = arith.divf %366, %367 : vector<8x128xf32>
    %369 = vector.extract_strided_slice %348 {offsets = [0, 256], sizes = [8, 128], strides = [1, 1]} : vector<8x384xf32> to vector<8x128xf32>
    %370 = vector.extract_strided_slice %352 {offsets = [0, 256], sizes = [8, 128], strides = [1, 1]} : vector<8x384xf32> to vector<8x128xf32>
    %371 = arith.mulf %360, %370 : vector<8x128xf32>
    %372 = arith.addf %369, %371 : vector<8x128xf32>
    %373 = math.tanh %372 : vector<8x128xf32>
    %cst_69 = arith.constant 1.000000e+00 : f32
    %374 = vector.broadcast %cst_69 : f32 to vector<8x128xf32>
    %375 = arith.subf %374, %368 : vector<8x128xf32>
    %376 = arith.mulf %375, %373 : vector<8x128xf32>
    %377 = arith.mulf %368, %347 : vector<8x128xf32>
    %378 = arith.addf %376, %377 : vector<8x128xf32>
    %379 = arith.subf %378, %347 : vector<8x128xf32>
    %380 = vector.broadcast %349 : vector<8x1xf32> to vector<8x128xf32>
    %381 = arith.mulf %380, %379 : vector<8x128xf32>
    %382 = arith.addf %347, %381 : vector<8x128xf32>
    %383 = vector.extract_strided_slice %240 {offsets = [32, 0], sizes = [8, 384], strides = [1, 1]} : vector<40x384xf32> to vector<8x384xf32>
    %384 = vector.extract_strided_slice %241 {offsets = [32, 0], sizes = [8, 1], strides = [1, 1]} : vector<40x1xf32> to vector<8x1xf32>
    %cst_70 = arith.constant dense<0.000000e+00> : vector<8x384xf32>
    %385 = tpu.matmul %382, %228, %cst_70 {dimension_numbers = #tpu.dot_dimension_numbers<[1], [0], [0], [1], [0, 0, 1, 1], [], []>} : vector<8x128xf32>, vector<128x384xf32>, vector<8x384xf32> -> vector<8x384xf32>
    %386 = vector.broadcast %230 : vector<1x384xf32> to vector<8x384xf32>
    %387 = arith.addf %385, %386 : vector<8x384xf32>
    %388 = vector.extract_strided_slice %383 {offsets = [0, 0], sizes = [8, 128], strides = [1, 1]} : vector<8x384xf32> to vector<8x128xf32>
    %389 = vector.extract_strided_slice %387 {offsets = [0, 0], sizes = [8, 128], strides = [1, 1]} : vector<8x384xf32> to vector<8x128xf32>
    %390 = arith.addf %388, %389 : vector<8x128xf32>
    %391 = arith.negf %390 : vector<8x128xf32>
    %392 = math.exp %391 : vector<8x128xf32>
    %cst_71 = arith.constant 1.000000e+00 : f32
    %393 = vector.broadcast %cst_71 : f32 to vector<8x128xf32>
    %394 = arith.addf %393, %392 : vector<8x128xf32>
    %395 = arith.divf %393, %394 : vector<8x128xf32>
    %396 = vector.extract_strided_slice %383 {offsets = [0, 128], sizes = [8, 128], strides = [1, 1]} : vector<8x384xf32> to vector<8x128xf32>
    %397 = vector.extract_strided_slice %387 {offsets = [0, 128], sizes = [8, 128], strides = [1, 1]} : vector<8x384xf32> to vector<8x128xf32>
    %398 = arith.addf %396, %397 : vector<8x128xf32>
    %399 = arith.negf %398 : vector<8x128xf32>
    %400 = math.exp %399 : vector<8x128xf32>
    %cst_72 = arith.constant 1.000000e+00 : f32
    %401 = vector.broadcast %cst_72 : f32 to vector<8x128xf32>
    %402 = arith.addf %401, %400 : vector<8x128xf32>
    %403 = arith.divf %401, %402 : vector<8x128xf32>
    %404 = vector.extract_strided_slice %383 {offsets = [0, 256], sizes = [8, 128], strides = [1, 1]} : vector<8x384xf32> to vector<8x128xf32>
    %405 = vector.extract_strided_slice %387 {offsets = [0, 256], sizes = [8, 128], strides = [1, 1]} : vector<8x384xf32> to vector<8x128xf32>
    %406 = arith.mulf %395, %405 : vector<8x128xf32>
    %407 = arith.addf %404, %406 : vector<8x128xf32>
    %408 = math.tanh %407 : vector<8x128xf32>
    %cst_73 = arith.constant 1.000000e+00 : f32
    %409 = vector.broadcast %cst_73 : f32 to vector<8x128xf32>
    %410 = arith.subf %409, %403 : vector<8x128xf32>
    %411 = arith.mulf %410, %408 : vector<8x128xf32>
    %412 = arith.mulf %403, %382 : vector<8x128xf32>
    %413 = arith.addf %411, %412 : vector<8x128xf32>
    %414 = arith.subf %413, %382 : vector<8x128xf32>
    %415 = vector.broadcast %384 : vector<8x1xf32> to vector<8x128xf32>
    %416 = arith.mulf %415, %414 : vector<8x128xf32>
    %417 = arith.addf %382, %416 : vector<8x128xf32>
    %418 = vector.shape_cast %226 : vector<8x128xf32> to vector<2x4x128xf32>
    %419 = vector.extract_strided_slice %417 {offsets = [0, 0], sizes = [2, 128], strides = [1, 1]} : vector<8x128xf32> to vector<2x128xf32>
    %c0_74 = arith.constant 0 : index
    %c0_75 = arith.constant 0 : index
    %420 = vector.load %arg4[%c0_74, %c0_75] : memref<2x4xf32, #tpu.memory_space<vmem>>, vector<2x4xf32>
    %421 = vector.shape_cast %419 : vector<2x128xf32> to vector<2x1x128xf32>
    %422 = vector.broadcast %421 : vector<2x1x128xf32> to vector<2x4x128xf32>
    %423 = arith.mulf %418, %422 : vector<2x4x128xf32>
    %424 = vector.shape_cast %423 : vector<2x4x128xf32> to vector<8x128xf32>
    %425 = vector.broadcast %421 : vector<2x1x128xf32> to vector<2x4x128xf32>
    %426 = arith.subf %418, %425 : vector<2x4x128xf32>
    %427 = math.absf %426 : vector<2x4x128xf32>
    %428 = vector.shape_cast %427 : vector<2x4x128xf32> to vector<8x128xf32>
    %429 = tpu.concatenate %424, %428 in 1 : vector<8x128xf32>, vector<8x128xf32> -> vector<8x256xf32>
    %c0_76 = arith.constant 0 : index
    %c0_77 = arith.constant 0 : index
    %430 = vector.load %arg14[%c0_76, %c0_77] : memref<256x32xf32, #tpu.memory_space<vmem>>, vector<256x32xf32>
    %cst_78 = arith.constant dense<0.000000e+00> : vector<8x32xf32>
    %431 = tpu.matmul %429, %430, %cst_78 {dimension_numbers = #tpu.dot_dimension_numbers<[1], [0], [0], [1], [0, 0, 1, 1], [], []>} : vector<8x256xf32>, vector<256x32xf32>, vector<8x32xf32> -> vector<8x32xf32>
    %c0_79 = arith.constant 0 : index
    %c0_80 = arith.constant 0 : index
    %432 = vector.load %arg16[%c0_79, %c0_80] : memref<1x32xf32, #tpu.memory_space<vmem>>, vector<1x32xf32>
    %433 = vector.broadcast %432 : vector<1x32xf32> to vector<8x32xf32>
    %434 = arith.addf %431, %433 : vector<8x32xf32>
    %c0_81 = arith.constant 0 : index
    %c0_82 = arith.constant 0 : index
    %435 = vector.load %arg15[%c0_81, %c0_82] : memref<256x32xf32, #tpu.memory_space<vmem>>, vector<256x32xf32>
    %c0_83 = arith.constant 0 : index
    %c0_84 = arith.constant 0 : index
    %436 = vector.load %arg17[%c0_83, %c0_84] : memref<1x32xf32, #tpu.memory_space<vmem>>, vector<1x32xf32>
    %c0_85 = arith.constant 0 : index
    %c0_86 = arith.constant 0 : index
    %437 = vector.load %arg18[%c0_85, %c0_86] : memref<1x1xf32, #tpu.memory_space<vmem>>, vector<1x1xf32>
    %c0_87 = arith.constant 0 : index
    %c0_88 = arith.constant 0 : index
    %438 = vector.load %arg19[%c0_87, %c0_88] : memref<128x384xf32, #tpu.memory_space<vmem>>, vector<128x384xf32>
    %c0_89 = arith.constant 0 : index
    %c0_90 = arith.constant 0 : index
    %439 = vector.load %arg20[%c0_89, %c0_90] : memref<128x384xf32, #tpu.memory_space<vmem>>, vector<128x384xf32>
    %c0_91 = arith.constant 0 : index
    %c0_92 = arith.constant 0 : index
    %440 = vector.load %arg21[%c0_91, %c0_92] : memref<1x384xf32, #tpu.memory_space<vmem>>, vector<1x384xf32>
    %c0_93 = arith.constant 0 : index
    %c0_94 = arith.constant 0 : index
    %441 = vector.load %arg22[%c0_93, %c0_94] : memref<1x384xf32, #tpu.memory_space<vmem>>, vector<1x384xf32>
    %442 = vector.shape_cast %419 : vector<2x128xf32> to vector<2x1x128xf32>
    %443 = vector.broadcast %442 : vector<2x1x128xf32> to vector<2x4x128xf32>
    %444 = arith.mulf %418, %443 : vector<2x4x128xf32>
    %445 = vector.shape_cast %444 : vector<2x4x128xf32> to vector<8x128xf32>
    %446 = vector.broadcast %442 : vector<2x1x128xf32> to vector<2x4x128xf32>
    %447 = arith.subf %418, %446 : vector<2x4x128xf32>
    %448 = math.absf %447 : vector<2x4x128xf32>
    %449 = vector.shape_cast %448 : vector<2x4x128xf32> to vector<8x128xf32>
    %450 = tpu.concatenate %445, %449 in 1 : vector<8x128xf32>, vector<8x128xf32> -> vector<8x256xf32>
    %cst_95 = arith.constant dense<0.000000e+00> : vector<8x32xf32>
    %451 = tpu.matmul %450, %435, %cst_95 {dimension_numbers = #tpu.dot_dimension_numbers<[1], [0], [0], [1], [0, 0, 1, 1], [], []>} : vector<8x256xf32>, vector<256x32xf32>, vector<8x32xf32> -> vector<8x32xf32>
    %452 = arith.addf %434, %451 : vector<8x32xf32>
    %453 = math.tanh %452 : vector<8x32xf32>
    %454 = vector.shape_cast %453 : vector<8x32xf32> to vector<2x4x32xf32>
    %455 = vector.shape_cast %436 : vector<1x32xf32> to vector<1x1x32xf32>
    %456 = vector.broadcast %455 : vector<1x1x32xf32> to vector<2x4x32xf32>
    %457 = arith.mulf %454, %456 : vector<2x4x32xf32>
    %cst_96 = arith.constant dense<0.000000e+00> : vector<2x4xf32>
    %458 = vector.multi_reduction <add>, %457, %cst_96 [2] : vector<2x4x32xf32> to vector<2x4xf32>
    %459 = vector.broadcast %437 : vector<1x1xf32> to vector<2x4xf32>
    %460 = arith.addf %458, %459 : vector<2x4xf32>
    %cst_97 = arith.constant 0.000000e+00 : f32
    %461 = vector.broadcast %cst_97 : f32 to vector<2x4xf32>
    %462 = arith.cmpf ogt, %420, %461 : vector<2x4xf32>
    %cst_98 = arith.constant -1.000000e+30 : f32
    %463 = vector.broadcast %cst_98 : f32 to vector<2x4xf32>
    %464 = arith.select %462, %460, %463 : vector<2x4xi1>, vector<2x4xf32>
    %cst_99 = arith.constant dense<0xFF800000> : vector<2xf32>
    %465 = vector.multi_reduction <maximumf>, %464, %cst_99 [1] : vector<2x4xf32> to vector<2xf32>
    %466 = vector.shape_cast %465 : vector<2xf32> to vector<2x1xf32>
    %467 = vector.broadcast %466 : vector<2x1xf32> to vector<2x4xf32>
    %468 = arith.subf %464, %467 : vector<2x4xf32>
    %469 = math.exp %468 : vector<2x4xf32>
    %cst_100 = arith.constant dense<0.000000e+00> : vector<2xf32>
    %470 = vector.multi_reduction <add>, %469, %cst_100 [1] : vector<2x4xf32> to vector<2xf32>
    %471 = vector.shape_cast %470 : vector<2xf32> to vector<2x1xf32>
    %472 = vector.broadcast %471 : vector<2x1xf32> to vector<2x4xf32>
    %473 = arith.divf %469, %472 : vector<2x4xf32>
    %cst_101 = arith.constant 0.000000e+00 : f32
    %474 = vector.broadcast %cst_101 : f32 to vector<2x124xf32>
    %475 = tpu.concatenate %473, %474 in 1 : vector<2x4xf32>, vector<2x124xf32> -> vector<2x128xf32>
    %c0_102 = arith.constant 0 : index
    %c0_103 = arith.constant 0 : index
    %c0_104 = arith.constant 0 : index
    %476 = vector.load %arg25[%c0_102, %c0_103, %c0_104] : memref<3x2x128xf32, #tpu.memory_space<vmem>>, vector<1x2x128xf32>
    %477 = vector.shape_cast %476 : vector<1x2x128xf32> to vector<2x128xf32>
    %478 = vector.shape_cast %475 : vector<2x128xf32> to vector<1x2x128xf32>
    tpu.vector_store %arg25[%c0_102, %c0_103, %c0_104], %478 {strides = array<i32>} : memref<3x2x128xf32, #tpu.memory_space<vmem>>, vector<1x2x128xf32>,
    %479 = vector.shape_cast %473 : vector<2x4xf32> to vector<2x4x1xf32>
    %480 = vector.broadcast %479 : vector<2x4x1xf32> to vector<2x4x128xf32>
    %481 = arith.mulf %480, %418 : vector<2x4x128xf32>
    %cst_105 = arith.constant dense<0.000000e+00> : vector<2x128xf32>
    %482 = vector.multi_reduction <add>, %481, %cst_105 [1] : vector<2x4x128xf32> to vector<2x128xf32>
    %cst_106 = arith.constant dense<0.000000e+00> : vector<2x384xf32>
    %483 = tpu.matmul %482, %438, %cst_106 {dimension_numbers = #tpu.dot_dimension_numbers<[1], [0], [0], [1], [0, 0, 1, 1], [], []>} : vector<2x128xf32>, vector<128x384xf32>, vector<2x384xf32> -> vector<2x384xf32>
    %484 = vector.broadcast %440 : vector<1x384xf32> to vector<2x384xf32>
    %485 = arith.addf %483, %484 : vector<2x384xf32>
    %cst_107 = arith.constant dense<0.000000e+00> : vector<2x384xf32>
    %486 = tpu.matmul %419, %439, %cst_107 {dimension_numbers = #tpu.dot_dimension_numbers<[1], [0], [0], [1], [0, 0, 1, 1], [], []>} : vector<2x128xf32>, vector<128x384xf32>, vector<2x384xf32> -> vector<2x384xf32>
    %487 = vector.broadcast %441 : vector<1x384xf32> to vector<2x384xf32>
    %488 = arith.addf %486, %487 : vector<2x384xf32>
    %489 = vector.extract_strided_slice %485 {offsets = [0, 0], sizes = [2, 128], strides = [1, 1]} : vector<2x384xf32> to vector<2x128xf32>
    %490 = vector.extract_strided_slice %488 {offsets = [0, 0], sizes = [2, 128], strides = [1, 1]} : vector<2x384xf32> to vector<2x128xf32>
    %491 = arith.addf %489, %490 : vector<2x128xf32>
    %492 = arith.negf %491 : vector<2x128xf32>
    %493 = math.exp %492 : vector<2x128xf32>
    %cst_108 = arith.constant 1.000000e+00 : f32
    %494 = vector.broadcast %cst_108 : f32 to vector<2x128xf32>
    %495 = arith.addf %494, %493 : vector<2x128xf32>
    %496 = arith.divf %494, %495 : vector<2x128xf32>
    %497 = vector.extract_strided_slice %485 {offsets = [0, 128], sizes = [2, 128], strides = [1, 1]} : vector<2x384xf32> to vector<2x128xf32>
    %498 = vector.extract_strided_slice %488 {offsets = [0, 128], sizes = [2, 128], strides = [1, 1]} : vector<2x384xf32> to vector<2x128xf32>
    %499 = arith.addf %497, %498 : vector<2x128xf32>
    %500 = arith.negf %499 : vector<2x128xf32>
    %501 = math.exp %500 : vector<2x128xf32>
    %cst_109 = arith.constant 1.000000e+00 : f32
    %502 = vector.broadcast %cst_109 : f32 to vector<2x128xf32>
    %503 = arith.addf %502, %501 : vector<2x128xf32>
    %504 = arith.divf %502, %503 : vector<2x128xf32>
    %505 = vector.extract_strided_slice %485 {offsets = [0, 256], sizes = [2, 128], strides = [1, 1]} : vector<2x384xf32> to vector<2x128xf32>
    %506 = vector.extract_strided_slice %488 {offsets = [0, 256], sizes = [2, 128], strides = [1, 1]} : vector<2x384xf32> to vector<2x128xf32>
    %507 = arith.mulf %496, %506 : vector<2x128xf32>
    %508 = arith.addf %505, %507 : vector<2x128xf32>
    %509 = math.tanh %508 : vector<2x128xf32>
    %cst_110 = arith.constant 1.000000e+00 : f32
    %510 = vector.broadcast %cst_110 : f32 to vector<2x128xf32>
    %511 = arith.subf %510, %504 : vector<2x128xf32>
    %512 = arith.mulf %511, %509 : vector<2x128xf32>
    %513 = arith.mulf %504, %419 : vector<2x128xf32>
    %514 = arith.addf %512, %513 : vector<2x128xf32>
    %515 = vector.shape_cast %514 : vector<2x128xf32> to vector<2x1x128xf32>
    %516 = vector.broadcast %515 : vector<2x1x128xf32> to vector<2x4x128xf32>
    %517 = arith.mulf %418, %516 : vector<2x4x128xf32>
    %518 = vector.shape_cast %517 : vector<2x4x128xf32> to vector<8x128xf32>
    %519 = vector.broadcast %515 : vector<2x1x128xf32> to vector<2x4x128xf32>
    %520 = arith.subf %418, %519 : vector<2x4x128xf32>
    %521 = math.absf %520 : vector<2x4x128xf32>
    %522 = vector.shape_cast %521 : vector<2x4x128xf32> to vector<8x128xf32>
    %523 = tpu.concatenate %518, %522 in 1 : vector<8x128xf32>, vector<8x128xf32> -> vector<8x256xf32>
    %cst_111 = arith.constant dense<0.000000e+00> : vector<8x32xf32>
    %524 = tpu.matmul %523, %435, %cst_111 {dimension_numbers = #tpu.dot_dimension_numbers<[1], [0], [0], [1], [0, 0, 1, 1], [], []>} : vector<8x256xf32>, vector<256x32xf32>, vector<8x32xf32> -> vector<8x32xf32>
    %525 = arith.addf %434, %524 : vector<8x32xf32>
    %526 = math.tanh %525 : vector<8x32xf32>
    %527 = vector.shape_cast %526 : vector<8x32xf32> to vector<2x4x32xf32>
    %528 = vector.shape_cast %436 : vector<1x32xf32> to vector<1x1x32xf32>
    %529 = vector.broadcast %528 : vector<1x1x32xf32> to vector<2x4x32xf32>
    %530 = arith.mulf %527, %529 : vector<2x4x32xf32>
    %cst_112 = arith.constant dense<0.000000e+00> : vector<2x4xf32>
    %531 = vector.multi_reduction <add>, %530, %cst_112 [2] : vector<2x4x32xf32> to vector<2x4xf32>
    %532 = vector.broadcast %437 : vector<1x1xf32> to vector<2x4xf32>
    %533 = arith.addf %531, %532 : vector<2x4xf32>
    %cst_113 = arith.constant 0.000000e+00 : f32
    %534 = vector.broadcast %cst_113 : f32 to vector<2x4xf32>
    %535 = arith.cmpf ogt, %420, %534 : vector<2x4xf32>
    %cst_114 = arith.constant -1.000000e+30 : f32
    %536 = vector.broadcast %cst_114 : f32 to vector<2x4xf32>
    %537 = arith.select %535, %533, %536 : vector<2x4xi1>, vector<2x4xf32>
    %cst_115 = arith.constant dense<0xFF800000> : vector<2xf32>
    %538 = vector.multi_reduction <maximumf>, %537, %cst_115 [1] : vector<2x4xf32> to vector<2xf32>
    %539 = vector.shape_cast %538 : vector<2xf32> to vector<2x1xf32>
    %540 = vector.broadcast %539 : vector<2x1xf32> to vector<2x4xf32>
    %541 = arith.subf %537, %540 : vector<2x4xf32>
    %542 = math.exp %541 : vector<2x4xf32>
    %cst_116 = arith.constant dense<0.000000e+00> : vector<2xf32>
    %543 = vector.multi_reduction <add>, %542, %cst_116 [1] : vector<2x4xf32> to vector<2xf32>
    %544 = vector.shape_cast %543 : vector<2xf32> to vector<2x1xf32>
    %545 = vector.broadcast %544 : vector<2x1xf32> to vector<2x4xf32>
    %546 = arith.divf %542, %545 : vector<2x4xf32>
    %cst_117 = arith.constant 0.000000e+00 : f32
    %547 = vector.broadcast %cst_117 : f32 to vector<2x124xf32>
    %548 = tpu.concatenate %546, %547 in 1 : vector<2x4xf32>, vector<2x124xf32> -> vector<2x128xf32>
    %c1 = arith.constant 1 : index
    %c0_118 = arith.constant 0 : index
    %c0_119 = arith.constant 0 : index
    %549 = vector.load %arg25[%c1, %c0_118, %c0_119] : memref<3x2x128xf32, #tpu.memory_space<vmem>>, vector<1x2x128xf32>
    %550 = vector.shape_cast %549 : vector<1x2x128xf32> to vector<2x128xf32>
    %551 = vector.shape_cast %548 : vector<2x128xf32> to vector<1x2x128xf32>
    tpu.vector_store %arg25[%c1, %c0_118, %c0_119], %551 {strides = array<i32>} : memref<3x2x128xf32, #tpu.memory_space<vmem>>, vector<1x2x128xf32>,
    %552 = vector.shape_cast %546 : vector<2x4xf32> to vector<2x4x1xf32>
    %553 = vector.broadcast %552 : vector<2x4x1xf32> to vector<2x4x128xf32>
    %554 = arith.mulf %553, %418 : vector<2x4x128xf32>
    %cst_120 = arith.constant dense<0.000000e+00> : vector<2x128xf32>
    %555 = vector.multi_reduction <add>, %554, %cst_120 [1] : vector<2x4x128xf32> to vector<2x128xf32>
    %cst_121 = arith.constant dense<0.000000e+00> : vector<2x384xf32>
    %556 = tpu.matmul %555, %438, %cst_121 {dimension_numbers = #tpu.dot_dimension_numbers<[1], [0], [0], [1], [0, 0, 1, 1], [], []>} : vector<2x128xf32>, vector<128x384xf32>, vector<2x384xf32> -> vector<2x384xf32>
    %557 = vector.broadcast %440 : vector<1x384xf32> to vector<2x384xf32>
    %558 = arith.addf %556, %557 : vector<2x384xf32>
    %cst_122 = arith.constant dense<0.000000e+00> : vector<2x384xf32>
    %559 = tpu.matmul %514, %439, %cst_122 {dimension_numbers = #tpu.dot_dimension_numbers<[1], [0], [0], [1], [0, 0, 1, 1], [], []>} : vector<2x128xf32>, vector<128x384xf32>, vector<2x384xf32> -> vector<2x384xf32>
    %560 = vector.broadcast %441 : vector<1x384xf32> to vector<2x384xf32>
    %561 = arith.addf %559, %560 : vector<2x384xf32>
    %562 = vector.extract_strided_slice %558 {offsets = [0, 0], sizes = [2, 128], strides = [1, 1]} : vector<2x384xf32> to vector<2x128xf32>
    %563 = vector.extract_strided_slice %561 {offsets = [0, 0], sizes = [2, 128], strides = [1, 1]} : vector<2x384xf32> to vector<2x128xf32>
    %564 = arith.addf %562, %563 : vector<2x128xf32>
    %565 = arith.negf %564 : vector<2x128xf32>
    %566 = math.exp %565 : vector<2x128xf32>
    %cst_123 = arith.constant 1.000000e+00 : f32
    %567 = vector.broadcast %cst_123 : f32 to vector<2x128xf32>
    %568 = arith.addf %567, %566 : vector<2x128xf32>
    %569 = arith.divf %567, %568 : vector<2x128xf32>
    %570 = vector.extract_strided_slice %558 {offsets = [0, 128], sizes = [2, 128], strides = [1, 1]} : vector<2x384xf32> to vector<2x128xf32>
    %571 = vector.extract_strided_slice %561 {offsets = [0, 128], sizes = [2, 128], strides = [1, 1]} : vector<2x384xf32> to vector<2x128xf32>
    %572 = arith.addf %570, %571 : vector<2x128xf32>
    %573 = arith.negf %572 : vector<2x128xf32>
    %574 = math.exp %573 : vector<2x128xf32>
    %cst_124 = arith.constant 1.000000e+00 : f32
    %575 = vector.broadcast %cst_124 : f32 to vector<2x128xf32>
    %576 = arith.addf %575, %574 : vector<2x128xf32>
    %577 = arith.divf %575, %576 : vector<2x128xf32>
    %578 = vector.extract_strided_slice %558 {offsets = [0, 256], sizes = [2, 128], strides = [1, 1]} : vector<2x384xf32> to vector<2x128xf32>
    %579 = vector.extract_strided_slice %561 {offsets = [0, 256], sizes = [2, 128], strides = [1, 1]} : vector<2x384xf32> to vector<2x128xf32>
    %580 = arith.mulf %569, %579 : vector<2x128xf32>
    %581 = arith.addf %578, %580 : vector<2x128xf32>
    %582 = math.tanh %581 : vector<2x128xf32>
    %cst_125 = arith.constant 1.000000e+00 : f32
    %583 = vector.broadcast %cst_125 : f32 to vector<2x128xf32>
    %584 = arith.subf %583, %577 : vector<2x128xf32>
    %585 = arith.mulf %584, %582 : vector<2x128xf32>
    %586 = arith.mulf %577, %514 : vector<2x128xf32>
    %587 = arith.addf %585, %586 : vector<2x128xf32>
    %588 = vector.shape_cast %587 : vector<2x128xf32> to vector<2x1x128xf32>
    %589 = vector.broadcast %588 : vector<2x1x128xf32> to vector<2x4x128xf32>
    %590 = arith.mulf %418, %589 : vector<2x4x128xf32>
    %591 = vector.shape_cast %590 : vector<2x4x128xf32> to vector<8x128xf32>
    %592 = vector.broadcast %588 : vector<2x1x128xf32> to vector<2x4x128xf32>
    %593 = arith.subf %418, %592 : vector<2x4x128xf32>
    %594 = math.absf %593 : vector<2x4x128xf32>
    %595 = vector.shape_cast %594 : vector<2x4x128xf32> to vector<8x128xf32>
    %596 = tpu.concatenate %591, %595 in 1 : vector<8x128xf32>, vector<8x128xf32> -> vector<8x256xf32>
    %cst_126 = arith.constant dense<0.000000e+00> : vector<8x32xf32>
    %597 = tpu.matmul %596, %435, %cst_126 {dimension_numbers = #tpu.dot_dimension_numbers<[1], [0], [0], [1], [0, 0, 1, 1], [], []>} : vector<8x256xf32>, vector<256x32xf32>, vector<8x32xf32> -> vector<8x32xf32>
    %598 = arith.addf %434, %597 : vector<8x32xf32>
    %599 = math.tanh %598 : vector<8x32xf32>
    %600 = vector.shape_cast %599 : vector<8x32xf32> to vector<2x4x32xf32>
    %601 = vector.shape_cast %436 : vector<1x32xf32> to vector<1x1x32xf32>
    %602 = vector.broadcast %601 : vector<1x1x32xf32> to vector<2x4x32xf32>
    %603 = arith.mulf %600, %602 : vector<2x4x32xf32>
    %cst_127 = arith.constant dense<0.000000e+00> : vector<2x4xf32>
    %604 = vector.multi_reduction <add>, %603, %cst_127 [2] : vector<2x4x32xf32> to vector<2x4xf32>
    %605 = vector.broadcast %437 : vector<1x1xf32> to vector<2x4xf32>
    %606 = arith.addf %604, %605 : vector<2x4xf32>
    %cst_128 = arith.constant 0.000000e+00 : f32
    %607 = vector.broadcast %cst_128 : f32 to vector<2x4xf32>
    %608 = arith.cmpf ogt, %420, %607 : vector<2x4xf32>
    %cst_129 = arith.constant -1.000000e+30 : f32
    %609 = vector.broadcast %cst_129 : f32 to vector<2x4xf32>
    %610 = arith.select %608, %606, %609 : vector<2x4xi1>, vector<2x4xf32>
    %cst_130 = arith.constant dense<0xFF800000> : vector<2xf32>
    %611 = vector.multi_reduction <maximumf>, %610, %cst_130 [1] : vector<2x4xf32> to vector<2xf32>
    %612 = vector.shape_cast %611 : vector<2xf32> to vector<2x1xf32>
    %613 = vector.broadcast %612 : vector<2x1xf32> to vector<2x4xf32>
    %614 = arith.subf %610, %613 : vector<2x4xf32>
    %615 = math.exp %614 : vector<2x4xf32>
    %cst_131 = arith.constant dense<0.000000e+00> : vector<2xf32>
    %616 = vector.multi_reduction <add>, %615, %cst_131 [1] : vector<2x4xf32> to vector<2xf32>
    %617 = vector.shape_cast %616 : vector<2xf32> to vector<2x1xf32>
    %618 = vector.broadcast %617 : vector<2x1xf32> to vector<2x4xf32>
    %619 = arith.divf %615, %618 : vector<2x4xf32>
    %cst_132 = arith.constant 0.000000e+00 : f32
    %620 = vector.broadcast %cst_132 : f32 to vector<2x124xf32>
    %621 = tpu.concatenate %619, %620 in 1 : vector<2x4xf32>, vector<2x124xf32> -> vector<2x128xf32>
    %c2 = arith.constant 2 : index
    %c0_133 = arith.constant 0 : index
    %c0_134 = arith.constant 0 : index
    %622 = vector.load %arg25[%c2, %c0_133, %c0_134] : memref<3x2x128xf32, #tpu.memory_space<vmem>>, vector<1x2x128xf32>
    %623 = vector.shape_cast %622 : vector<1x2x128xf32> to vector<2x128xf32>
    %624 = vector.shape_cast %621 : vector<2x128xf32> to vector<1x2x128xf32>
    tpu.vector_store %arg25[%c2, %c0_133, %c0_134], %624 {strides = array<i32>} : memref<3x2x128xf32, #tpu.memory_space<vmem>>, vector<1x2x128xf32>,
    %625 = vector.shape_cast %619 : vector<2x4xf32> to vector<2x4x1xf32>
    %626 = vector.broadcast %625 : vector<2x4x1xf32> to vector<2x4x128xf32>
    %627 = arith.mulf %626, %418 : vector<2x4x128xf32>
    %cst_135 = arith.constant dense<0.000000e+00> : vector<2x128xf32>
    %628 = vector.multi_reduction <add>, %627, %cst_135 [1] : vector<2x4x128xf32> to vector<2x128xf32>
    %cst_136 = arith.constant dense<0.000000e+00> : vector<2x384xf32>
    %629 = tpu.matmul %628, %438, %cst_136 {dimension_numbers = #tpu.dot_dimension_numbers<[1], [0], [0], [1], [0, 0, 1, 1], [], []>} : vector<2x128xf32>, vector<128x384xf32>, vector<2x384xf32> -> vector<2x384xf32>
    %630 = vector.broadcast %440 : vector<1x384xf32> to vector<2x384xf32>
    %631 = arith.addf %629, %630 : vector<2x384xf32>
    %cst_137 = arith.constant dense<0.000000e+00> : vector<2x384xf32>
    %632 = tpu.matmul %587, %439, %cst_137 {dimension_numbers = #tpu.dot_dimension_numbers<[1], [0], [0], [1], [0, 0, 1, 1], [], []>} : vector<2x128xf32>, vector<128x384xf32>, vector<2x384xf32> -> vector<2x384xf32>
    %633 = vector.broadcast %441 : vector<1x384xf32> to vector<2x384xf32>
    %634 = arith.addf %632, %633 : vector<2x384xf32>
    %635 = vector.extract_strided_slice %631 {offsets = [0, 0], sizes = [2, 128], strides = [1, 1]} : vector<2x384xf32> to vector<2x128xf32>
    %636 = vector.extract_strided_slice %634 {offsets = [0, 0], sizes = [2, 128], strides = [1, 1]} : vector<2x384xf32> to vector<2x128xf32>
    %637 = arith.addf %635, %636 : vector<2x128xf32>
    %638 = arith.negf %637 : vector<2x128xf32>
    %639 = math.exp %638 : vector<2x128xf32>
    %cst_138 = arith.constant 1.000000e+00 : f32
    %640 = vector.broadcast %cst_138 : f32 to vector<2x128xf32>
    %641 = arith.addf %640, %639 : vector<2x128xf32>
    %642 = arith.divf %640, %641 : vector<2x128xf32>
    %643 = vector.extract_strided_slice %631 {offsets = [0, 128], sizes = [2, 128], strides = [1, 1]} : vector<2x384xf32> to vector<2x128xf32>
    %644 = vector.extract_strided_slice %634 {offsets = [0, 128], sizes = [2, 128], strides = [1, 1]} : vector<2x384xf32> to vector<2x128xf32>
    %645 = arith.addf %643, %644 : vector<2x128xf32>
    %646 = arith.negf %645 : vector<2x128xf32>
    %647 = math.exp %646 : vector<2x128xf32>
    %cst_139 = arith.constant 1.000000e+00 : f32
    %648 = vector.broadcast %cst_139 : f32 to vector<2x128xf32>
    %649 = arith.addf %648, %647 : vector<2x128xf32>
    %650 = arith.divf %648, %649 : vector<2x128xf32>
    %651 = vector.extract_strided_slice %631 {offsets = [0, 256], sizes = [2, 128], strides = [1, 1]} : vector<2x384xf32> to vector<2x128xf32>
    %652 = vector.extract_strided_slice %634 {offsets = [0, 256], sizes = [2, 128], strides = [1, 1]} : vector<2x384xf32> to vector<2x128xf32>
    %653 = arith.mulf %642, %652 : vector<2x128xf32>
    %654 = arith.addf %651, %653 : vector<2x128xf32>
    %655 = math.tanh %654 : vector<2x128xf32>
    %cst_140 = arith.constant 1.000000e+00 : f32
    %656 = vector.broadcast %cst_140 : f32 to vector<2x128xf32>
    %657 = arith.subf %656, %650 : vector<2x128xf32>
    %658 = arith.mulf %657, %655 : vector<2x128xf32>
    %659 = arith.mulf %650, %587 : vector<2x128xf32>
    %660 = arith.addf %658, %659 : vector<2x128xf32>
    %661 = tpu.concatenate %660, %419 in 1 : vector<2x128xf32>, vector<2x128xf32> -> vector<2x256xf32>
    %c0_141 = arith.constant 0 : index
    %c0_142 = arith.constant 0 : index
    %662 = vector.load %arg23[%c0_141, %c0_142] : memref<256x128xf32, #tpu.memory_space<vmem>>, vector<256x128xf32>
    %cst_143 = arith.constant dense<0.000000e+00> : vector<2x128xf32>
    %663 = tpu.matmul %661, %662, %cst_143 {dimension_numbers = #tpu.dot_dimension_numbers<[1], [0], [0], [1], [0, 0, 1, 1], [], []>} : vector<2x256xf32>, vector<256x128xf32>, vector<2x128xf32> -> vector<2x128xf32>
    %c0_144 = arith.constant 0 : index
    %c0_145 = arith.constant 0 : index
    %664 = vector.load %arg24[%c0_144, %c0_145] : memref<1x128xf32, #tpu.memory_space<vmem>>, vector<1x128xf32>
    %665 = vector.broadcast %664 : vector<1x128xf32> to vector<2x128xf32>
    %666 = arith.addf %663, %665 : vector<2x128xf32>
    %c0_146 = arith.constant 0 : index
    %c0_147 = arith.constant 0 : index
    %667 = vector.load %arg26[%c0_146, %c0_147] : memref<2x128xf32, #tpu.memory_space<vmem>>, vector<2x128xf32>
    tpu.vector_store %arg26[%c0_146, %c0_147], %666 {strides = array<i32>} : memref<2x128xf32, #tpu.memory_space<vmem>>, vector<2x128xf32>,
    return
  }
}

</mosaic_0001>

<llo_original>
// kernel: lt.25
$region0: #{lt.25}
  %s0 = inlined_call_operand.vmem [shape: s32[2,4], index: 0, kind: input, shape index: {}]
  %s1 = inlined_call_operand.vmem [shape: s32[8], index: 1, kind: output, shape index: {}]
  $region1: #{lt.25} parent=0
    #allocation0 [shape = 'u8[4096]{0}', space=vmem, size = 0x1000, scoped, tag = 'scoped mem for output reshape']
    #allocation1 [shape = 'u8[4096]{0}', space=vmem, size = 0x1000, scoped, tag = 'scoped mem for input reshape']
    %s3 = sshllo.u32 0, 2
    %v4 = vld [vmem:[%s0] sm:%s3]
    %5 = vst [vmem:[#allocation1] sm:%s3] %v4
    %v6 = vld [vmem:[#allocation1] sm:$0x1]
    %vm7 = vcmask 31744
    %8 = vst.msk [vmem:[#allocation0] sm:$0x1] %vm7, %v6
    %s9 = scalar_lea.vmem [#allocation1], 1
    %v10 = vld [vmem:[%s9] sm:$0x1]
    %11 = vrot.lane.b32.xlu0 %v10, 4
    %v12 = vpop.permute.xlu0 %11
    %vm13 = vcmask 64544
    %14 = vst.msk [vmem:[#allocation0] sm:$0x1] %vm13, %v12
    %s16 = sshllo.u32 0, 1
    %v18 = vld [vmem:[#allocation0] sm:%s16]
    %s19 = sshllo.u32 0, 1
    %20 = vst [vmem:[%s1] sm:%s19] %v18

// kernel: dmn_forward.1
$region0: #{dmn_forward.1}
  #allocation0 [shape = 'u32[]', space=smem, size = 0x4, offset = 0x4, fixed_abs, tag = 'smem constant byte address 0x4 - core index']
  #allocation1 [shape = 'u32[144,128]{1,0:T(1,128)}', space=vmem, size = 0x12000, scoped, tag = 'internal scratch']
  #allocation2 [shape = 'f32[1,1]{1,0:T(1,128)S(1)}', space=vmem, size = 0x200, scoped, tag = 'scoped memory for dmn_forward.1']
  %s0 = inlined_call_operand.vmem [shape: s32[48,1], index: 0, kind: input, shape index: {}]
  %s1 = inlined_call_operand.vmem [shape: f32[48,1], index: 1, kind: input, shape index: {}]
  %s2 = inlined_call_operand.vmem [shape: s32[40,1], index: 2, kind: input, shape index: {}]
  %s3 = inlined_call_operand.vmem [shape: f32[40,1], index: 3, kind: input, shape index: {}]
  %s4 = inlined_call_operand.vmem [shape: f32[2,4], index: 4, kind: input, shape index: {}]
  %s5 = inlined_call_operand.vmem [shape: f32[32,16], index: 5, kind: input, shape index: {}]
  %s6 = inlined_call_operand.vmem [shape: f32[16,384], index: 6, kind: input, shape index: {}]
  %s7 = inlined_call_operand.vmem [shape: f32[128,384], index: 7, kind: input, shape index: {}]
  %s8 = inlined_call_operand.hbm [shape: f32[1,384], index: 8, kind: input, shape index: {}]
  %s9 = inlined_call_operand.hbm [shape: f32[1,384], index: 9, kind: input, shape index: {}]
  %s10 = inlined_call_operand.vmem [shape: f32[16,384], index: 10, kind: input, shape index: {}]
  %s11 = inlined_call_operand.vmem [shape: f32[128,384], index: 11, kind: input, shape index: {}]
  %s12 = inlined_call_operand.vmem [shape: f32[1,384], index: 12, kind: input, shape index: {}]
  %s13 = inlined_call_operand.vmem [shape: f32[1,384], index: 13, kind: input, shape index: {}]
  %s14 = inlined_call_operand.vmem [shape: f32[256,32], index: 14, kind: input, shape index: {}]
  %s15 = inlined_call_operand.vmem [shape: f32[256,32], index: 15, kind: input, shape index: {}]
  %s16 = inlined_call_operand.hbm [shape: f32[1,32], index: 16, kind: input, shape index: {}]
  %s17 = inlined_call_operand.hbm [shape: f32[1,32], index: 17, kind: input, shape index: {}]
  %s18 = inlined_call_operand.<no memory space> [shape: f32[1,1], index: 18, kind: input, shape index: {}]
  %s19 = inlined_call_operand.hbm [shape: f32[128,384], index: 19, kind: input, shape index: {}]
  %s20 = inlined_call_operand.hbm [shape: f32[128,384], index: 20, kind: input, shape index: {}]
  %s21 = inlined_call_operand.vmem [shape: f32[1,384], index: 21, kind: input, shape index: {}]
  %s22 = inlined_call_operand.vmem [shape: f32[1,384], index: 22, kind: input, shape index: {}]
  %s23 = inlined_call_operand.hbm [shape: f32[256,128], index: 23, kind: input, shape index: {}]
  %s24 = inlined_call_operand.hbm [shape: f32[1,128], index: 24, kind: input, shape index: {}]
  %s25 = inlined_call_operand.vmem [shape: f32[3,2,128], index: 25, kind: output, shape index: {0}]
  %s26 = inlined_call_operand.hbm [shape: f32[2,128], index: 26, kind: output, shape index: {1}]
  %27 = xla_tuple %s25, %s26
  %s28 = sld [smem:[#allocation0]]
  $region150: #{dmn_forward.1} parent=0
    _
  %s30 = ssub.s32 1, %s28
  %s31 = scalar_select 0, %s30, %s28
  %v32 = vstv %s18
  %33 = vst [vmem:[#allocation2] sm:$0x1] %v32
  $region1: #{dmn_forward.1} parent=0
    #allocation3 [shape = 'u8[1536]{0}', space=vmem, size = 0x800, scoped, tag = 'input window, operand 8, single buffered']
    #allocation4 [shape = 's32[1]{0}', space=sflag, size = 0x4, scoped, tag = 'scoped memory for dmn_forward.1']
    #allocation5 [shape = 's32[1]{0}', space=sflag, size = 0x4, scoped, tag = 'scoped memory for dmn_forward.1']
    #allocation6 [shape = 'u8[1536]{0}', space=vmem, size = 0x800, scoped, tag = 'input window, operand 9, single buffered']
    #allocation7 [shape = 's32[1]{0}', space=sflag, size = 0x4, scoped, tag = 'scoped memory for dmn_forward.1']
    #allocation8 [shape = 'u8[512]{0}', space=vmem, size = 0x400, scoped, tag = 'input window, operand 16, single buffered']
    #allocation9 [shape = 'u8[512]{0}', space=vmem, size = 0x400, scoped, tag = 'input window, operand 17, single buffered']
    #allocation10 [shape = 's32[1]{0}', space=sflag, size = 0x4, scoped, tag = 'scoped memory for dmn_forward.1']
    #allocation11 [shape = 'u8[196608]{0}', space=vmem, size = 0x30000, scoped, tag = 'input window, operand 19, single buffered']
    #allocation12 [shape = 'u8[196608]{0}', space=vmem, size = 0x30000, scoped, tag = 'input window, operand 20, single buffered']
    #allocation13 [shape = 's32[1]{0}', space=sflag, size = 0x4, scoped, tag = 'scoped memory for dmn_forward.1']
    #allocation14 [shape = 'u8[131072]{0}', space=vmem, size = 0x20000, scoped, tag = 'input window, operand 23, single buffered']
    #allocation15 [shape = 'u8[512]{0}', space=vmem, size = 0x400, scoped, tag = 'input window, operand 24, single buffered']
    #allocation16 [shape = 's32[1]{0}', space=sflag, size = 0x4, scoped, tag = 'scoped memory for dmn_forward.1']
    #allocation17 [shape = 'u8[1024]{0}', space=vmem, size = 0x400, scoped, tag = 'output window, operand 1, single buffered']
    %34 = vsyncpa [#allocation4], 0
    %35 = vsyncpa [#allocation7], 0
    %36 = vsyncpa [#allocation10], 0
    %37 = vsyncpa [#allocation13], 0
    %38 = vsyncpa [#allocation16], 0
    %39 = vsyncpa [#allocation5], 0
    // Predicated region
    $region2: #{dmn_forward.1} parent=1 // pred_check
      _
    $region3: #{dmn_forward.1} parent=1 // pred_check_branch
      %41 = sbr.rel (0) target = $region5
    $region4: #{dmn_forward.1} parent=1 // pred_region
      _
    $region5: #{dmn_forward.1} parent=1 // pred_fallthru
      _
    // Predicated region
    $region6: #{dmn_forward.1} parent=1 // pred_check
      _
    $region7: #{dmn_forward.1} parent=1 // pred_check_branch
      %43 = sbr.rel (0) target = $region9
    $region8: #{dmn_forward.1} parent=1 // pred_region
      _
    $region9: #{dmn_forward.1} parent=1 // pred_fallthru
      _
    // Predicated region
    $region10: #{dmn_forward.1} parent=1 // pred_check
      _
    $region11: #{dmn_forward.1} parent=1 // pred_check_branch
      %45 = sbr.rel (0) target = $region13
    $region12: #{dmn_forward.1} parent=1 // pred_region
      _
    $region13: #{dmn_forward.1} parent=1 // pred_fallthru
      _
    // Predicated region
    $region14: #{dmn_forward.1} parent=1 // pred_check
      _
    $region15: #{dmn_forward.1} parent=1 // pred_check_branch
      %47 = sbr.rel (0) target = $region17
    $region16: #{dmn_forward.1} parent=1 // pred_region
      _
    $region17: #{dmn_forward.1} parent=1 // pred_fallthru
      _
    // Predicated region
    $region18: #{dmn_forward.1} parent=1 // pred_check
      _
    $region19: #{dmn_forward.1} parent=1 // pred_check_branch
      %49 = sbr.rel (0) target = $region21
    $region20: #{dmn_forward.1} parent=1 // pred_region
      _
    $region21: #{dmn_forward.1} parent=1 // pred_fallthru
      _
    // Predicated region
    $region22: #{dmn_forward.1} parent=1 // pred_check
      _
    $region23: #{dmn_forward.1} parent=1 // pred_check_branch
      %51 = sbr.rel (0) target = $region25
    $region24: #{dmn_forward.1} parent=1 // pred_region
      _
    $region25: #{dmn_forward.1} parent=1 // pred_fallthru
      _
    // Predicated region
    $region26: #{dmn_forward.1} parent=1 // pred_check
      _
    $region27: #{dmn_forward.1} parent=1 // pred_check_branch
      %53 = sbr.rel (0) target = $region29
    $region28: #{dmn_forward.1} parent=1 // pred_region
      _
    $region29: #{dmn_forward.1} parent=1 // pred_fallthru
      _
    // Predicated region
    $region30: #{dmn_forward.1} parent=1 // pred_check
      _
    $region31: #{dmn_forward.1} parent=1 // pred_check_branch
      %55 = sbr.rel (0) target = $region33
    $region32: #{dmn_forward.1} parent=1 // pred_region
      _
    $region33: #{dmn_forward.1} parent=1 // pred_fallthru
      _
    // Predicated region
    $region34: #{dmn_forward.1} parent=1 // pred_check
      _
    $region35: #{dmn_forward.1} parent=1 // pred_check_branch
      %57 = sbr.rel (0) target = $region37
    $region36: #{dmn_forward.1} parent=1 // pred_region
      %s59 = ssub.s32 48, 48
      %60 = vsyncadd [#allocation4], %s59
      %s62 = sshll.u32 [#allocation3], 4
      %s63 = int_to_ptr.vmem [resolvable:$true] %s62
      %65 = dma.hbm_to_vmem [thread:$0]  %s8, 48, %s63, [#allocation4]
    $region37: #{dmn_forward.1} parent=1 // pred_fallthru
      _
    // Predicated region
    $region38: #{dmn_forward.1} parent=1 // pred_check
      _
    $region39: #{dmn_forward.1} parent=1 // pred_check_branch
      %67 = sbr.rel (0) target = $region41
    $region40: #{dmn_forward.1} parent=1 // pred_region
      %s69 = ssub.s32 48, 48
      %70 = vsyncadd [#allocation7], %s69
      %s72 = sshll.u32 [#allocation6], 4
      %s73 = int_to_ptr.vmem [resolvable:$true] %s72
      %75 = dma.hbm_to_vmem [thread:$0]  %s9, 48, %s73, [#allocation7]
    $region41: #{dmn_forward.1} parent=1 // pred_fallthru
      _
    // Predicated region
    $region42: #{dmn_forward.1} parent=1 // pred_check
      _
    $region43: #{dmn_forward.1} parent=1 // pred_check_branch
      %77 = sbr.rel (0) target = $region45
    $region44: #{dmn_forward.1} parent=1 // pred_region
      _
    $region45: #{dmn_forward.1} parent=1 // pred_fallthru
      _
    // Predicated region
    $region46: #{dmn_forward.1} parent=1 // pred_check
      _
    $region47: #{dmn_forward.1} parent=1 // pred_check_branch
      %79 = sbr.rel (0) target = $region49
    $region48: #{dmn_forward.1} parent=1 // pred_region
      _
    $region49: #{dmn_forward.1} parent=1 // pred_fallthru
      _
    // Predicated region
    $region50: #{dmn_forward.1} parent=1 // pred_check
      _
    $region51: #{dmn_forward.1} parent=1 // pred_check_branch
      %81 = sbr.rel (0) target = $region53
    $region52: #{dmn_forward.1} parent=1 // pred_region
      _
    $region53: #{dmn_forward.1} parent=1 // pred_fallthru
      _
    // Predicated region
    $region54: #{dmn_forward.1} parent=1 // pred_check
      _
    $region55: #{dmn_forward.1} parent=1 // pred_check_branch
      %83 = sbr.rel (0) target = $region57
    $region56: #{dmn_forward.1} parent=1 // pred_region
      _
    $region57: #{dmn_forward.1} parent=1 // pred_fallthru
      _
    // Predicated region
    $region58: #{dmn_forward.1} parent=1 // pred_check
      _
    $region59: #{dmn_forward.1} parent=1 // pred_check_branch
      %85 = sbr.rel (0) target = $region61
    $region60: #{dmn_forward.1} parent=1 // pred_region
      _
    $region61: #{dmn_forward.1} parent=1 // pred_fallthru
      _
    // Predicated region
    $region62: #{dmn_forward.1} parent=1 // pred_check
      _
    $region63: #{dmn_forward.1} parent=1 // pred_check_branch
      %87 = sbr.rel (0) target = $region65
    $region64: #{dmn_forward.1} parent=1 // pred_region
      _
    $region65: #{dmn_forward.1} parent=1 // pred_fallthru
      _
    // Predicated region
    $region66: #{dmn_forward.1} parent=1 // pred_check
      _
    $region67: #{dmn_forward.1} parent=1 // pred_check_branch
      %89 = sbr.rel (0) target = $region69
    $region68: #{dmn_forward.1} parent=1 // pred_region
      %s91 = ssub.s32 16, 16
      %92 = vsyncadd [#allocation7], %s91
      %s94 = sshll.u32 [#allocation8], 4
      %s95 = int_to_ptr.vmem [resolvable:$true] %s94
      %97 = dma.hbm_to_vmem [thread:$0]  %s16, 16, %s95, [#allocation7]
    $region69: #{dmn_forward.1} parent=1 // pred_fallthru
      _
    // Predicated region
    $region70: #{dmn_forward.1} parent=1 // pred_check
      _
    $region71: #{dmn_forward.1} parent=1 // pred_check_branch
      %99 = sbr.rel (0) target = $region73
    $region72: #{dmn_forward.1} parent=1 // pred_region
      %s101 = ssub.s32 16, 16
      %102 = vsyncadd [#allocation10], %s101
      %s104 = sshll.u32 [#allocation9], 4
      %s105 = int_to_ptr.vmem [resolvable:$true] %s104
      %107 = dma.hbm_to_vmem [thread:$0]  %s17, 16, %s105, [#allocation10]
    $region73: #{dmn_forward.1} parent=1 // pred_fallthru
      _
    // Predicated region
    $region74: #{dmn_forward.1} parent=1 // pred_check
      _
    $region75: #{dmn_forward.1} parent=1 // pred_check_branch
      %109 = sbr.rel (0) target = $region77
    $region76: #{dmn_forward.1} parent=1 // pred_region
      _
    $region77: #{dmn_forward.1} parent=1 // pred_fallthru
      _
    // Predicated region
    $region78: #{dmn_forward.1} parent=1 // pred_check
      _
    $region79: #{dmn_forward.1} parent=1 // pred_check_branch
      %111 = sbr.rel (0) target = $region81
    $region80: #{dmn_forward.1} parent=1 // pred_region
      %s113 = ssub.s32 6144, 6144
      %114 = vsyncadd [#allocation10], %s113
      %s115 = sshll.u32 [#allocation11], 4
      %s116 = int_to_ptr.vmem [resolvable:$true] %s115
      %121 = dma.hbm_to_vmem [thread:$0]  %s19, 6144, %s116, [#allocation10], 384, 384, 24
    $region81: #{dmn_forward.1} parent=1 // pred_fallthru
      _
    // Predicated region
    $region82: #{dmn_forward.1} parent=1 // pred_check
      _
    $region83: #{dmn_forward.1} parent=1 // pred_check_branch
      %123 = sbr.rel (0) target = $region85
    $region84: #{dmn_forward.1} parent=1 // pred_region
      %s125 = ssub.s32 6144, 6144
      %126 = vsyncadd [#allocation13], %s125
      %s127 = sshll.u32 [#allocation12], 4
      %s128 = int_to_ptr.vmem [resolvable:$true] %s127
      %133 = dma.hbm_to_vmem [thread:$0]  %s20, 6144, %s128, [#allocation13], 384, 384, 24
    $region85: #{dmn_forward.1} parent=1 // pred_fallthru
      _
    // Predicated region
    $region86: #{dmn_forward.1} parent=1 // pred_check
      _
    $region87: #{dmn_forward.1} parent=1 // pred_check_branch
      %135 = sbr.rel (0) target = $region89
    $region88: #{dmn_forward.1} parent=1 // pred_region
      _
    $region89: #{dmn_forward.1} parent=1 // pred_fallthru
      _
    // Predicated region
    $region90: #{dmn_forward.1} parent=1 // pred_check
      _
    $region91: #{dmn_forward.1} parent=1 // pred_check_branch
      %137 = sbr.rel (0) target = $region93
    $region92: #{dmn_forward.1} parent=1 // pred_region
      _
    $region93: #{dmn_forward.1} parent=1 // pred_fallthru
      _
    // Predicated region
    $region94: #{dmn_forward.1} parent=1 // pred_check
      _
    $region95: #{dmn_forward.1} parent=1 // pred_check_branch
      %139 = sbr.rel (0) target = $region97
    $region96: #{dmn_forward.1} parent=1 // pred_region
      %s141 = ssub.s32 4096, 4096
      %142 = vsyncadd [#allocation13], %s141
      %s143 = sshll.u32 [#allocation14], 4
      %s144 = int_to_ptr.vmem [resolvable:$true] %s143
      %149 = dma.hbm_to_vmem [thread:$0]  %s23, 4096, %s144, [#allocation13], 128, 128, 8
    $region97: #{dmn_forward.1} parent=1 // pred_fallthru
      _
    // Predicated region
    $region98: #{dmn_forward.1} parent=1 // pred_check
      _
    $region99: #{dmn_forward.1} parent=1 // pred_check_branch
      %151 = sbr.rel (0) target = $region101
    $region100: #{dmn_forward.1} parent=1 // pred_region
      %s153 = ssub.s32 16, 16
      %154 = vsyncadd [#allocation16], %s153
      %s156 = sshll.u32 [#allocation15], 4
      %s157 = int_to_ptr.vmem [resolvable:$true] %s156
      %159 = dma.hbm_to_vmem [thread:$0]  %s24, 16, %s157, [#allocation16]
    $region101: #{dmn_forward.1} parent=1 // pred_fallthru
      _
    // Predicated region
    $region102: #{dmn_forward.1} parent=1 // pred_check
      _
    $region103: #{dmn_forward.1} parent=1 // pred_check_branch
      %161 = sbr.rel (0) target = $region105
    $region104: #{dmn_forward.1} parent=1 // pred_region
      %162 = dma.done [#allocation4], 48
    $region105: #{dmn_forward.1} parent=1 // pred_fallthru
      _
    // Predicated region
    $region106: #{dmn_forward.1} parent=1 // pred_check
      _
    $region107: #{dmn_forward.1} parent=1 // pred_check_branch
      %164 = sbr.rel (0) target = $region109
    $region108: #{dmn_forward.1} parent=1 // pred_region
      %165 = dma.done [#allocation7], 48
    $region109: #{dmn_forward.1} parent=1 // pred_fallthru
      _
    // Predicated region
    $region110: #{dmn_forward.1} parent=1 // pred_check
      _
    $region111: #{dmn_forward.1} parent=1 // pred_check_branch
      %167 = sbr.rel (0) target = $region113
    $region112: #{dmn_forward.1} parent=1 // pred_region
      %168 = dma.done [#allocation7], 16
    $region113: #{dmn_forward.1} parent=1 // pred_fallthru
      _
    // Predicated region
    $region114: #{dmn_forward.1} parent=1 // pred_check
      _
    $region115: #{dmn_forward.1} parent=1 // pred_check_branch
      %170 = sbr.rel (0) target = $region117
    $region116: #{dmn_forward.1} parent=1 // pred_region
      %171 = dma.done [#allocation10], 16
    $region117: #{dmn_forward.1} parent=1 // pred_fallthru
      _
    // Predicated region
    $region118: #{dmn_forward.1} parent=1 // pred_check
      _
    $region119: #{dmn_forward.1} parent=1 // pred_check_branch
      %173 = sbr.rel (0) target = $region121
    $region120: #{dmn_forward.1} parent=1 // pred_region
      %174 = dma.done [#allocation10], 6144
    $region121: #{dmn_forward.1} parent=1 // pred_fallthru
      _
    // Predicated region
    $region122: #{dmn_forward.1} parent=1 // pred_check
      _
    $region123: #{dmn_forward.1} parent=1 // pred_check_branch
      %176 = sbr.rel (0) target = $region125
    $region124: #{dmn_forward.1} parent=1 // pred_region
      %177 = dma.done [#allocation13], 6144
    $region125: #{dmn_forward.1} parent=1 // pred_fallthru
      _
    // Predicated region
    $region126: #{dmn_forward.1} parent=1 // pred_check
      _
    $region127: #{dmn_forward.1} parent=1 // pred_check_branch
      %179 = sbr.rel (0) target = $region129
    $region128: #{dmn_forward.1} parent=1 // pred_region
      %180 = dma.done [#allocation13], 4096
    $region129: #{dmn_forward.1} parent=1 // pred_fallthru
      _
    // Predicated region
    $region130: #{dmn_forward.1} parent=1 // pred_check
      _
    $region131: #{dmn_forward.1} parent=1 // pred_check_branch
      %182 = sbr.rel (0) target = $region133
    $region132: #{dmn_forward.1} parent=1 // pred_region
      %183 = dma.done [#allocation16], 16
    $region133: #{dmn_forward.1} parent=1 // pred_fallthru
      _
    %v184 = vld [vmem:[%s5] sm:$0xff]
    %v185 = vld [vmem:[%s5 + $0x8] sm:$0xff]
    %v186 = vld [vmem:[%s5 + $0x10] sm:$0xff]
    %v187 = vld [vmem:[%s5 + $0x18] sm:$0xff]
    %v188 = vld [vmem:[%s6] sm:$0xff]
    %v189 = vld [vmem:[%s6 + $0x8] sm:$0xff]
    %v190 = vld [vmem:[%s6 + $0x10] sm:$0xff]
    %v191 = vld [vmem:[%s6 + $0x18] sm:$0xff]
    %v192 = vld [vmem:[%s6 + $0x20] sm:$0xff]
    %v193 = vld [vmem:[%s6 + $0x28] sm:$0xff]
    %v194 = vld [vmem:[%s7] sm:$0xff]
    %v195 = vld [vmem:[%s7 + $0x8] sm:$0xff]
    %v196 = vld [vmem:[%s7 + $0x10] sm:$0xff]
    %v197 = vld [vmem:[%s7 + $0x18] sm:$0xff]
    %v198 = vld [vmem:[%s7 + $0x20] sm:$0xff]
    %v199 = vld [vmem:[%s7 + $0x28] sm:$0xff]
    %v200 = vld [vmem:[%s7 + $0x30] sm:$0xff]
    %v201 = vld [vmem:[%s7 + $0x38] sm:$0xff]
    %v202 = vld [vmem:[%s7 + $0x40] sm:$0xff]
    %v203 = vld [vmem:[%s7 + $0x48] sm:$0xff]
    %v204 = vld [vmem:[%s7 + $0x50] sm:$0xff]
    %v205 = vld [vmem:[%s7 + $0x58] sm:$0xff]
    %v206 = vld [vmem:[%s7 + $0x60] sm:$0xff]
    %v207 = vld [vmem:[%s7 + $0x68] sm:$0xff]
    %v208 = vld [vmem:[%s7 + $0x70] sm:$0xff]
    %v209 = vld [vmem:[%s7 + $0x78] sm:$0xff]
    %v210 = vld [vmem:[%s7 + $0x80] sm:$0xff]
    %v211 = vld [vmem:[%s7 + $0x88] sm:$0xff]
    %v212 = vld [vmem:[%s7 + $0x90] sm:$0xff]
    %v213 = vld [vmem:[%s7 + $0x98] sm:$0xff]
    %v214 = vld [vmem:[%s7 + $0xa0] sm:$0xff]
    %v215 = vld [vmem:[%s7 + $0xa8] sm:$0xff]
    %v216 = vld [vmem:[%s7 + $0xb0] sm:$0xff]
    %v217 = vld [vmem:[%s7 + $0xb8] sm:$0xff]
    %v218 = vld [vmem:[%s7 + $0xc0] sm:$0xff]
    %v219 = vld [vmem:[%s7 + $0xc8] sm:$0xff]
    %v220 = vld [vmem:[%s7 + $0xd0] sm:$0xff]
    %v221 = vld [vmem:[%s7 + $0xd8] sm:$0xff]
    %v222 = vld [vmem:[%s7 + $0xe0] sm:$0xff]
    %v223 = vld [vmem:[%s7 + $0xe8] sm:$0xff]
    %v224 = vld [vmem:[%s7 + $0xf0] sm:$0xff]
    %v225 = vld [vmem:[%s7 + $0xf8] sm:$0xff]
    %v226 = vld [vmem:[%s7 + $0x100] sm:$0xff]
    %v227 = vld [vmem:[%s7 + $0x108] sm:$0xff]
    %v228 = vld [vmem:[%s7 + $0x110] sm:$0xff]
    %v229 = vld [vmem:[%s7 + $0x118] sm:$0xff]
    %v230 = vld [vmem:[%s7 + $0x120] sm:$0xff]
    %v231 = vld [vmem:[%s7 + $0x128] sm:$0xff]
    %v232 = vld [vmem:[%s7 + $0x130] sm:$0xff]
    %v233 = vld [vmem:[%s7 + $0x138] sm:$0xff]
    %v234 = vld [vmem:[%s7 + $0x140] sm:$0xff]
    %v235 = vld [vmem:[%s7 + $0x148] sm:$0xff]
    %v236 = vld [vmem:[%s7 + $0x150] sm:$0xff]
    %v237 = vld [vmem:[%s7 + $0x158] sm:$0xff]
    %v238 = vld [vmem:[%s7 + $0x160] sm:$0xff]
    %v239 = vld [vmem:[%s7 + $0x168] sm:$0xff]
    %v240 = vld [vmem:[%s7 + $0x170] sm:$0xff]
    %v241 = vld [vmem:[%s7 + $0x178] sm:$0xff]
    %v242 = vld [vmem:[#allocation3] sm:$0x7]
    %v243 = vld [vmem:[#allocation6] sm:$0x7]
    %vm244 = vcmask 130048
    %v246 = vsel %vm244, %v184, 0
    %v249 = vsel %vm244, %v185, 0
    %v252 = vsel %vm244, %v186, 0
    %v255 = vsel %vm244, %v187, 0
    %257 = vmatprep.subr.mxu0 %v189
    %258 = vmatpush1.msra.mxu0 %v188
    %259 = vmatprep.subr.mxu0 %v192
    %260 = vmatpush1.msra.mxu0 %v191
    %261 = vmatprep.subr.mxu0 0.0
    %262 = vmatpush1.msra.mxu0 0.0
    %263 = vmatprep.subr.mxu0 0.0
    %264 = vmatpush1.msra.mxu0 0.0
    %265 = vmatprep.subr.mxu0 0.0
    %266 = vmatpush1.msra.mxu0 0.0
    %267 = vmatprep.subr.mxu0 0.0
    %268 = vmatpush1.msra.mxu0 0.0
    %269 = vmatprep.subr.mxu0 0.0
    %270 = vmatpush1.msra.mxu0 0.0
    %271 = vmatprep.subr.mxu0 0.0
    %272 = vmatpush1.msra.mxu0 0.0
    %273 = vmatprep.subr.mxu0 0.0
    %274 = vmatpush1.msra.mxu0 0.0
    %275 = vmatprep.subr.mxu0 0.0
    %276 = vmatpush1.msra.mxu0 0.0
    %277 = vmatprep.subr.mxu0 0.0
    %278 = vmatpush1.msra.mxu0 0.0
    %279 = vmatprep.subr.mxu0 0.0
    %280 = vmatpush1.msra.mxu0 0.0
    %281 = vmatprep.subr.mxu0 0.0
    %282 = vmatpush1.msra.mxu0 0.0
    %283 = vmatprep.subr.mxu0 0.0
    %284 = vmatpush1.msra.mxu0 0.0
    %285 = vmatprep.subr.mxu0 0.0
    %286 = vmatpush1.msra.mxu0 0.0
    %287 = vmatprep.subr.mxu0 0.0
    %288 = vmatpush1.msra.mxu0 0.0
    %289 = vmatprep.subr.mxu0 0.0
    %290 = vmatpush1.msra.mxu0 0.0
    %291 = vmatprep.subr.mxu0 0.0
    %292 = vmatpush1.msra.mxu0 0.0
    %293 = vmatprep.subr.mxu0 0.0
    %294 = vmatpush1.msra.mxu0 0.0
    %295 = vmatprep.subr.mxu0 0.0
    %296 = vmatpush1.msra.mxu0 0.0
    %297 = vmatprep.subr.mxu0 0.0
    %298 = vmatpush1.msra.mxu0 0.0
    %299 = vmatprep.subr.mxu0 0.0
    %300 = vmatpush1.msra.mxu0 0.0
    %301 = vmatprep.subr.mxu0 0.0
    %302 = vmatpush1.msra.mxu0 0.0
    %303 = vmatprep.subr.mxu0 0.0
    %304 = vmatpush1.msra.mxu0 0.0
    %305 = vmatprep.subr.mxu0 0.0
    %306 = vmatpush1.msra.mxu0 0.0
    %307 = vmatprep.subr.mxu0 0.0
    %308 = vmatpush1.msra.mxu0 0.0
    %309 = vmatprep.subr.mxu0 0.0
    %310 = vmatpush1.msra.mxu0 0.0
    %311 = vmatprep.subr.mxu0 0.0
    %312 = vmatpush1.msra.mxu0 0.0
    %313 = vmatprep.subr.mxu0 0.0
    %314 = vmatpush1.msra.mxu0 0.0
    %315 = vmatprep.subr.mxu0 0.0
    %316 = vmatpush1.msra.mxu0 0.0
    %317 = vmatprep.subr.mxu0 0.0
    %318 = vmatpush1.msra.mxu0 0.0
    %319 = vmatprep.subr.mxu0 0.0
    %320 = vmatpush1.msra.mxu0 0.0
    %321 = vmatprep.mubr.f32.mxu0 0.0
    %322 = vmatmul.mubr.f32.gmra.mrb[0].mxu0 %v246
    %v323 = vpop.f32.mrb[0].mxu0
    %v324 = vadd.f32 0.0, %v323
    %v325 = vpop.f32.mrb[0].mxu0
    %v326 = vadd.f32 0.0, %v325
    %327 = vmatprep.mubr.f32.mxu0 0.0
    %328 = vmatmul.mubr.f32.gmra.mrb[0].mxu0 %v249
    %v329 = vpop.f32.mrb[0].mxu0
    %v330 = vadd.f32 0.0, %v329
    %v331 = vpop.f32.mrb[0].mxu0
    %v332 = vadd.f32 0.0, %v331
    %333 = vmatprep.mubr.f32.mxu0 0.0
    %334 = vmatmul.mubr.f32.gmra.mrb[0].mxu0 %v252
    %v335 = vpop.f32.mrb[0].mxu0
    %v336 = vadd.f32 0.0, %v335
    %v337 = vpop.f32.mrb[0].mxu0
    %v338 = vadd.f32 0.0, %v337
    %339 = vmatprep.mubr.f32.mxu0 0.0
    %340 = vmatmul.mubr.f32.gmra.mrb[0].mxu0 %v255
    %v341 = vpop.f32.mrb[0].mxu0
    %v342 = vadd.f32 0.0, %v341
    %v343 = vpop.f32.mrb[0].mxu0
    %v344 = vadd.f32 0.0, %v343
    %345 = vdwg.mxu0
    %346 = vmatprep.subr.mxu0 0.0
    %347 = vmatpush1.msra.mxu0 %v190
    %348 = vmatprep.subr.mxu0 0.0
    %349 = vmatpush1.msra.mxu0 %v193
    %350 = vmatprep.subr.mxu0 0.0
    %351 = vmatpush1.msra.mxu0 0.0
    %352 = vmatprep.subr.mxu0 0.0
    %353 = vmatpush1.msra.mxu0 0.0
    %354 = vmatprep.subr.mxu0 0.0
    %355 = vmatpush1.msra.mxu0 0.0
    %356 = vmatprep.subr.mxu0 0.0
    %357 = vmatpush1.msra.mxu0 0.0
    %358 = vmatprep.subr.mxu0 0.0
    %359 = vmatpush1.msra.mxu0 0.0
    %360 = vmatprep.subr.mxu0 0.0
    %361 = vmatpush1.msra.mxu0 0.0
    %362 = vmatprep.subr.mxu0 0.0
    %363 = vmatpush1.msra.mxu0 0.0
    %364 = vmatprep.subr.mxu0 0.0
    %365 = vmatpush1.msra.mxu0 0.0
    %366 = vmatprep.subr.mxu0 0.0
    %367 = vmatpush1.msra.mxu0 0.0
    %368 = vmatprep.subr.mxu0 0.0
    %369 = vmatpush1.msra.mxu0 0.0
    %370 = vmatprep.subr.mxu0 0.0
    %371 = vmatpush1.msra.mxu0 0.0
    %372 = vmatprep.subr.mxu0 0.0
    %373 = vmatpush1.msra.mxu0 0.0
    %374 = vmatprep.subr.mxu0 0.0
    %375 = vmatpush1.msra.mxu0 0.0
    %376 = vmatprep.subr.mxu0 0.0
    %377 = vmatpush1.msra.mxu0 0.0
    %378 = vmatprep.subr.mxu0 0.0
    %379 = vmatpush1.msra.mxu0 0.0
    %380 = vmatprep.subr.mxu0 0.0
    %381 = vmatpush1.msra.mxu0 0.0
    %382 = vmatprep.subr.mxu0 0.0
    %383 = vmatpush1.msra.mxu0 0.0
    %384 = vmatprep.subr.mxu0 0.0
    %385 = vmatpush1.msra.mxu0 0.0
    %386 = vmatprep.subr.mxu0 0.0
    %387 = vmatpush1.msra.mxu0 0.0
    %388 = vmatprep.subr.mxu0 0.0
    %389 = vmatpush1.msra.mxu0 0.0
    %390 = vmatprep.subr.mxu0 0.0
    %391 = vmatpush1.msra.mxu0 0.0
    %392 = vmatprep.subr.mxu0 0.0
    %393 = vmatpush1.msra.mxu0 0.0
    %394 = vmatprep.subr.mxu0 0.0
    %395 = vmatpush1.msra.mxu0 0.0
    %396 = vmatprep.subr.mxu0 0.0
    %397 = vmatpush1.msra.mxu0 0.0
    %398 = vmatprep.subr.mxu0 0.0
    %399 = vmatpush1.msra.mxu0 0.0
    %400 = vmatprep.subr.mxu0 0.0
    %401 = vmatpush1.msra.mxu0 0.0
    %402 = vmatprep.subr.mxu0 0.0
    %403 = vmatpush1.msra.mxu0 0.0
    %404 = vmatprep.subr.mxu0 0.0
    %405 = vmatpush1.msra.mxu0 0.0
    %406 = vmatprep.subr.mxu0 0.0
    %407 = vmatpush1.msra.mxu0 0.0
    %408 = vmatprep.subr.mxu0 0.0
    %409 = vmatpush1.msra.mxu0 0.0
    %410 = vmatprep.mubr.f32.mxu0 0.0
    %411 = vmatmul.mubr.f32.gmra.mrb[0].mxu0 %v246
    %v412 = vpop.f32.mrb[0].mxu0
    %v413 = vadd.f32 0.0, %v412
    %v414 = vpop.f32.mrb[0].mxu0
    %415 = vmatprep.mubr.f32.mxu0 0.0
    %416 = vmatmul.mubr.f32.gmra.mrb[0].mxu0 %v249
    %v417 = vpop.f32.mrb[0].mxu0
    %v418 = vadd.f32 0.0, %v417
    %v419 = vpop.f32.mrb[0].mxu0
    %420 = vmatprep.mubr.f32.mxu0 0.0
    %421 = vmatmul.mubr.f32.gmra.mrb[0].mxu0 %v252
    %v422 = vpop.f32.mrb[0].mxu0
    %v423 = vadd.f32 0.0, %v422
    %v424 = vpop.f32.mrb[0].mxu0
    %425 = vmatprep.mubr.f32.mxu0 0.0
    %426 = vmatmul.mubr.f32.gmra.mrb[0].mxu0 %v255
    %v427 = vpop.f32.mrb[0].mxu0
    %v428 = vadd.f32 0.0, %v427
    %v429 = vpop.f32.mrb[0].mxu0
    %430 = vdwg.mxu0
    %v431 = vld [vmem:[%s0] sm:$0xff]
    %v432 = vld [vmem:[%s0 + $0x8] sm:$0xff]
    %v433 = vld [vmem:[%s0 + $0x10] sm:$0xff]
    %v434 = vld [vmem:[%s0 + $0x18] sm:$0xff]
    %v435 = vld [vmem:[%s0 + $0x20] sm:$0xff]
    %v436 = vld [vmem:[%s0 + $0x28] sm:$0xff]
    %v437 = vlaneseq
    %v438 = vand.u32 %v437, 127
    %439 = vset.pattern.permute.xlu0 0
    %440 = vperm.xlu0 %439, %v431
    %v441 = vpop.permute.xlu0 %440
    %442 = vset.pattern.permute.xlu0 0
    %443 = vperm.xlu0 %442, %v432
    %v444 = vpop.permute.xlu0 %443
    %445 = vset.pattern.permute.xlu0 0
    %446 = vperm.xlu0 %445, %v433
    %v447 = vpop.permute.xlu0 %446
    %448 = vset.pattern.permute.xlu0 0
    %449 = vperm.xlu0 %448, %v434
    %v450 = vpop.permute.xlu0 %449
    %451 = vset.pattern.permute.xlu0 0
    %452 = vperm.xlu0 %451, %v435
    %v453 = vpop.permute.xlu0 %452
    %454 = vset.pattern.permute.xlu0 0
    %455 = vperm.xlu0 %454, %v436
    %v456 = vpop.permute.xlu0 %455
    %vm457 = vcmp.eq.s32.totalorder %v438, %v441
    %vm458 = vcmp.eq.s32.totalorder %v438, %v444
    %vm459 = vcmp.eq.s32.totalorder %v438, %v447
    %vm460 = vcmp.eq.s32.totalorder %v438, %v450
    %vm461 = vcmp.eq.s32.totalorder %v438, %v453
    %vm462 = vcmp.eq.s32.totalorder %v438, %v456
    %v463 = vsel %vm457, 1, 0
    %v464 = vsel %vm458, 1, 0
    %v465 = vsel %vm459, 1, 0
    %v466 = vsel %vm460, 1, 0
    %v467 = vsel %vm461, 1, 0
    %v468 = vsel %vm462, 1, 0
    %v469 = vcvt.s32.f32 %v463
    %v470 = vcvt.s32.f32 %v464
    %v471 = vcvt.s32.f32 %v465
    %v472 = vcvt.s32.f32 %v466
    %v473 = vcvt.s32.f32 %v467
    %v474 = vcvt.s32.f32 %v468
    %v476 = vlaneseq
    %v477 = vshrl.u32 %v476, 7
    %v478 = vsub.s32 0, %v477
    %v479 = vrot.slane %v242, %v478
    %v480 = vlaneseq
    %v481 = vshrl.u32 %v480, 7
    %v482 = vsub.s32 1, %v481
    %v483 = vrot.slane %v242, %v482
    %v484 = vlaneseq
    %v485 = vshrl.u32 %v484, 7
    %v486 = vsub.s32 2, %v485
    %v487 = vrot.slane %v242, %v486
    %vm491 = vcmask 261120
    %v493 = vsel %vm491, %v469, 0
    %v496 = vsel %vm491, %v470, 0
    %v499 = vsel %vm491, %v471, 0
    %v502 = vsel %vm491, %v472, 0
    %v505 = vsel %vm491, %v473, 0
    %v508 = vsel %vm491, %v474, 0
    %510 = vmatprep.subr.mxu0 %v326
    %511 = vmatpush1.msra.mxu0 %v324
    %512 = vmatprep.subr.mxu0 %v332
    %513 = vmatpush1.msra.mxu0 %v330
    %514 = vmatprep.subr.mxu0 %v338
    %515 = vmatpush1.msra.mxu0 %v336
    %516 = vmatprep.subr.mxu0 %v344
    %517 = vmatpush1.msra.mxu0 %v342
    %518 = vmatprep.subr.mxu0 0.0
    %519 = vmatpush1.msra.mxu0 0.0
    %520 = vmatprep.subr.mxu0 0.0
    %521 = vmatpush1.msra.mxu0 0.0
    %522 = vmatprep.subr.mxu0 0.0
    %523 = vmatpush1.msra.mxu0 0.0
    %524 = vmatprep.subr.mxu0 0.0
    %525 = vmatpush1.msra.mxu0 0.0
    %526 = vmatprep.subr.mxu0 0.0
    %527 = vmatpush1.msra.mxu0 0.0
    %528 = vmatprep.subr.mxu0 0.0
    %529 = vmatpush1.msra.mxu0 0.0
    %530 = vmatprep.subr.mxu0 0.0
    %531 = vmatpush1.msra.mxu0 0.0
    %532 = vmatprep.subr.mxu0 0.0
    %533 = vmatpush1.msra.mxu0 0.0
    %534 = vmatprep.subr.mxu0 0.0
    %535 = vmatpush1.msra.mxu0 0.0
    %536 = vmatprep.subr.mxu0 0.0
    %537 = vmatpush1.msra.mxu0 0.0
    %538 = vmatprep.subr.mxu0 0.0
    %539 = vmatpush1.msra.mxu0 0.0
    %540 = vmatprep.subr.mxu0 0.0
    %541 = vmatpush1.msra.mxu0 0.0
    %542 = vmatprep.subr.mxu0 0.0
    %543 = vmatpush1.msra.mxu0 0.0
    %544 = vmatprep.subr.mxu0 0.0
    %545 = vmatpush1.msra.mxu0 0.0
    %546 = vmatprep.subr.mxu0 0.0
    %547 = vmatpush1.msra.mxu0 0.0
    %548 = vmatprep.subr.mxu0 0.0
    %549 = vmatpush1.msra.mxu0 0.0
    %550 = vmatprep.subr.mxu0 0.0
    %551 = vmatpush1.msra.mxu0 0.0
    %552 = vmatprep.subr.mxu0 0.0
    %553 = vmatpush1.msra.mxu0 0.0
    %554 = vmatprep.subr.mxu0 0.0
    %555 = vmatpush1.msra.mxu0 0.0
    %556 = vmatprep.subr.mxu0 0.0
    %557 = vmatpush1.msra.mxu0 0.0
    %558 = vmatprep.subr.mxu0 0.0
    %559 = vmatpush1.msra.mxu0 0.0
    %560 = vmatprep.subr.mxu0 0.0
    %561 = vmatpush1.msra.mxu0 0.0
    %562 = vmatprep.subr.mxu0 0.0
    %563 = vmatpush1.msra.mxu0 0.0
    %564 = vmatprep.subr.mxu0 0.0
    %565 = vmatpush1.msra.mxu0 0.0
    %566 = vmatprep.subr.mxu0 0.0
    %567 = vmatpush1.msra.mxu0 0.0
    %568 = vmatprep.subr.mxu0 0.0
    %569 = vmatpush1.msra.mxu0 0.0
    %570 = vmatprep.subr.mxu0 0.0
    %571 = vmatpush1.msra.mxu0 0.0
    %572 = vmatprep.subr.mxu0 0.0
    %573 = vmatpush1.msra.mxu0 0.0
    %574 = vmatprep.mubr.f32.mxu0 0.0
    %575 = vmatmul.mubr.f32.gmra.mrb[0].mxu0 %v493
    %v576 = vpop.f32.mrb[0].mxu0
    %v577 = vadd.f32 %v479, %v576
    %v578 = vpop.f32.mrb[0].mxu0
    %v579 = vadd.f32 %v483, %v578
    %580 = vmatprep.mubr.f32.mxu0 0.0
    %581 = vmatmul.mubr.f32.gmra.mrb[0].mxu0 %v496
    %v582 = vpop.f32.mrb[0].mxu0
    %v583 = vadd.f32 %v479, %v582
    %v584 = vpop.f32.mrb[0].mxu0
    %v585 = vadd.f32 %v483, %v584
    %586 = vmatprep.mubr.f32.mxu0 0.0
    %587 = vmatmul.mubr.f32.gmra.mrb[0].mxu0 %v499
    %v588 = vpop.f32.mrb[0].mxu0
    %v589 = vadd.f32 %v479, %v588
    %v590 = vpop.f32.mrb[0].mxu0
    %v591 = vadd.f32 %v483, %v590
    %592 = vmatprep.mubr.f32.mxu0 0.0
    %593 = vmatmul.mubr.f32.gmra.mrb[0].mxu0 %v502
    %v594 = vpop.f32.mrb[0].mxu0
    %v595 = vadd.f32 %v479, %v594
    %v596 = vpop.f32.mrb[0].mxu0
    %v597 = vadd.f32 %v483, %v596
    %598 = vmatprep.mubr.f32.mxu0 0.0
    %599 = vmatmul.mubr.f32.gmra.mrb[0].mxu0 %v505
    %v600 = vpop.f32.mrb[0].mxu0
    %v601 = vadd.f32 %v479, %v600
    %v602 = vpop.f32.mrb[0].mxu0
    %v603 = vadd.f32 %v483, %v602
    %604 = vmatprep.mubr.f32.mxu0 0.0
    %605 = vmatmul.mubr.f32.gmra.mrb[0].mxu0 %v508
    %v606 = vpop.f32.mrb[0].mxu0
    %v607 = vadd.f32 %v479, %v606
    %v608 = vpop.f32.mrb[0].mxu0
    %v609 = vadd.f32 %v483, %v608
    %610 = vdwg.mxu0
    %611 = vmatprep.subr.mxu0 0.0
    %612 = vmatpush1.msra.mxu0 %v413
    %613 = vmatprep.subr.mxu0 0.0
    %614 = vmatpush1.msra.mxu0 %v418
    %615 = vmatprep.subr.mxu0 0.0
    %616 = vmatpush1.msra.mxu0 %v423
    %617 = vmatprep.subr.mxu0 0.0
    %618 = vmatpush1.msra.mxu0 %v428
    %619 = vmatprep.subr.mxu0 0.0
    %620 = vmatpush1.msra.mxu0 0.0
    %621 = vmatprep.subr.mxu0 0.0
    %622 = vmatpush1.msra.mxu0 0.0
    %623 = vmatprep.subr.mxu0 0.0
    %624 = vmatpush1.msra.mxu0 0.0
    %625 = vmatprep.subr.mxu0 0.0
    %626 = vmatpush1.msra.mxu0 0.0
    %627 = vmatprep.subr.mxu0 0.0
    %628 = vmatpush1.msra.mxu0 0.0
    %629 = vmatprep.subr.mxu0 0.0
    %630 = vmatpush1.msra.mxu0 0.0
    %631 = vmatprep.subr.mxu0 0.0
    %632 = vmatpush1.msra.mxu0 0.0
    %633 = vmatprep.subr.mxu0 0.0
    %634 = vmatpush1.msra.mxu0 0.0
    %635 = vmatprep.subr.mxu0 0.0
    %636 = vmatpush1.msra.mxu0 0.0
    %637 = vmatprep.subr.mxu0 0.0
    %638 = vmatpush1.msra.mxu0 0.0
    %639 = vmatprep.subr.mxu0 0.0
    %640 = vmatpush1.msra.mxu0 0.0
    %641 = vmatprep.subr.mxu0 0.0
    %642 = vmatpush1.msra.mxu0 0.0
    %643 = vmatprep.subr.mxu0 0.0
    %644 = vmatpush1.msra.mxu0 0.0
    %645 = vmatprep.subr.mxu0 0.0
    %646 = vmatpush1.msra.mxu0 0.0
    %647 = vmatprep.subr.mxu0 0.0
    %648 = vmatpush1.msra.mxu0 0.0
    %649 = vmatprep.subr.mxu0 0.0
    %650 = vmatpush1.msra.mxu0 0.0
    %651 = vmatprep.subr.mxu0 0.0
    %652 = vmatpush1.msra.mxu0 0.0
    %653 = vmatprep.subr.mxu0 0.0
    %654 = vmatpush1.msra.mxu0 0.0
    %655 = vmatprep.subr.mxu0 0.0
    %656 = vmatpush1.msra.mxu0 0.0
    %657 = vmatprep.subr.mxu0 0.0
    %658 = vmatpush1.msra.mxu0 0.0
    %659 = vmatprep.subr.mxu0 0.0
    %660 = vmatpush1.msra.mxu0 0.0
    %661 = vmatprep.subr.mxu0 0.0
    %662 = vmatpush1.msra.mxu0 0.0
    %663 = vmatprep.subr.mxu0 0.0
    %664 = vmatpush1.msra.mxu0 0.0
    %665 = vmatprep.subr.mxu0 0.0
    %666 = vmatpush1.msra.mxu0 0.0
    %667 = vmatprep.subr.mxu0 0.0
    %668 = vmatpush1.msra.mxu0 0.0
    %669 = vmatprep.subr.mxu0 0.0
    %670 = vmatpush1.msra.mxu0 0.0
    %671 = vmatprep.subr.mxu0 0.0
    %672 = vmatpush1.msra.mxu0 0.0
    %673 = vmatprep.subr.mxu0 0.0
    %674 = vmatpush1.msra.mxu0 0.0
    %675 = vmatprep.mubr.f32.mxu0 0.0
    %676 = vmatmul.mubr.f32.gmra.mrb[0].mxu0 %v493
    %v677 = vpop.f32.mrb[0].mxu0
    %v678 = vadd.f32 %v487, %v677
    %v679 = vpop.f32.mrb[0].mxu0
    %680 = vmatprep.mubr.f32.mxu0 0.0
    %681 = vmatmul.mubr.f32.gmra.mrb[0].mxu0 %v496
    %v682 = vpop.f32.mrb[0].mxu0
    %v683 = vadd.f32 %v487, %v682
    %v684 = vpop.f32.mrb[0].mxu0
    %685 = vmatprep.mubr.f32.mxu0 0.0
    %686 = vmatmul.mubr.f32.gmra.mrb[0].mxu0 %v499
    %v687 = vpop.f32.mrb[0].mxu0
    %v688 = vadd.f32 %v487, %v687
    %v689 = vpop.f32.mrb[0].mxu0
    %690 = vmatprep.mubr.f32.mxu0 0.0
    %691 = vmatmul.mubr.f32.gmra.mrb[0].mxu0 %v502
    %v692 = vpop.f32.mrb[0].mxu0
    %v693 = vadd.f32 %v487, %v692
    %v694 = vpop.f32.mrb[0].mxu0
    %695 = vmatprep.mubr.f32.mxu0 0.0
    %696 = vmatmul.mubr.f32.gmra.mrb[0].mxu0 %v505
    %v697 = vpop.f32.mrb[0].mxu0
    %v698 = vadd.f32 %v487, %v697
    %v699 = vpop.f32.mrb[0].mxu0
    %700 = vmatprep.mubr.f32.mxu0 0.0
    %701 = vmatmul.mubr.f32.gmra.mrb[0].mxu0 %v508
    %v702 = vpop.f32.mrb[0].mxu0
    %v703 = vadd.f32 %v487, %v702
    %v704 = vpop.f32.mrb[0].mxu0
    %705 = vdwg.mxu0
    %v706 = vld [vmem:[%s1] sm:$0xff]
    %v707 = vld [vmem:[%s1 + $0x8] sm:$0xff]
    %v708 = vld [vmem:[%s1 + $0x10] sm:$0xff]
    %v709 = vld [vmem:[%s1 + $0x18] sm:$0xff]
    %v710 = vld [vmem:[%s1 + $0x20] sm:$0xff]
    %v711 = vld [vmem:[%s1 + $0x28] sm:$0xff]
    %v713 = vlaneseq
    %v714 = vshrl.u32 %v713, 7
    %v715 = vsub.s32 0, %v714
    %v716 = vrot.slane %v243, %v715
    %v717 = vlaneseq
    %v718 = vshrl.u32 %v717, 7
    %v719 = vsub.s32 1, %v718
    %v720 = vrot.slane %v243, %v719
    %v721 = vlaneseq
    %v722 = vshrl.u32 %v721, 7
    %v723 = vsub.s32 2, %v722
    %v724 = vrot.slane %v243, %v723
    %728 = vmatprep.subr.mxu0 %v195
    %729 = vmatpush1.msra.mxu0 %v194
    %730 = vmatprep.subr.mxu0 %v198
    %731 = vmatpush1.msra.mxu0 %v197
    %732 = vmatprep.subr.mxu0 %v201
    %733 = vmatpush1.msra.mxu0 %v200
    %734 = vmatprep.subr.mxu0 %v204
    %735 = vmatpush1.msra.mxu0 %v203
    %736 = vmatprep.subr.mxu0 %v207
    %737 = vmatpush1.msra.mxu0 %v206
    %738 = vmatprep.subr.mxu0 %v210
    %739 = vmatpush1.msra.mxu0 %v209
    %740 = vmatprep.subr.mxu0 %v213
    %741 = vmatpush1.msra.mxu0 %v212
    %742 = vmatprep.subr.mxu0 %v216
    %743 = vmatpush1.msra.mxu0 %v215
    %744 = vmatprep.subr.mxu0 %v219
    %745 = vmatpush1.msra.mxu0 %v218
    %746 = vmatprep.subr.mxu0 %v222
    %747 = vmatpush1.msra.mxu0 %v221
    %748 = vmatprep.subr.mxu0 %v225
    %749 = vmatpush1.msra.mxu0 %v224
    %750 = vmatprep.subr.mxu0 %v228
    %751 = vmatpush1.msra.mxu0 %v227
    %752 = vmatprep.subr.mxu0 %v231
    %753 = vmatpush1.msra.mxu0 %v230
    %754 = vmatprep.subr.mxu0 %v234
    %755 = vmatpush1.msra.mxu0 %v233
    %756 = vmatprep.subr.mxu0 %v237
    %757 = vmatpush1.msra.mxu0 %v236
    %758 = vmatprep.subr.mxu0 %v240
    %759 = vmatpush1.msra.mxu0 %v239
    %760 = vmatprep.subr.mxu0 0.0
    %761 = vmatpush1.msra.mxu0 0.0
    %762 = vmatprep.subr.mxu0 0.0
    %763 = vmatpush1.msra.mxu0 0.0
    %764 = vmatprep.subr.mxu0 0.0
    %765 = vmatpush1.msra.mxu0 0.0
    %766 = vmatprep.subr.mxu0 0.0
    %767 = vmatpush1.msra.mxu0 0.0
    %768 = vmatprep.subr.mxu0 0.0
    %769 = vmatpush1.msra.mxu0 0.0
    %770 = vmatprep.subr.mxu0 0.0
    %771 = vmatpush1.msra.mxu0 0.0
    %772 = vmatprep.subr.mxu0 0.0
    %773 = vmatpush1.msra.mxu0 0.0
    %774 = vmatprep.subr.mxu0 0.0
    %775 = vmatpush1.msra.mxu0 0.0
    %776 = vmatprep.subr.mxu0 0.0
    %777 = vmatpush1.msra.mxu0 0.0
    %778 = vmatprep.subr.mxu0 0.0
    %779 = vmatpush1.msra.mxu0 0.0
    %780 = vmatprep.subr.mxu0 0.0
    %781 = vmatpush1.msra.mxu0 0.0
    %782 = vmatprep.subr.mxu0 0.0
    %783 = vmatpush1.msra.mxu0 0.0
    %784 = vmatprep.subr.mxu0 0.0
    %785 = vmatpush1.msra.mxu0 0.0
    %786 = vmatprep.subr.mxu0 0.0
    %787 = vmatpush1.msra.mxu0 0.0
    %788 = vmatprep.subr.mxu0 0.0
    %789 = vmatpush1.msra.mxu0 0.0
    %790 = vmatprep.subr.mxu0 0.0
    %791 = vmatpush1.msra.mxu0 0.0
    %792 = vmatprep.mubr.f32.mxu0 0.0
    %793 = vmatmul.mubr.f32.gmra.mrb[0].mxu0 0.0
    %v794 = vpop.f32.mrb[0].mxu0
    %v795 = vadd.f32 %v716, %v794
    %v796 = vpop.f32.mrb[0].mxu0
    %v797 = vadd.f32 %v720, %v796
    %798 = vdwg.mxu0
    %799 = vmatprep.subr.mxu0 0.0
    %800 = vmatpush1.msra.mxu0 %v196
    %801 = vmatprep.subr.mxu0 0.0
    %802 = vmatpush1.msra.mxu0 %v199
    %803 = vmatprep.subr.mxu0 0.0
    %804 = vmatpush1.msra.mxu0 %v202
    %805 = vmatprep.subr.mxu0 0.0
    %806 = vmatpush1.msra.mxu0 %v205
    %807 = vmatprep.subr.mxu0 0.0
    %808 = vmatpush1.msra.mxu0 %v208
    %809 = vmatprep.subr.mxu0 0.0
    %810 = vmatpush1.msra.mxu0 %v211
    %811 = vmatprep.subr.mxu0 0.0
    %812 = vmatpush1.msra.mxu0 %v214
    %813 = vmatprep.subr.mxu0 0.0
    %814 = vmatpush1.msra.mxu0 %v217
    %815 = vmatprep.subr.mxu0 0.0
    %816 = vmatpush1.msra.mxu0 %v220
    %817 = vmatprep.subr.mxu0 0.0
    %818 = vmatpush1.msra.mxu0 %v223
    %819 = vmatprep.subr.mxu0 0.0
    %820 = vmatpush1.msra.mxu0 %v226
    %821 = vmatprep.subr.mxu0 0.0
    %822 = vmatpush1.msra.mxu0 %v229
    %823 = vmatprep.subr.mxu0 0.0
    %824 = vmatpush1.msra.mxu0 %v232
    %825 = vmatprep.subr.mxu0 0.0
    %826 = vmatpush1.msra.mxu0 %v235
    %827 = vmatprep.subr.mxu0 0.0
    %828 = vmatpush1.msra.mxu0 %v238
    %829 = vmatprep.subr.mxu0 0.0
    %830 = vmatpush1.msra.mxu0 %v241
    %831 = vmatprep.subr.mxu0 0.0
    %832 = vmatpush1.msra.mxu0 0.0
    %833 = vmatprep.subr.mxu0 0.0
    %834 = vmatpush1.msra.mxu0 0.0
    %835 = vmatprep.subr.mxu0 0.0
    %836 = vmatpush1.msra.mxu0 0.0
    %837 = vmatprep.subr.mxu0 0.0
    %838 = vmatpush1.msra.mxu0 0.0
    %839 = vmatprep.subr.mxu0 0.0
    %840 = vmatpush1.msra.mxu0 0.0
    %841 = vmatprep.subr.mxu0 0.0
    %842 = vmatpush1.msra.mxu0 0.0
    %843 = vmatprep.subr.mxu0 0.0
    %844 = vmatpush1.msra.mxu0 0.0
    %845 = vmatprep.subr.mxu0 0.0
    %846 = vmatpush1.msra.mxu0 0.0
    %847 = vmatprep.subr.mxu0 0.0
    %848 = vmatpush1.msra.mxu0 0.0
    %849 = vmatprep.subr.mxu0 0.0
    %850 = vmatpush1.msra.mxu0 0.0
    %851 = vmatprep.subr.mxu0 0.0
    %852 = vmatpush1.msra.mxu0 0.0
    %853 = vmatprep.subr.mxu0 0.0
    %854 = vmatpush1.msra.mxu0 0.0
    %855 = vmatprep.subr.mxu0 0.0
    %856 = vmatpush1.msra.mxu0 0.0
    %857 = vmatprep.subr.mxu0 0.0
    %858 = vmatpush1.msra.mxu0 0.0
    %859 = vmatprep.subr.mxu0 0.0
    %860 = vmatpush1.msra.mxu0 0.0
    %861 = vmatprep.subr.mxu0 0.0
    %862 = vmatpush1.msra.mxu0 0.0
    %863 = vmatprep.mubr.f32.mxu0 0.0
    %864 = vmatmul.mubr.f32.gmra.mrb[0].mxu0 0.0
    %v865 = vpop.f32.mrb[0].mxu0
    %v866 = vadd.f32 %v724, %v865
    %v867 = vpop.f32.mrb[0].mxu0
    %868 = vdwg.mxu0
    %v869 = vadd.f32 %v577, %v795
    %v870 = vxor.u32 %v869, 2147483648
    %v871 = vmul.f32 %v870, 1.442695
    %v872 = vpow.pop %v871
    %v873 = vadd.f32 %v872, 1.0
    %v874 = vrcp.pop %v873
    %v875 = vmul.f32 1.0, %v874
    %v876 = vadd.f32 %v579, %v797
    %v877 = vxor.u32 %v876, 2147483648
    %v878 = vmul.f32 %v877, 1.442695
    %v879 = vpow.pop %v878
    %v880 = vadd.f32 %v879, 1.0
    %v881 = vrcp.pop %v880
    %v882 = vmul.f32 1.0, %v881
    %v883 = vmul.f32 %v875, %v866
    %v884 = vadd.f32 %v678, %v883
    %v885 = vtanh.pop %v884
    %v886 = vsub.f32 1.0, %v882
    %v887 = vmul.f32 %v886, %v885
    %v888 = vmul.f32 %v882, 0.0
    %v889 = vadd.f32 %v887, %v888
    %891 = vset.pattern.permute.xlu0 0
    %892 = vperm.xlu0 %891, %v706
    %v893 = vpop.permute.xlu0 %892
    %v895 = vmul.f32 %v893, %v889
    %v896 = vadd.f32 %v895, 0.0
    %897 = vmatprep.subr.mxu0 %v195
    %898 = vmatpush1.msra.mxu0 %v194
    %899 = vmatprep.subr.mxu0 %v198
    %900 = vmatpush1.msra.mxu0 %v197
    %901 = vmatprep.subr.mxu0 %v201
    %902 = vmatpush1.msra.mxu0 %v200
    %903 = vmatprep.subr.mxu0 %v204
    %904 = vmatpush1.msra.mxu0 %v203
    %905 = vmatprep.subr.mxu0 %v207
    %906 = vmatpush1.msra.mxu0 %v206
    %907 = vmatprep.subr.mxu0 %v210
    %908 = vmatpush1.msra.mxu0 %v209
    %909 = vmatprep.subr.mxu0 %v213
    %910 = vmatpush1.msra.mxu0 %v212
    %911 = vmatprep.subr.mxu0 %v216
    %912 = vmatpush1.msra.mxu0 %v215
    %913 = vmatprep.subr.mxu0 %v219
    %914 = vmatpush1.msra.mxu0 %v218
    %915 = vmatprep.subr.mxu0 %v222
    %916 = vmatpush1.msra.mxu0 %v221
    %917 = vmatprep.subr.mxu0 %v225
    %918 = vmatpush1.msra.mxu0 %v224
    %919 = vmatprep.subr.mxu0 %v228
    %920 = vmatpush1.msra.mxu0 %v227
    %921 = vmatprep.subr.mxu0 %v231
    %922 = vmatpush1.msra.mxu0 %v230
    %923 = vmatprep.subr.mxu0 %v234
    %924 = vmatpush1.msra.mxu0 %v233
    %925 = vmatprep.subr.mxu0 %v237
    %926 = vmatpush1.msra.mxu0 %v236
    %927 = vmatprep.subr.mxu0 %v240
    %928 = vmatpush1.msra.mxu0 %v239
    %929 = vmatprep.subr.mxu0 0.0
    %930 = vmatpush1.msra.mxu0 0.0
    %931 = vmatprep.subr.mxu0 0.0
    %932 = vmatpush1.msra.mxu0 0.0
    %933 = vmatprep.subr.mxu0 0.0
    %934 = vmatpush1.msra.mxu0 0.0
    %935 = vmatprep.subr.mxu0 0.0
    %936 = vmatpush1.msra.mxu0 0.0
    %937 = vmatprep.subr.mxu0 0.0
    %938 = vmatpush1.msra.mxu0 0.0
    %939 = vmatprep.subr.mxu0 0.0
    %940 = vmatpush1.msra.mxu0 0.0
    %941 = vmatprep.subr.mxu0 0.0
    %942 = vmatpush1.msra.mxu0 0.0
    %943 = vmatprep.subr.mxu0 0.0
    %944 = vmatpush1.msra.mxu0 0.0
    %945 = vmatprep.subr.mxu0 0.0
    %946 = vmatpush1.msra.mxu0 0.0
    %947 = vmatprep.subr.mxu0 0.0
    %948 = vmatpush1.msra.mxu0 0.0
    %949 = vmatprep.subr.mxu0 0.0
    %950 = vmatpush1.msra.mxu0 0.0
    %951 = vmatprep.subr.mxu0 0.0
    %952 = vmatpush1.msra.mxu0 0.0
    %953 = vmatprep.subr.mxu0 0.0
    %954 = vmatpush1.msra.mxu0 0.0
    %955 = vmatprep.subr.mxu0 0.0
    %956 = vmatpush1.msra.mxu0 0.0
    %957 = vmatprep.subr.mxu0 0.0
    %958 = vmatpush1.msra.mxu0 0.0
    %959 = vmatprep.subr.mxu0 0.0
    %960 = vmatpush1.msra.mxu0 0.0
    %961 = vmatprep.mubr.f32.mxu0 0.0
    %962 = vmatmul.mubr.f32.gmra.mrb[0].mxu0 %v896
    %v963 = vpop.f32.mrb[0].mxu0
    %v964 = vadd.f32 %v716, %v963
    %v965 = vpop.f32.mrb[0].mxu0
    %v966 = vadd.f32 %v720, %v965
    %967 = vdwg.mxu0
    %968 = vmatprep.subr.mxu0 0.0
    %969 = vmatpush1.msra.mxu0 %v196
    %970 = vmatprep.subr.mxu0 0.0
    %971 = vmatpush1.msra.mxu0 %v199
    %972 = vmatprep.subr.mxu0 0.0
    %973 = vmatpush1.msra.mxu0 %v202
    %974 = vmatprep.subr.mxu0 0.0
    %975 = vmatpush1.msra.mxu0 %v205
    %976 = vmatprep.subr.mxu0 0.0
    %977 = vmatpush1.msra.mxu0 %v208
    %978 = vmatprep.subr.mxu0 0.0
    %979 = vmatpush1.msra.mxu0 %v211
    %980 = vmatprep.subr.mxu0 0.0
    %981 = vmatpush1.msra.mxu0 %v214
    %982 = vmatprep.subr.mxu0 0.0
    %983 = vmatpush1.msra.mxu0 %v217
    %984 = vmatprep.subr.mxu0 0.0
    %985 = vmatpush1.msra.mxu0 %v220
    %986 = vmatprep.subr.mxu0 0.0
    %987 = vmatpush1.msra.mxu0 %v223
    %988 = vmatprep.subr.mxu0 0.0
    %989 = vmatpush1.msra.mxu0 %v226
    %990 = vmatprep.subr.mxu0 0.0
    %991 = vmatpush1.msra.mxu0 %v229
    %992 = vmatprep.subr.mxu0 0.0
    %993 = vmatpush1.msra.mxu0 %v232
    %994 = vmatprep.subr.mxu0 0.0
    %995 = vmatpush1.msra.mxu0 %v235
    %996 = vmatprep.subr.mxu0 0.0
    %997 = vmatpush1.msra.mxu0 %v238
    %998 = vmatprep.subr.mxu0 0.0
    %999 = vmatpush1.msra.mxu0 %v241
    %1000 = vmatprep.subr.mxu0 0.0
    %1001 = vmatpush1.msra.mxu0 0.0
    %1002 = vmatprep.subr.mxu0 0.0
    %1003 = vmatpush1.msra.mxu0 0.0
    %1004 = vmatprep.subr.mxu0 0.0
    %1005 = vmatpush1.msra.mxu0 0.0
    %1006 = vmatprep.subr.mxu0 0.0
    %1007 = vmatpush1.msra.mxu0 0.0
    %1008 = vmatprep.subr.mxu0 0.0
    %1009 = vmatpush1.msra.mxu0 0.0
    %1010 = vmatprep.subr.mxu0 0.0
    %1011 = vmatpush1.msra.mxu0 0.0
    %1012 = vmatprep.subr.mxu0 0.0
    %1013 = vmatpush1.msra.mxu0 0.0
    %1014 = vmatprep.subr.mxu0 0.0
    %1015 = vmatpush1.msra.mxu0 0.0
    %1016 = vmatprep.subr.mxu0 0.0
    %1017 = vmatpush1.msra.mxu0 0.0
    %1018 = vmatprep.subr.mxu0 0.0
    %1019 = vmatpush1.msra.mxu0 0.0
    %1020 = vmatprep.subr.mxu0 0.0
    %1021 = vmatpush1.msra.mxu0 0.0
    %1022 = vmatprep.subr.mxu0 0.0
    %1023 = vmatpush1.msra.mxu0 0.0
    %1024 = vmatprep.subr.mxu0 0.0
    %1025 = vmatpush1.msra.mxu0 0.0
    %1026 = vmatprep.subr.mxu0 0.0
    %1027 = vmatpush1.msra.mxu0 0.0
    %1028 = vmatprep.subr.mxu0 0.0
    %1029 = vmatpush1.msra.mxu0 0.0
    %1030 = vmatprep.subr.mxu0 0.0
    %1031 = vmatpush1.msra.mxu0 0.0
    %1032 = vmatprep.mubr.f32.mxu0 0.0
    %1033 = vmatmul.mubr.f32.gmra.mrb[0].mxu0 %v896
    %v1034 = vpop.f32.mrb[0].mxu0
    %v1035 = vadd.f32 %v724, %v1034
    %v1036 = vpop.f32.mrb[0].mxu0
    %1037 = vdwg.mxu0
    %v1038 = vadd.f32 %v583, %v964
    %v1039 = vxor.u32 %v1038, 2147483648
    %v1040 = vmul.f32 %v1039, 1.442695
    %v1041 = vpow.pop %v1040
    %v1042 = vadd.f32 %v1041, 1.0
    %v1043 = vrcp.pop %v1042
    %v1044 = vmul.f32 1.0, %v1043
    %v1045 = vadd.f32 %v585, %v966
    %v1046 = vxor.u32 %v1045, 2147483648
    %v1047 = vmul.f32 %v1046, 1.442695
    %v1048 = vpow.pop %v1047
    %v1049 = vadd.f32 %v1048, 1.0
    %v1050 = vrcp.pop %v1049
    %v1051 = vmul.f32 1.0, %v1050
    %v1052 = vmul.f32 %v1044, %v1035
    %v1053 = vadd.f32 %v683, %v1052
    %v1054 = vtanh.pop %v1053
    %v1055 = vsub.f32 1.0, %v1051
    %v1056 = vmul.f32 %v1055, %v1054
    %v1057 = vmul.f32 %v1051, %v896
    %v1058 = vadd.f32 %v1056, %v1057
    %v1059 = vsub.f32 %v1058, %v896
    %1061 = vset.pattern.permute.xlu0 0
    %1062 = vperm.xlu0 %1061, %v707
    %v1063 = vpop.permute.xlu0 %1062
    %v1065 = vmul.f32 %v1063, %v1059
    %v1066 = vadd.f32 %v896, %v1065
    %1067 = vmatprep.subr.mxu0 %v195
    %1068 = vmatpush1.msra.mxu0 %v194
    %1069 = vmatprep.subr.mxu0 %v198
    %1070 = vmatpush1.msra.mxu0 %v197
    %1071 = vmatprep.subr.mxu0 %v201
    %1072 = vmatpush1.msra.mxu0 %v200
    %1073 = vmatprep.subr.mxu0 %v204
    %1074 = vmatpush1.msra.mxu0 %v203
    %1075 = vmatprep.subr.mxu0 %v207
    %1076 = vmatpush1.msra.mxu0 %v206
    %1077 = vmatprep.subr.mxu0 %v210
    %1078 = vmatpush1.msra.mxu0 %v209
    %1079 = vmatprep.subr.mxu0 %v213
    %1080 = vmatpush1.msra.mxu0 %v212
    %1081 = vmatprep.subr.mxu0 %v216
    %1082 = vmatpush1.msra.mxu0 %v215
    %1083 = vmatprep.subr.mxu0 %v219
    %1084 = vmatpush1.msra.mxu0 %v218
    %1085 = vmatprep.subr.mxu0 %v222
    %1086 = vmatpush1.msra.mxu0 %v221
    %1087 = vmatprep.subr.mxu0 %v225
    %1088 = vmatpush1.msra.mxu0 %v224
    %1089 = vmatprep.subr.mxu0 %v228
    %1090 = vmatpush1.msra.mxu0 %v227
    %1091 = vmatprep.subr.mxu0 %v231
    %1092 = vmatpush1.msra.mxu0 %v230
    %1093 = vmatprep.subr.mxu0 %v234
    %1094 = vmatpush1.msra.mxu0 %v233
    %1095 = vmatprep.subr.mxu0 %v237
    %1096 = vmatpush1.msra.mxu0 %v236
    %1097 = vmatprep.subr.mxu0 %v240
    %1098 = vmatpush1.msra.mxu0 %v239
    %1099 = vmatprep.subr.mxu0 0.0
    %1100 = vmatpush1.msra.mxu0 0.0
    %1101 = vmatprep.subr.mxu0 0.0
    %1102 = vmatpush1.msra.mxu0 0.0
    %1103 = vmatprep.subr.mxu0 0.0
    %1104 = vmatpush1.msra.mxu0 0.0
    %1105 = vmatprep.subr.mxu0 0.0
    %1106 = vmatpush1.msra.mxu0 0.0
    %1107 = vmatprep.subr.mxu0 0.0
    %1108 = vmatpush1.msra.mxu0 0.0
    %1109 = vmatprep.subr.mxu0 0.0
    %1110 = vmatpush1.msra.mxu0 0.0
    %1111 = vmatprep.subr.mxu0 0.0
    %1112 = vmatpush1.msra.mxu0 0.0
    %1113 = vmatprep.subr.mxu0 0.0
    %1114 = vmatpush1.msra.mxu0 0.0
    %1115 = vmatprep.subr.mxu0 0.0
    %1116 = vmatpush1.msra.mxu0 0.0
    %1117 = vmatprep.subr.mxu0 0.0
    %1118 = vmatpush1.msra.mxu0 0.0
    %1119 = vmatprep.subr.mxu0 0.0
    %1120 = vmatpush1.msra.mxu0 0.0
    %1121 = vmatprep.subr.mxu0 0.0
    %1122 = vmatpush1.msra.mxu0 0.0
    %1123 = vmatprep.subr.mxu0 0.0
    %1124 = vmatpush1.msra.mxu0 0.0
    %1125 = vmatprep.subr.mxu0 0.0
    %1126 = vmatpush1.msra.mxu0 0.0
    %1127 = vmatprep.subr.mxu0 0.0
    %1128 = vmatpush1.msra.mxu0 0.0
    %1129 = vmatprep.subr.mxu0 0.0
    %1130 = vmatpush1.msra.mxu0 0.0
    %1131 = vmatprep.mubr.f32.mxu0 0.0
    %1132 = vmatmul.mubr.f32.gmra.mrb[0].mxu0 %v1066
    %v1133 = vpop.f32.mrb[0].mxu0
    %v1134 = vadd.f32 %v716, %v1133
    %v1135 = vpop.f32.mrb[0].mxu0
    %v1136 = vadd.f32 %v720, %v1135
    %1137 = vdwg.mxu0
    %1138 = vmatprep.subr.mxu0 0.0
    %1139 = vmatpush1.msra.mxu0 %v196
    %1140 = vmatprep.subr.mxu0 0.0
    %1141 = vmatpush1.msra.mxu0 %v199
    %1142 = vmatprep.subr.mxu0 0.0
    %1143 = vmatpush1.msra.mxu0 %v202
    %1144 = vmatprep.subr.mxu0 0.0
    %1145 = vmatpush1.msra.mxu0 %v205
    %1146 = vmatprep.subr.mxu0 0.0
    %1147 = vmatpush1.msra.mxu0 %v208
    %1148 = vmatprep.subr.mxu0 0.0
    %1149 = vmatpush1.msra.mxu0 %v211
    %1150 = vmatprep.subr.mxu0 0.0
    %1151 = vmatpush1.msra.mxu0 %v214
    %1152 = vmatprep.subr.mxu0 0.0
    %1153 = vmatpush1.msra.mxu0 %v217
    %1154 = vmatprep.subr.mxu0 0.0
    %1155 = vmatpush1.msra.mxu0 %v220
    %1156 = vmatprep.subr.mxu0 0.0
    %1157 = vmatpush1.msra.mxu0 %v223
    %1158 = vmatprep.subr.mxu0 0.0
    %1159 = vmatpush1.msra.mxu0 %v226
    %1160 = vmatprep.subr.mxu0 0.0
    %1161 = vmatpush1.msra.mxu0 %v229
    %1162 = vmatprep.subr.mxu0 0.0
    %1163 = vmatpush1.msra.mxu0 %v232
    %1164 = vmatprep.subr.mxu0 0.0
    %1165 = vmatpush1.msra.mxu0 %v235
    %1166 = vmatprep.subr.mxu0 0.0
    %1167 = vmatpush1.msra.mxu0 %v238
    %1168 = vmatprep.subr.mxu0 0.0
    %1169 = vmatpush1.msra.mxu0 %v241
    %1170 = vmatprep.subr.mxu0 0.0
    %1171 = vmatpush1.msra.mxu0 0.0
    %1172 = vmatprep.subr.mxu0 0.0
    %1173 = vmatpush1.msra.mxu0 0.0
    %1174 = vmatprep.subr.mxu0 0.0
    %1175 = vmatpush1.msra.mxu0 0.0
    %1176 = vmatprep.subr.mxu0 0.0
    %1177 = vmatpush1.msra.mxu0 0.0
    %1178 = vmatprep.subr.mxu0 0.0
    %1179 = vmatpush1.msra.mxu0 0.0
    %1180 = vmatprep.subr.mxu0 0.0
    %1181 = vmatpush1.msra.mxu0 0.0
    %1182 = vmatprep.subr.mxu0 0.0
    %1183 = vmatpush1.msra.mxu0 0.0
    %1184 = vmatprep.subr.mxu0 0.0
    %1185 = vmatpush1.msra.mxu0 0.0
    %1186 = vmatprep.subr.mxu0 0.0
    %1187 = vmatpush1.msra.mxu0 0.0
    %1188 = vmatprep.subr.mxu0 0.0
    %1189 = vmatpush1.msra.mxu0 0.0
    %1190 = vmatprep.subr.mxu0 0.0
    %1191 = vmatpush1.msra.mxu0 0.0
    %1192 = vmatprep.subr.mxu0 0.0
    %1193 = vmatpush1.msra.mxu0 0.0
    %1194 = vmatprep.subr.mxu0 0.0
    %1195 = vmatpush1.msra.mxu0 0.0
    %1196 = vmatprep.subr.mxu0 0.0
    %1197 = vmatpush1.msra.mxu0 0.0
    %1198 = vmatprep.subr.mxu0 0.0
    %1199 = vmatpush1.msra.mxu0 0.0
    %1200 = vmatprep.subr.mxu0 0.0
    %1201 = vmatpush1.msra.mxu0 0.0
    %1202 = vmatprep.mubr.f32.mxu0 0.0
    %1203 = vmatmul.mubr.f32.gmra.mrb[0].mxu0 %v1066
    %v1204 = vpop.f32.mrb[0].mxu0
    %v1205 = vadd.f32 %v724, %v1204
    %v1206 = vpop.f32.mrb[0].mxu0
    %1207 = vdwg.mxu0
    %v1208 = vadd.f32 %v589, %v1134
    %v1209 = vxor.u32 %v1208, 2147483648
    %v1210 = vmul.f32 %v1209, 1.442695
    %v1211 = vpow.pop %v1210
    %v1212 = vadd.f32 %v1211, 1.0
    %v1213 = vrcp.pop %v1212
    %v1214 = vmul.f32 1.0, %v1213
    %v1215 = vadd.f32 %v591, %v1136
    %v1216 = vxor.u32 %v1215, 2147483648
    %v1217 = vmul.f32 %v1216, 1.442695
    %v1218 = vpow.pop %v1217
    %v1219 = vadd.f32 %v1218, 1.0
    %v1220 = vrcp.pop %v1219
    %v1221 = vmul.f32 1.0, %v1220
    %v1222 = vmul.f32 %v1214, %v1205
    %v1223 = vadd.f32 %v688, %v1222
    %v1224 = vtanh.pop %v1223
    %v1225 = vsub.f32 1.0, %v1221
    %v1226 = vmul.f32 %v1225, %v1224
    %v1227 = vmul.f32 %v1221, %v1066
    %v1228 = vadd.f32 %v1226, %v1227
    %v1229 = vsub.f32 %v1228, %v1066
    %1231 = vset.pattern.permute.xlu0 0
    %1232 = vperm.xlu0 %1231, %v708
    %v1233 = vpop.permute.xlu0 %1232
    %v1235 = vmul.f32 %v1233, %v1229
    %v1236 = vadd.f32 %v1066, %v1235
    %1237 = vmatprep.subr.mxu0 %v195
    %1238 = vmatpush1.msra.mxu0 %v194
    %1239 = vmatprep.subr.mxu0 %v198
    %1240 = vmatpush1.msra.mxu0 %v197
    %1241 = vmatprep.subr.mxu0 %v201
    %1242 = vmatpush1.msra.mxu0 %v200
    %1243 = vmatprep.subr.mxu0 %v204
    %1244 = vmatpush1.msra.mxu0 %v203
    %1245 = vmatprep.subr.mxu0 %v207
    %1246 = vmatpush1.msra.mxu0 %v206
    %1247 = vmatprep.subr.mxu0 %v210
    %1248 = vmatpush1.msra.mxu0 %v209
    %1249 = vmatprep.subr.mxu0 %v213
    %1250 = vmatpush1.msra.mxu0 %v212
    %1251 = vmatprep.subr.mxu0 %v216
    %1252 = vmatpush1.msra.mxu0 %v215
    %1253 = vmatprep.subr.mxu0 %v219
    %1254 = vmatpush1.msra.mxu0 %v218
    %1255 = vmatprep.subr.mxu0 %v222
    %1256 = vmatpush1.msra.mxu0 %v221
    %1257 = vmatprep.subr.mxu0 %v225
    %1258 = vmatpush1.msra.mxu0 %v224
    %1259 = vmatprep.subr.mxu0 %v228
    %1260 = vmatpush1.msra.mxu0 %v227
    %1261 = vmatprep.subr.mxu0 %v231
    %1262 = vmatpush1.msra.mxu0 %v230
    %1263 = vmatprep.subr.mxu0 %v234
    %1264 = vmatpush1.msra.mxu0 %v233
    %1265 = vmatprep.subr.mxu0 %v237
    %1266 = vmatpush1.msra.mxu0 %v236
    %1267 = vmatprep.subr.mxu0 %v240
    %1268 = vmatpush1.msra.mxu0 %v239
    %1269 = vmatprep.subr.mxu0 0.0
    %1270 = vmatpush1.msra.mxu0 0.0
    %1271 = vmatprep.subr.mxu0 0.0
    %1272 = vmatpush1.msra.mxu0 0.0
    %1273 = vmatprep.subr.mxu0 0.0
    %1274 = vmatpush1.msra.mxu0 0.0
    %1275 = vmatprep.subr.mxu0 0.0
    %1276 = vmatpush1.msra.mxu0 0.0
    %1277 = vmatprep.subr.mxu0 0.0
    %1278 = vmatpush1.msra.mxu0 0.0
    %1279 = vmatprep.subr.mxu0 0.0
    %1280 = vmatpush1.msra.mxu0 0.0
    %1281 = vmatprep.subr.mxu0 0.0
    %1282 = vmatpush1.msra.mxu0 0.0
    %1283 = vmatprep.subr.mxu0 0.0
    %1284 = vmatpush1.msra.mxu0 0.0
    %1285 = vmatprep.subr.mxu0 0.0
    %1286 = vmatpush1.msra.mxu0 0.0
    %1287 = vmatprep.subr.mxu0 0.0
    %1288 = vmatpush1.msra.mxu0 0.0
    %1289 = vmatprep.subr.mxu0 0.0
    %1290 = vmatpush1.msra.mxu0 0.0
    %1291 = vmatprep.subr.mxu0 0.0
    %1292 = vmatpush1.msra.mxu0 0.0
    %1293 = vmatprep.subr.mxu0 0.0
    %1294 = vmatpush1.msra.mxu0 0.0
    %1295 = vmatprep.subr.mxu0 0.0
    %1296 = vmatpush1.msra.mxu0 0.0
    %1297 = vmatprep.subr.mxu0 0.0
    %1298 = vmatpush1.msra.mxu0 0.0
    %1299 = vmatprep.subr.mxu0 0.0
    %1300 = vmatpush1.msra.mxu0 0.0
    %1301 = vmatprep.mubr.f32.mxu0 0.0
    %1302 = vmatmul.mubr.f32.gmra.mrb[0].mxu0 %v1236
    %v1303 = vpop.f32.mrb[0].mxu0
    %v1304 = vadd.f32 %v716, %v1303
    %v1305 = vpop.f32.mrb[0].mxu0
    %v1306 = vadd.f32 %v720, %v1305
    %1307 = vdwg.mxu0
    %1308 = vmatprep.subr.mxu0 0.0
    %1309 = vmatpush1.msra.mxu0 %v196
    %1310 = vmatprep.subr.mxu0 0.0
    %1311 = vmatpush1.msra.mxu0 %v199
    %1312 = vmatprep.subr.mxu0 0.0
    %1313 = vmatpush1.msra.mxu0 %v202
    %1314 = vmatprep.subr.mxu0 0.0
    %1315 = vmatpush1.msra.mxu0 %v205
    %1316 = vmatprep.subr.mxu0 0.0
    %1317 = vmatpush1.msra.mxu0 %v208
    %1318 = vmatprep.subr.mxu0 0.0
    %1319 = vmatpush1.msra.mxu0 %v211
    %1320 = vmatprep.subr.mxu0 0.0
    %1321 = vmatpush1.msra.mxu0 %v214
    %1322 = vmatprep.subr.mxu0 0.0
    %1323 = vmatpush1.msra.mxu0 %v217
    %1324 = vmatprep.subr.mxu0 0.0
    %1325 = vmatpush1.msra.mxu0 %v220
    %1326 = vmatprep.subr.mxu0 0.0
    %1327 = vmatpush1.msra.mxu0 %v223
    %1328 = vmatprep.subr.mxu0 0.0
    %1329 = vmatpush1.msra.mxu0 %v226
    %1330 = vmatprep.subr.mxu0 0.0
    %1331 = vmatpush1.msra.mxu0 %v229
    %1332 = vmatprep.subr.mxu0 0.0
    %1333 = vmatpush1.msra.mxu0 %v232
    %1334 = vmatprep.subr.mxu0 0.0
    %1335 = vmatpush1.msra.mxu0 %v235
    %1336 = vmatprep.subr.mxu0 0.0
    %1337 = vmatpush1.msra.mxu0 %v238
    %1338 = vmatprep.subr.mxu0 0.0
    %1339 = vmatpush1.msra.mxu0 %v241
    %1340 = vmatprep.subr.mxu0 0.0
    %1341 = vmatpush1.msra.mxu0 0.0
    %1342 = vmatprep.subr.mxu0 0.0
    %1343 = vmatpush1.msra.mxu0 0.0
    %1344 = vmatprep.subr.mxu0 0.0
    %1345 = vmatpush1.msra.mxu0 0.0
    %1346 = vmatprep.subr.mxu0 0.0
    %1347 = vmatpush1.msra.mxu0 0.0
    %1348 = vmatprep.subr.mxu0 0.0
    %1349 = vmatpush1.msra.mxu0 0.0
    %1350 = vmatprep.subr.mxu0 0.0
    %1351 = vmatpush1.msra.mxu0 0.0
    %1352 = vmatprep.subr.mxu0 0.0
    %1353 = vmatpush1.msra.mxu0 0.0
    %1354 = vmatprep.subr.mxu0 0.0
    %1355 = vmatpush1.msra.mxu0 0.0
    %1356 = vmatprep.subr.mxu0 0.0
    %1357 = vmatpush1.msra.mxu0 0.0
    %1358 = vmatprep.subr.mxu0 0.0
    %1359 = vmatpush1.msra.mxu0 0.0
    %1360 = vmatprep.subr.mxu0 0.0
    %1361 = vmatpush1.msra.mxu0 0.0
    %1362 = vmatprep.subr.mxu0 0.0
    %1363 = vmatpush1.msra.mxu0 0.0
    %1364 = vmatprep.subr.mxu0 0.0
    %1365 = vmatpush1.msra.mxu0 0.0
    %1366 = vmatprep.subr.mxu0 0.0
    %1367 = vmatpush1.msra.mxu0 0.0
    %1368 = vmatprep.subr.mxu0 0.0
    %1369 = vmatpush1.msra.mxu0 0.0
    %1370 = vmatprep.subr.mxu0 0.0
    %1371 = vmatpush1.msra.mxu0 0.0
    %1372 = vmatprep.mubr.f32.mxu0 0.0
    %1373 = vmatmul.mubr.f32.gmra.mrb[0].mxu0 %v1236
    %v1374 = vpop.f32.mrb[0].mxu0
    %v1375 = vadd.f32 %v724, %v1374
    %v1376 = vpop.f32.mrb[0].mxu0
    %1377 = vdwg.mxu0
    %v1378 = vadd.f32 %v595, %v1304
    %v1379 = vxor.u32 %v1378, 2147483648
    %v1380 = vmul.f32 %v1379, 1.442695
    %v1381 = vpow.pop %v1380
    %v1382 = vadd.f32 %v1381, 1.0
    %v1383 = vrcp.pop %v1382
    %v1384 = vmul.f32 1.0, %v1383
    %v1385 = vadd.f32 %v597, %v1306
    %v1386 = vxor.u32 %v1385, 2147483648
    %v1387 = vmul.f32 %v1386, 1.442695
    %v1388 = vpow.pop %v1387
    %v1389 = vadd.f32 %v1388, 1.0
    %v1390 = vrcp.pop %v1389
    %v1391 = vmul.f32 1.0, %v1390
    %v1392 = vmul.f32 %v1384, %v1375
    %v1393 = vadd.f32 %v693, %v1392
    %v1394 = vtanh.pop %v1393
    %v1395 = vsub.f32 1.0, %v1391
    %v1396 = vmul.f32 %v1395, %v1394
    %v1397 = vmul.f32 %v1391, %v1236
    %v1398 = vadd.f32 %v1396, %v1397
    %v1399 = vsub.f32 %v1398, %v1236
    %1401 = vset.pattern.permute.xlu0 0
    %1402 = vperm.xlu0 %1401, %v709
    %v1403 = vpop.permute.xlu0 %1402
    %v1405 = vmul.f32 %v1403, %v1399
    %v1406 = vadd.f32 %v1236, %v1405
    %1407 = vmatprep.subr.mxu0 %v195
    %1408 = vmatpush1.msra.mxu0 %v194
    %1409 = vmatprep.subr.mxu0 %v198
    %1410 = vmatpush1.msra.mxu0 %v197
    %1411 = vmatprep.subr.mxu0 %v201
    %1412 = vmatpush1.msra.mxu0 %v200
    %1413 = vmatprep.subr.mxu0 %v204
    %1414 = vmatpush1.msra.mxu0 %v203
    %1415 = vmatprep.subr.mxu0 %v207
    %1416 = vmatpush1.msra.mxu0 %v206
    %1417 = vmatprep.subr.mxu0 %v210
    %1418 = vmatpush1.msra.mxu0 %v209
    %1419 = vmatprep.subr.mxu0 %v213
    %1420 = vmatpush1.msra.mxu0 %v212
    %1421 = vmatprep.subr.mxu0 %v216
    %1422 = vmatpush1.msra.mxu0 %v215
    %1423 = vmatprep.subr.mxu0 %v219
    %1424 = vmatpush1.msra.mxu0 %v218
    %1425 = vmatprep.subr.mxu0 %v222
    %1426 = vmatpush1.msra.mxu0 %v221
    %1427 = vmatprep.subr.mxu0 %v225
    %1428 = vmatpush1.msra.mxu0 %v224
    %1429 = vmatprep.subr.mxu0 %v228
    %1430 = vmatpush1.msra.mxu0 %v227
    %1431 = vmatprep.subr.mxu0 %v231
    %1432 = vmatpush1.msra.mxu0 %v230
    %1433 = vmatprep.subr.mxu0 %v234
    %1434 = vmatpush1.msra.mxu0 %v233
    %1435 = vmatprep.subr.mxu0 %v237
    %1436 = vmatpush1.msra.mxu0 %v236
    %1437 = vmatprep.subr.mxu0 %v240
    %1438 = vmatpush1.msra.mxu0 %v239
    %1439 = vmatprep.subr.mxu0 0.0
    %1440 = vmatpush1.msra.mxu0 0.0
    %1441 = vmatprep.subr.mxu0 0.0
    %1442 = vmatpush1.msra.mxu0 0.0
    %1443 = vmatprep.subr.mxu0 0.0
    %1444 = vmatpush1.msra.mxu0 0.0
    %1445 = vmatprep.subr.mxu0 0.0
    %1446 = vmatpush1.msra.mxu0 0.0
    %1447 = vmatprep.subr.mxu0 0.0
    %1448 = vmatpush1.msra.mxu0 0.0
    %1449 = vmatprep.subr.mxu0 0.0
    %1450 = vmatpush1.msra.mxu0 0.0
    %1451 = vmatprep.subr.mxu0 0.0
    %1452 = vmatpush1.msra.mxu0 0.0
    %1453 = vmatprep.subr.mxu0 0.0
    %1454 = vmatpush1.msra.mxu0 0.0
    %1455 = vmatprep.subr.mxu0 0.0
    %1456 = vmatpush1.msra.mxu0 0.0
    %1457 = vmatprep.subr.mxu0 0.0
    %1458 = vmatpush1.msra.mxu0 0.0
    %1459 = vmatprep.subr.mxu0 0.0
    %1460 = vmatpush1.msra.mxu0 0.0
    %1461 = vmatprep.subr.mxu0 0.0
    %1462 = vmatpush1.msra.mxu0 0.0
    %1463 = vmatprep.subr.mxu0 0.0
    %1464 = vmatpush1.msra.mxu0 0.0
    %1465 = vmatprep.subr.mxu0 0.0
    %1466 = vmatpush1.msra.mxu0 0.0
    %1467 = vmatprep.subr.mxu0 0.0
    %1468 = vmatpush1.msra.mxu0 0.0
    %1469 = vmatprep.subr.mxu0 0.0
    %1470 = vmatpush1.msra.mxu0 0.0
    %1471 = vmatprep.mubr.f32.mxu0 0.0
    %1472 = vmatmul.mubr.f32.gmra.mrb[0].mxu0 %v1406
    %v1473 = vpop.f32.mrb[0].mxu0
    %v1474 = vadd.f32 %v716, %v1473
    %v1475 = vpop.f32.mrb[0].mxu0
    %v1476 = vadd.f32 %v720, %v1475
    %1477 = vdwg.mxu0
    %1478 = vmatprep.subr.mxu0 0.0
    %1479 = vmatpush1.msra.mxu0 %v196
    %1480 = vmatprep.subr.mxu0 0.0
    %1481 = vmatpush1.msra.mxu0 %v199
    %1482 = vmatprep.subr.mxu0 0.0
    %1483 = vmatpush1.msra.mxu0 %v202
    %1484 = vmatprep.subr.mxu0 0.0
    %1485 = vmatpush1.msra.mxu0 %v205
    %1486 = vmatprep.subr.mxu0 0.0
    %1487 = vmatpush1.msra.mxu0 %v208
    %1488 = vmatprep.subr.mxu0 0.0
    %1489 = vmatpush1.msra.mxu0 %v211
    %1490 = vmatprep.subr.mxu0 0.0
    %1491 = vmatpush1.msra.mxu0 %v214
    %1492 = vmatprep.subr.mxu0 0.0
    %1493 = vmatpush1.msra.mxu0 %v217
    %1494 = vmatprep.subr.mxu0 0.0
    %1495 = vmatpush1.msra.mxu0 %v220
    %1496 = vmatprep.subr.mxu0 0.0
    %1497 = vmatpush1.msra.mxu0 %v223
    %1498 = vmatprep.subr.mxu0 0.0
    %1499 = vmatpush1.msra.mxu0 %v226
    %1500 = vmatprep.subr.mxu0 0.0
    %1501 = vmatpush1.msra.mxu0 %v229
    %1502 = vmatprep.subr.mxu0 0.0
    %1503 = vmatpush1.msra.mxu0 %v232
    %1504 = vmatprep.subr.mxu0 0.0
    %1505 = vmatpush1.msra.mxu0 %v235
    %1506 = vmatprep.subr.mxu0 0.0
    %1507 = vmatpush1.msra.mxu0 %v238
    %1508 = vmatprep.subr.mxu0 0.0
    %1509 = vmatpush1.msra.mxu0 %v241
    %1510 = vmatprep.subr.mxu0 0.0
    %1511 = vmatpush1.msra.mxu0 0.0
    %1512 = vmatprep.subr.mxu0 0.0
    %1513 = vmatpush1.msra.mxu0 0.0
    %1514 = vmatprep.subr.mxu0 0.0
    %1515 = vmatpush1.msra.mxu0 0.0
    %1516 = vmatprep.subr.mxu0 0.0
    %1517 = vmatpush1.msra.mxu0 0.0
    %1518 = vmatprep.subr.mxu0 0.0
    %1519 = vmatpush1.msra.mxu0 0.0
    %1520 = vmatprep.subr.mxu0 0.0
    %1521 = vmatpush1.msra.mxu0 0.0
    %1522 = vmatprep.subr.mxu0 0.0
    %1523 = vmatpush1.msra.mxu0 0.0
    %1524 = vmatprep.subr.mxu0 0.0
    %1525 = vmatpush1.msra.mxu0 0.0
    %1526 = vmatprep.subr.mxu0 0.0
    %1527 = vmatpush1.msra.mxu0 0.0
    %1528 = vmatprep.subr.mxu0 0.0
    %1529 = vmatpush1.msra.mxu0 0.0
    %1530 = vmatprep.subr.mxu0 0.0
    %1531 = vmatpush1.msra.mxu0 0.0
    %1532 = vmatprep.subr.mxu0 0.0
    %1533 = vmatpush1.msra.mxu0 0.0
    %1534 = vmatprep.subr.mxu0 0.0
    %1535 = vmatpush1.msra.mxu0 0.0
    %1536 = vmatprep.subr.mxu0 0.0
    %1537 = vmatpush1.msra.mxu0 0.0
    %1538 = vmatprep.subr.mxu0 0.0
    %1539 = vmatpush1.msra.mxu0 0.0
    %1540 = vmatprep.subr.mxu0 0.0
    %1541 = vmatpush1.msra.mxu0 0.0
    %1542 = vmatprep.mubr.f32.mxu0 0.0
    %1543 = vmatmul.mubr.f32.gmra.mrb[0].mxu0 %v1406
    %v1544 = vpop.f32.mrb[0].mxu0
    %v1545 = vadd.f32 %v724, %v1544
    %v1546 = vpop.f32.mrb[0].mxu0
    %1547 = vdwg.mxu0
    %v1548 = vadd.f32 %v601, %v1474
    %v1549 = vxor.u32 %v1548, 2147483648
    %v1550 = vmul.f32 %v1549, 1.442695
    %v1551 = vpow.pop %v1550
    %v1552 = vadd.f32 %v1551, 1.0
    %v1553 = vrcp.pop %v1552
    %v1554 = vmul.f32 1.0, %v1553
    %v1555 = vadd.f32 %v603, %v1476
    %v1556 = vxor.u32 %v1555, 2147483648
    %v1557 = vmul.f32 %v1556, 1.442695
    %v1558 = vpow.pop %v1557
    %v1559 = vadd.f32 %v1558, 1.0
    %v1560 = vrcp.pop %v1559
    %v1561 = vmul.f32 1.0, %v1560
    %v1562 = vmul.f32 %v1554, %v1545
    %v1563 = vadd.f32 %v698, %v1562
    %v1564 = vtanh.pop %v1563
    %v1565 = vsub.f32 1.0, %v1561
    %v1566 = vmul.f32 %v1565, %v1564
    %v1567 = vmul.f32 %v1561, %v1406
    %v1568 = vadd.f32 %v1566, %v1567
    %v1569 = vsub.f32 %v1568, %v1406
    %1571 = vset.pattern.permute.xlu0 0
    %1572 = vperm.xlu0 %1571, %v710
    %v1573 = vpop.permute.xlu0 %1572
    %v1575 = vmul.f32 %v1573, %v1569
    %v1576 = vadd.f32 %v1406, %v1575
    %1577 = vmatprep.subr.mxu0 %v195
    %1578 = vmatpush1.msra.mxu0 %v194
    %1579 = vmatprep.subr.mxu0 %v198
    %1580 = vmatpush1.msra.mxu0 %v197
    %1581 = vmatprep.subr.mxu0 %v201
    %1582 = vmatpush1.msra.mxu0 %v200
    %1583 = vmatprep.subr.mxu0 %v204
    %1584 = vmatpush1.msra.mxu0 %v203
    %1585 = vmatprep.subr.mxu0 %v207
    %1586 = vmatpush1.msra.mxu0 %v206
    %1587 = vmatprep.subr.mxu0 %v210
    %1588 = vmatpush1.msra.mxu0 %v209
    %1589 = vmatprep.subr.mxu0 %v213
    %1590 = vmatpush1.msra.mxu0 %v212
    %1591 = vmatprep.subr.mxu0 %v216
    %1592 = vmatpush1.msra.mxu0 %v215
    %1593 = vmatprep.subr.mxu0 %v219
    %1594 = vmatpush1.msra.mxu0 %v218
    %1595 = vmatprep.subr.mxu0 %v222
    %1596 = vmatpush1.msra.mxu0 %v221
    %1597 = vmatprep.subr.mxu0 %v225
    %1598 = vmatpush1.msra.mxu0 %v224
    %1599 = vmatprep.subr.mxu0 %v228
    %1600 = vmatpush1.msra.mxu0 %v227
    %1601 = vmatprep.subr.mxu0 %v231
    %1602 = vmatpush1.msra.mxu0 %v230
    %1603 = vmatprep.subr.mxu0 %v234
    %1604 = vmatpush1.msra.mxu0 %v233
    %1605 = vmatprep.subr.mxu0 %v237
    %1606 = vmatpush1.msra.mxu0 %v236
    %1607 = vmatprep.subr.mxu0 %v240
    %1608 = vmatpush1.msra.mxu0 %v239
    %1609 = vmatprep.subr.mxu0 0.0
    %1610 = vmatpush1.msra.mxu0 0.0
    %1611 = vmatprep.subr.mxu0 0.0
    %1612 = vmatpush1.msra.mxu0 0.0
    %1613 = vmatprep.subr.mxu0 0.0
    %1614 = vmatpush1.msra.mxu0 0.0
    %1615 = vmatprep.subr.mxu0 0.0
    %1616 = vmatpush1.msra.mxu0 0.0
    %1617 = vmatprep.subr.mxu0 0.0
    %1618 = vmatpush1.msra.mxu0 0.0
    %1619 = vmatprep.subr.mxu0 0.0
    %1620 = vmatpush1.msra.mxu0 0.0
    %1621 = vmatprep.subr.mxu0 0.0
    %1622 = vmatpush1.msra.mxu0 0.0
    %1623 = vmatprep.subr.mxu0 0.0
    %1624 = vmatpush1.msra.mxu0 0.0
    %1625 = vmatprep.subr.mxu0 0.0
    %1626 = vmatpush1.msra.mxu0 0.0
    %1627 = vmatprep.subr.mxu0 0.0
    %1628 = vmatpush1.msra.mxu0 0.0
    %1629 = vmatprep.subr.mxu0 0.0
    %1630 = vmatpush1.msra.mxu0 0.0
    %1631 = vmatprep.subr.mxu0 0.0
    %1632 = vmatpush1.msra.mxu0 0.0
    %1633 = vmatprep.subr.mxu0 0.0
    %1634 = vmatpush1.msra.mxu0 0.0
    %1635 = vmatprep.subr.mxu0 0.0
    %1636 = vmatpush1.msra.mxu0 0.0
    %1637 = vmatprep.subr.mxu0 0.0
    %1638 = vmatpush1.msra.mxu0 0.0
    %1639 = vmatprep.subr.mxu0 0.0
    %1640 = vmatpush1.msra.mxu0 0.0
    %1641 = vmatprep.mubr.f32.mxu0 0.0
    %1642 = vmatmul.mubr.f32.gmra.mrb[0].mxu0 %v1576
    %v1643 = vpop.f32.mrb[0].mxu0
    %v1644 = vadd.f32 %v716, %v1643
    %v1645 = vpop.f32.mrb[0].mxu0
    %v1646 = vadd.f32 %v720, %v1645
    %1647 = vdwg.mxu0
    %1648 = vmatprep.subr.mxu0 0.0
    %1649 = vmatpush1.msra.mxu0 %v196
    %1650 = vmatprep.subr.mxu0 0.0
    %1651 = vmatpush1.msra.mxu0 %v199
    %1652 = vmatprep.subr.mxu0 0.0
    %1653 = vmatpush1.msra.mxu0 %v202
    %1654 = vmatprep.subr.mxu0 0.0
    %1655 = vmatpush1.msra.mxu0 %v205
    %1656 = vmatprep.subr.mxu0 0.0
    %1657 = vmatpush1.msra.mxu0 %v208
    %1658 = vmatprep.subr.mxu0 0.0
    %1659 = vmatpush1.msra.mxu0 %v211
    %1660 = vmatprep.subr.mxu0 0.0
    %1661 = vmatpush1.msra.mxu0 %v214
    %1662 = vmatprep.subr.mxu0 0.0
    %1663 = vmatpush1.msra.mxu0 %v217
    %1664 = vmatprep.subr.mxu0 0.0
    %1665 = vmatpush1.msra.mxu0 %v220
    %1666 = vmatprep.subr.mxu0 0.0
    %1667 = vmatpush1.msra.mxu0 %v223
    %1668 = vmatprep.subr.mxu0 0.0
    %1669 = vmatpush1.msra.mxu0 %v226
    %1670 = vmatprep.subr.mxu0 0.0
    %1671 = vmatpush1.msra.mxu0 %v229
    %1672 = vmatprep.subr.mxu0 0.0
    %1673 = vmatpush1.msra.mxu0 %v232
    %1674 = vmatprep.subr.mxu0 0.0
    %1675 = vmatpush1.msra.mxu0 %v235
    %1676 = vmatprep.subr.mxu0 0.0
    %1677 = vmatpush1.msra.mxu0 %v238
    %1678 = vmatprep.subr.mxu0 0.0
    %1679 = vmatpush1.msra.mxu0 %v241
    %1680 = vmatprep.subr.mxu0 0.0
    %1681 = vmatpush1.msra.mxu0 0.0
    %1682 = vmatprep.subr.mxu0 0.0
    %1683 = vmatpush1.msra.mxu0 0.0
    %1684 = vmatprep.subr.mxu0 0.0
    %1685 = vmatpush1.msra.mxu0 0.0
    %1686 = vmatprep.subr.mxu0 0.0
    %1687 = vmatpush1.msra.mxu0 0.0
    %1688 = vmatprep.subr.mxu0 0.0
    %1689 = vmatpush1.msra.mxu0 0.0
    %1690 = vmatprep.subr.mxu0 0.0
    %1691 = vmatpush1.msra.mxu0 0.0
    %1692 = vmatprep.subr.mxu0 0.0
    %1693 = vmatpush1.msra.mxu0 0.0
    %1694 = vmatprep.subr.mxu0 0.0
    %1695 = vmatpush1.msra.mxu0 0.0
    %1696 = vmatprep.subr.mxu0 0.0
    %1697 = vmatpush1.msra.mxu0 0.0
    %1698 = vmatprep.subr.mxu0 0.0
    %1699 = vmatpush1.msra.mxu0 0.0
    %1700 = vmatprep.subr.mxu0 0.0
    %1701 = vmatpush1.msra.mxu0 0.0
    %1702 = vmatprep.subr.mxu0 0.0
    %1703 = vmatpush1.msra.mxu0 0.0
    %1704 = vmatprep.subr.mxu0 0.0
    %1705 = vmatpush1.msra.mxu0 0.0
    %1706 = vmatprep.subr.mxu0 0.0
    %1707 = vmatpush1.msra.mxu0 0.0
    %1708 = vmatprep.subr.mxu0 0.0
    %1709 = vmatpush1.msra.mxu0 0.0
    %1710 = vmatprep.subr.mxu0 0.0
    %1711 = vmatpush1.msra.mxu0 0.0
    %1712 = vmatprep.mubr.f32.mxu0 0.0
    %1713 = vmatmul.mubr.f32.gmra.mrb[0].mxu0 %v1576
    %v1714 = vpop.f32.mrb[0].mxu0
    %v1715 = vadd.f32 %v724, %v1714
    %v1716 = vpop.f32.mrb[0].mxu0
    %1717 = vdwg.mxu0
    %v1718 = vadd.f32 %v607, %v1644
    %v1719 = vxor.u32 %v1718, 2147483648
    %v1720 = vmul.f32 %v1719, 1.442695
    %v1721 = vpow.pop %v1720
    %v1722 = vadd.f32 %v1721, 1.0
    %v1723 = vrcp.pop %v1722
    %v1724 = vmul.f32 1.0, %v1723
    %v1725 = vadd.f32 %v609, %v1646
    %v1726 = vxor.u32 %v1725, 2147483648
    %v1727 = vmul.f32 %v1726, 1.442695
    %v1728 = vpow.pop %v1727
    %v1729 = vadd.f32 %v1728, 1.0
    %v1730 = vrcp.pop %v1729
    %v1731 = vmul.f32 1.0, %v1730
    %v1732 = vmul.f32 %v1724, %v1715
    %v1733 = vadd.f32 %v703, %v1732
    %v1734 = vtanh.pop %v1733
    %v1735 = vsub.f32 1.0, %v1731
    %v1736 = vmul.f32 %v1735, %v1734
    %v1737 = vmul.f32 %v1731, %v1576
    %v1738 = vadd.f32 %v1736, %v1737
    %v1739 = vsub.f32 %v1738, %v1576
    %1741 = vset.pattern.permute.xlu0 0
    %1742 = vperm.xlu0 %1741, %v711
    %v1743 = vpop.permute.xlu0 %1742
    %v1745 = vmul.f32 %v1743, %v1739
    %v1746 = vadd.f32 %v1576, %v1745
    %v1747 = vld [vmem:[%s10] sm:$0xff]
    %v1748 = vld [vmem:[%s10 + $0x8] sm:$0xff]
    %v1749 = vld [vmem:[%s10 + $0x10] sm:$0xff]
    %v1750 = vld [vmem:[%s10 + $0x18] sm:$0xff]
    %v1751 = vld [vmem:[%s10 + $0x20] sm:$0xff]
    %v1752 = vld [vmem:[%s10 + $0x28] sm:$0xff]
    %v1753 = vld [vmem:[%s11] sm:$0xff]
    %v1754 = vld [vmem:[%s11 + $0x8] sm:$0xff]
    %v1755 = vld [vmem:[%s11 + $0x10] sm:$0xff]
    %v1756 = vld [vmem:[%s11 + $0x18] sm:$0xff]
    %v1757 = vld [vmem:[%s11 + $0x20] sm:$0xff]
    %v1758 = vld [vmem:[%s11 + $0x28] sm:$0xff]
    %v1759 = vld [vmem:[%s11 + $0x30] sm:$0xff]
    %v1760 = vld [vmem:[%s11 + $0x38] sm:$0xff]
    %v1761 = vld [vmem:[%s11 + $0x40] sm:$0xff]
    %v1762 = vld [vmem:[%s11 + $0x48] sm:$0xff]
    %v1763 = vld [vmem:[%s11 + $0x50] sm:$0xff]
    %v1764 = vld [vmem:[%s11 + $0x58] sm:$0xff]
    %v1765 = vld [vmem:[%s11 + $0x60] sm:$0xff]
    %v1766 = vld [vmem:[%s11 + $0x68] sm:$0xff]
    %v1767 = vld [vmem:[%s11 + $0x70] sm:$0xff]
    %v1768 = vld [vmem:[%s11 + $0x78] sm:$0xff]
    %v1769 = vld [vmem:[%s11 + $0x80] sm:$0xff]
    %v1770 = vld [vmem:[%s11 + $0x88] sm:$0xff]
    %v1771 = vld [vmem:[%s11 + $0x90] sm:$0xff]
    %v1772 = vld [vmem:[%s11 + $0x98] sm:$0xff]
    %v1773 = vld [vmem:[%s11 + $0xa0] sm:$0xff]
    %v1774 = vld [vmem:[%s11 + $0xa8] sm:$0xff]
    %v1775 = vld [vmem:[%s11 + $0xb0] sm:$0xff]
    %v1776 = vld [vmem:[%s11 + $0xb8] sm:$0xff]
    %v1777 = vld [vmem:[%s11 + $0xc0] sm:$0xff]
    %v1778 = vld [vmem:[%s11 + $0xc8] sm:$0xff]
    %v1779 = vld [vmem:[%s11 + $0xd0] sm:$0xff]
    %v1780 = vld [vmem:[%s11 + $0xd8] sm:$0xff]
    %v1781 = vld [vmem:[%s11 + $0xe0] sm:$0xff]
    %v1782 = vld [vmem:[%s11 + $0xe8] sm:$0xff]
    %v1783 = vld [vmem:[%s11 + $0xf0] sm:$0xff]
    %v1784 = vld [vmem:[%s11 + $0xf8] sm:$0xff]
    %v1785 = vld [vmem:[%s11 + $0x100] sm:$0xff]
    %v1786 = vld [vmem:[%s11 + $0x108] sm:$0xff]
    %v1787 = vld [vmem:[%s11 + $0x110] sm:$0xff]
    %v1788 = vld [vmem:[%s11 + $0x118] sm:$0xff]
    %v1789 = vld [vmem:[%s11 + $0x120] sm:$0xff]
    %v1790 = vld [vmem:[%s11 + $0x128] sm:$0xff]
    %v1791 = vld [vmem:[%s11 + $0x130] sm:$0xff]
    %v1792 = vld [vmem:[%s11 + $0x138] sm:$0xff]
    %v1793 = vld [vmem:[%s11 + $0x140] sm:$0xff]
    %v1794 = vld [vmem:[%s11 + $0x148] sm:$0xff]
    %v1795 = vld [vmem:[%s11 + $0x150] sm:$0xff]
    %v1796 = vld [vmem:[%s11 + $0x158] sm:$0xff]
    %v1797 = vld [vmem:[%s11 + $0x160] sm:$0xff]
    %v1798 = vld [vmem:[%s11 + $0x168] sm:$0xff]
    %v1799 = vld [vmem:[%s11 + $0x170] sm:$0xff]
    %v1800 = vld [vmem:[%s11 + $0x178] sm:$0xff]
    %v1801 = vld [vmem:[%s12] sm:$0x7]
    %v1802 = vld [vmem:[%s13] sm:$0x7]
    %1803 = vmatprep.subr.mxu0 %v1748
    %1804 = vmatpush1.msra.mxu0 %v1747
    %1805 = vmatprep.subr.mxu0 %v1751
    %1806 = vmatpush1.msra.mxu0 %v1750
    %1807 = vmatprep.subr.mxu0 0.0
    %1808 = vmatpush1.msra.mxu0 0.0
    %1809 = vmatprep.subr.mxu0 0.0
    %1810 = vmatpush1.msra.mxu0 0.0
    %1811 = vmatprep.subr.mxu0 0.0
    %1812 = vmatpush1.msra.mxu0 0.0
    %1813 = vmatprep.subr.mxu0 0.0
    %1814 = vmatpush1.msra.mxu0 0.0
    %1815 = vmatprep.subr.mxu0 0.0
    %1816 = vmatpush1.msra.mxu0 0.0
    %1817 = vmatprep.subr.mxu0 0.0
    %1818 = vmatpush1.msra.mxu0 0.0
    %1819 = vmatprep.subr.mxu0 0.0
    %1820 = vmatpush1.msra.mxu0 0.0
    %1821 = vmatprep.subr.mxu0 0.0
    %1822 = vmatpush1.msra.mxu0 0.0
    %1823 = vmatprep.subr.mxu0 0.0
    %1824 = vmatpush1.msra.mxu0 0.0
    %1825 = vmatprep.subr.mxu0 0.0
    %1826 = vmatpush1.msra.mxu0 0.0
    %1827 = vmatprep.subr.mxu0 0.0
    %1828 = vmatpush1.msra.mxu0 0.0
    %1829 = vmatprep.subr.mxu0 0.0
    %1830 = vmatpush1.msra.mxu0 0.0
    %1831 = vmatprep.subr.mxu0 0.0
    %1832 = vmatpush1.msra.mxu0 0.0
    %1833 = vmatprep.subr.mxu0 0.0
    %1834 = vmatpush1.msra.mxu0 0.0
    %1835 = vmatprep.subr.mxu0 0.0
    %1836 = vmatpush1.msra.mxu0 0.0
    %1837 = vmatprep.subr.mxu0 0.0
    %1838 = vmatpush1.msra.mxu0 0.0
    %1839 = vmatprep.subr.mxu0 0.0
    %1840 = vmatpush1.msra.mxu0 0.0
    %1841 = vmatprep.subr.mxu0 0.0
    %1842 = vmatpush1.msra.mxu0 0.0
    %1843 = vmatprep.subr.mxu0 0.0
    %1844 = vmatpush1.msra.mxu0 0.0
    %1845 = vmatprep.subr.mxu0 0.0
    %1846 = vmatpush1.msra.mxu0 0.0
    %1847 = vmatprep.subr.mxu0 0.0
    %1848 = vmatpush1.msra.mxu0 0.0
    %1849 = vmatprep.subr.mxu0 0.0
    %1850 = vmatpush1.msra.mxu0 0.0
    %1851 = vmatprep.subr.mxu0 0.0
    %1852 = vmatpush1.msra.mxu0 0.0
    %1853 = vmatprep.subr.mxu0 0.0
    %1854 = vmatpush1.msra.mxu0 0.0
    %1855 = vmatprep.subr.mxu0 0.0
    %1856 = vmatpush1.msra.mxu0 0.0
    %1857 = vmatprep.subr.mxu0 0.0
    %1858 = vmatpush1.msra.mxu0 0.0
    %1859 = vmatprep.subr.mxu0 0.0
    %1860 = vmatpush1.msra.mxu0 0.0
    %1861 = vmatprep.subr.mxu0 0.0
    %1862 = vmatpush1.msra.mxu0 0.0
    %1863 = vmatprep.subr.mxu0 0.0
    %1864 = vmatpush1.msra.mxu0 0.0
    %1865 = vmatprep.subr.mxu0 0.0
    %1866 = vmatpush1.msra.mxu0 0.0
    %1867 = vmatprep.mubr.f32.mxu0 0.0
    %1868 = vmatmul.mubr.f32.gmra.mrb[0].mxu0 %v246
    %v1869 = vpop.f32.mrb[0].mxu0
    %v1870 = vadd.f32 0.0, %v1869
    %v1871 = vpop.f32.mrb[0].mxu0
    %v1872 = vadd.f32 0.0, %v1871
    %1873 = vmatprep.mubr.f32.mxu0 0.0
    %1874 = vmatmul.mubr.f32.gmra.mrb[0].mxu0 %v249
    %v1875 = vpop.f32.mrb[0].mxu0
    %v1876 = vadd.f32 0.0, %v1875
    %v1877 = vpop.f32.mrb[0].mxu0
    %v1878 = vadd.f32 0.0, %v1877
    %1879 = vmatprep.mubr.f32.mxu0 0.0
    %1880 = vmatmul.mubr.f32.gmra.mrb[0].mxu0 %v252
    %v1881 = vpop.f32.mrb[0].mxu0
    %v1882 = vadd.f32 0.0, %v1881
    %v1883 = vpop.f32.mrb[0].mxu0
    %v1884 = vadd.f32 0.0, %v1883
    %1885 = vmatprep.mubr.f32.mxu0 0.0
    %1886 = vmatmul.mubr.f32.gmra.mrb[0].mxu0 %v255
    %v1887 = vpop.f32.mrb[0].mxu0
    %v1888 = vadd.f32 0.0, %v1887
    %v1889 = vpop.f32.mrb[0].mxu0
    %v1890 = vadd.f32 0.0, %v1889
    %1891 = vdwg.mxu0
    %1892 = vmatprep.subr.mxu0 0.0
    %1893 = vmatpush1.msra.mxu0 %v1749
    %1894 = vmatprep.subr.mxu0 0.0
    %1895 = vmatpush1.msra.mxu0 %v1752
    %1896 = vmatprep.subr.mxu0 0.0
    %1897 = vmatpush1.msra.mxu0 0.0
    %1898 = vmatprep.subr.mxu0 0.0
    %1899 = vmatpush1.msra.mxu0 0.0
    %1900 = vmatprep.subr.mxu0 0.0
    %1901 = vmatpush1.msra.mxu0 0.0
    %1902 = vmatprep.subr.mxu0 0.0
    %1903 = vmatpush1.msra.mxu0 0.0
    %1904 = vmatprep.subr.mxu0 0.0
    %1905 = vmatpush1.msra.mxu0 0.0
    %1906 = vmatprep.subr.mxu0 0.0
    %1907 = vmatpush1.msra.mxu0 0.0
    %1908 = vmatprep.subr.mxu0 0.0
    %1909 = vmatpush1.msra.mxu0 0.0
    %1910 = vmatprep.subr.mxu0 0.0
    %1911 = vmatpush1.msra.mxu0 0.0
    %1912 = vmatprep.subr.mxu0 0.0
    %1913 = vmatpush1.msra.mxu0 0.0
    %1914 = vmatprep.subr.mxu0 0.0
    %1915 = vmatpush1.msra.mxu0 0.0
    %1916 = vmatprep.subr.mxu0 0.0
    %1917 = vmatpush1.msra.mxu0 0.0
    %1918 = vmatprep.subr.mxu0 0.0
    %1919 = vmatpush1.msra.mxu0 0.0
    %1920 = vmatprep.subr.mxu0 0.0
    %1921 = vmatpush1.msra.mxu0 0.0
    %1922 = vmatprep.subr.mxu0 0.0
    %1923 = vmatpush1.msra.mxu0 0.0
    %1924 = vmatprep.subr.mxu0 0.0
    %1925 = vmatpush1.msra.mxu0 0.0
    %1926 = vmatprep.subr.mxu0 0.0
    %1927 = vmatpush1.msra.mxu0 0.0
    %1928 = vmatprep.subr.mxu0 0.0
    %1929 = vmatpush1.msra.mxu0 0.0
    %1930 = vmatprep.subr.mxu0 0.0
    %1931 = vmatpush1.msra.mxu0 0.0
    %1932 = vmatprep.subr.mxu0 0.0
    %1933 = vmatpush1.msra.mxu0 0.0
    %1934 = vmatprep.subr.mxu0 0.0
    %1935 = vmatpush1.msra.mxu0 0.0
    %1936 = vmatprep.subr.mxu0 0.0
    %1937 = vmatpush1.msra.mxu0 0.0
    %1938 = vmatprep.subr.mxu0 0.0
    %1939 = vmatpush1.msra.mxu0 0.0
    %1940 = vmatprep.subr.mxu0 0.0
    %1941 = vmatpush1.msra.mxu0 0.0
    %1942 = vmatprep.subr.mxu0 0.0
    %1943 = vmatpush1.msra.mxu0 0.0
    %1944 = vmatprep.subr.mxu0 0.0
    %1945 = vmatpush1.msra.mxu0 0.0
    %1946 = vmatprep.subr.mxu0 0.0
    %1947 = vmatpush1.msra.mxu0 0.0
    %1948 = vmatprep.subr.mxu0 0.0
    %1949 = vmatpush1.msra.mxu0 0.0
    %1950 = vmatprep.subr.mxu0 0.0
    %1951 = vmatpush1.msra.mxu0 0.0
    %1952 = vmatprep.subr.mxu0 0.0
    %1953 = vmatpush1.msra.mxu0 0.0
    %1954 = vmatprep.subr.mxu0 0.0
    %1955 = vmatpush1.msra.mxu0 0.0
    %1956 = vmatprep.mubr.f32.mxu0 0.0
    %1957 = vmatmul.mubr.f32.gmra.mrb[0].mxu0 %v246
    %v1958 = vpop.f32.mrb[0].mxu0
    %v1959 = vadd.f32 0.0, %v1958
    %v1960 = vpop.f32.mrb[0].mxu0
    %1961 = vmatprep.mubr.f32.mxu0 0.0
    %1962 = vmatmul.mubr.f32.gmra.mrb[0].mxu0 %v249
    %v1963 = vpop.f32.mrb[0].mxu0
    %v1964 = vadd.f32 0.0, %v1963
    %v1965 = vpop.f32.mrb[0].mxu0
    %1966 = vmatprep.mubr.f32.mxu0 0.0
    %1967 = vmatmul.mubr.f32.gmra.mrb[0].mxu0 %v252
    %v1968 = vpop.f32.mrb[0].mxu0
    %v1969 = vadd.f32 0.0, %v1968
    %v1970 = vpop.f32.mrb[0].mxu0
    %1971 = vmatprep.mubr.f32.mxu0 0.0
    %1972 = vmatmul.mubr.f32.gmra.mrb[0].mxu0 %v255
    %v1973 = vpop.f32.mrb[0].mxu0
    %v1974 = vadd.f32 0.0, %v1973
    %v1975 = vpop.f32.mrb[0].mxu0
    %1976 = vdwg.mxu0
    %v1977 = vld [vmem:[%s2] sm:$0xff]
    %v1978 = vld [vmem:[%s2 + $0x8] sm:$0xff]
    %v1979 = vld [vmem:[%s2 + $0x10] sm:$0xff]
    %v1980 = vld [vmem:[%s2 + $0x18] sm:$0xff]
    %v1981 = vld [vmem:[%s2 + $0x20] sm:$0xff]
    %1982 = vset.pattern.permute.xlu0 0
    %1983 = vperm.xlu0 %1982, %v1977
    %v1984 = vpop.permute.xlu0 %1983
    %1985 = vset.pattern.permute.xlu0 0
    %1986 = vperm.xlu0 %1985, %v1978
    %v1987 = vpop.permute.xlu0 %1986
    %1988 = vset.pattern.permute.xlu0 0
    %1989 = vperm.xlu0 %1988, %v1979
    %v1990 = vpop.permute.xlu0 %1989
    %1991 = vset.pattern.permute.xlu0 0
    %1992 = vperm.xlu0 %1991, %v1980
    %v1993 = vpop.permute.xlu0 %1992
    %1994 = vset.pattern.permute.xlu0 0
    %1995 = vperm.xlu0 %1994, %v1981
    %v1996 = vpop.permute.xlu0 %1995
    %vm1997 = vcmp.eq.s32.totalorder %v438, %v1984
    %vm1998 = vcmp.eq.s32.totalorder %v438, %v1987
    %vm1999 = vcmp.eq.s32.totalorder %v438, %v1990
    %vm2000 = vcmp.eq.s32.totalorder %v438, %v1993
    %vm2001 = vcmp.eq.s32.totalorder %v438, %v1996
    %v2002 = vsel %vm1997, 1, 0
    %v2003 = vsel %vm1998, 1, 0
    %v2004 = vsel %vm1999, 1, 0
    %v2005 = vsel %vm2000, 1, 0
    %v2006 = vsel %vm2001, 1, 0
    %v2007 = vcvt.s32.f32 %v2002
    %v2008 = vcvt.s32.f32 %v2003
    %v2009 = vcvt.s32.f32 %v2004
    %v2010 = vcvt.s32.f32 %v2005
    %v2011 = vcvt.s32.f32 %v2006
    %v2013 = vlaneseq
    %v2014 = vshrl.u32 %v2013, 7
    %v2015 = vsub.s32 0, %v2014
    %v2016 = vrot.slane %v1801, %v2015
    %v2017 = vlaneseq
    %v2018 = vshrl.u32 %v2017, 7
    %v2019 = vsub.s32 1, %v2018
    %v2020 = vrot.slane %v1801, %v2019
    %v2021 = vlaneseq
    %v2022 = vshrl.u32 %v2021, 7
    %v2023 = vsub.s32 2, %v2022
    %v2024 = vrot.slane %v1801, %v2023
    %v2029 = vsel %vm491, %v2007, 0
    %v2032 = vsel %vm491, %v2008, 0
    %v2035 = vsel %vm491, %v2009, 0
    %v2038 = vsel %vm491, %v2010, 0
    %v2041 = vsel %vm491, %v2011, 0
    %2043 = vmatprep.subr.mxu0 %v1872
    %2044 = vmatpush1.msra.mxu0 %v1870
    %2045 = vmatprep.subr.mxu0 %v1878
    %2046 = vmatpush1.msra.mxu0 %v1876
    %2047 = vmatprep.subr.mxu0 %v1884
    %2048 = vmatpush1.msra.mxu0 %v1882
    %2049 = vmatprep.subr.mxu0 %v1890
    %2050 = vmatpush1.msra.mxu0 %v1888
    %2051 = vmatprep.subr.mxu0 0.0
    %2052 = vmatpush1.msra.mxu0 0.0
    %2053 = vmatprep.subr.mxu0 0.0
    %2054 = vmatpush1.msra.mxu0 0.0
    %2055 = vmatprep.subr.mxu0 0.0
    %2056 = vmatpush1.msra.mxu0 0.0
    %2057 = vmatprep.subr.mxu0 0.0
    %2058 = vmatpush1.msra.mxu0 0.0
    %2059 = vmatprep.subr.mxu0 0.0
    %2060 = vmatpush1.msra.mxu0 0.0
    %2061 = vmatprep.subr.mxu0 0.0
    %2062 = vmatpush1.msra.mxu0 0.0
    %2063 = vmatprep.subr.mxu0 0.0
    %2064 = vmatpush1.msra.mxu0 0.0
    %2065 = vmatprep.subr.mxu0 0.0
    %2066 = vmatpush1.msra.mxu0 0.0
    %2067 = vmatprep.subr.mxu0 0.0
    %2068 = vmatpush1.msra.mxu0 0.0
    %2069 = vmatprep.subr.mxu0 0.0
    %2070 = vmatpush1.msra.mxu0 0.0
    %2071 = vmatprep.subr.mxu0 0.0
    %2072 = vmatpush1.msra.mxu0 0.0
    %2073 = vmatprep.subr.mxu0 0.0
    %2074 = vmatpush1.msra.mxu0 0.0
    %2075 = vmatprep.subr.mxu0 0.0
    %2076 = vmatpush1.msra.mxu0 0.0
    %2077 = vmatprep.subr.mxu0 0.0
    %2078 = vmatpush1.msra.mxu0 0.0
    %2079 = vmatprep.subr.mxu0 0.0
    %2080 = vmatpush1.msra.mxu0 0.0
    %2081 = vmatprep.subr.mxu0 0.0
    %2082 = vmatpush1.msra.mxu0 0.0
    %2083 = vmatprep.subr.mxu0 0.0
    %2084 = vmatpush1.msra.mxu0 0.0
    %2085 = vmatprep.subr.mxu0 0.0
    %2086 = vmatpush1.msra.mxu0 0.0
    %2087 = vmatprep.subr.mxu0 0.0
    %2088 = vmatpush1.msra.mxu0 0.0
    %2089 = vmatprep.subr.mxu0 0.0
    %2090 = vmatpush1.msra.mxu0 0.0
    %2091 = vmatprep.subr.mxu0 0.0
    %2092 = vmatpush1.msra.mxu0 0.0
    %2093 = vmatprep.subr.mxu0 0.0
    %2094 = vmatpush1.msra.mxu0 0.0
    %2095 = vmatprep.subr.mxu0 0.0
    %2096 = vmatpush1.msra.mxu0 0.0
    %2097 = vmatprep.subr.mxu0 0.0
    %2098 = vmatpush1.msra.mxu0 0.0
    %2099 = vmatprep.subr.mxu0 0.0
    %2100 = vmatpush1.msra.mxu0 0.0
    %2101 = vmatprep.subr.mxu0 0.0
    %2102 = vmatpush1.msra.mxu0 0.0
    %2103 = vmatprep.subr.mxu0 0.0
    %2104 = vmatpush1.msra.mxu0 0.0
    %2105 = vmatprep.subr.mxu0 0.0
    %2106 = vmatpush1.msra.mxu0 0.0
    %2107 = vmatprep.mubr.f32.mxu0 0.0
    %2108 = vmatmul.mubr.f32.gmra.mrb[0].mxu0 %v2029
    %v2109 = vpop.f32.mrb[0].mxu0
    %v2110 = vadd.f32 %v2016, %v2109
    %v2111 = vpop.f32.mrb[0].mxu0
    %v2112 = vadd.f32 %v2020, %v2111
    %2113 = vmatprep.mubr.f32.mxu0 0.0
    %2114 = vmatmul.mubr.f32.gmra.mrb[0].mxu0 %v2032
    %v2115 = vpop.f32.mrb[0].mxu0
    %v2116 = vadd.f32 %v2016, %v2115
    %v2117 = vpop.f32.mrb[0].mxu0
    %v2118 = vadd.f32 %v2020, %v2117
    %2119 = vmatprep.mubr.f32.mxu0 0.0
    %2120 = vmatmul.mubr.f32.gmra.mrb[0].mxu0 %v2035
    %v2121 = vpop.f32.mrb[0].mxu0
    %v2122 = vadd.f32 %v2016, %v2121
    %v2123 = vpop.f32.mrb[0].mxu0
    %v2124 = vadd.f32 %v2020, %v2123
    %2125 = vmatprep.mubr.f32.mxu0 0.0
    %2126 = vmatmul.mubr.f32.gmra.mrb[0].mxu0 %v2038
    %v2127 = vpop.f32.mrb[0].mxu0
    %v2128 = vadd.f32 %v2016, %v2127
    %v2129 = vpop.f32.mrb[0].mxu0
    %v2130 = vadd.f32 %v2020, %v2129
    %2131 = vmatprep.mubr.f32.mxu0 0.0
    %2132 = vmatmul.mubr.f32.gmra.mrb[0].mxu0 %v2041
    %v2133 = vpop.f32.mrb[0].mxu0
    %v2134 = vadd.f32 %v2016, %v2133
    %v2135 = vpop.f32.mrb[0].mxu0
    %v2136 = vadd.f32 %v2020, %v2135
    %2137 = vdwg.mxu0
    %2138 = vmatprep.subr.mxu0 0.0
    %2139 = vmatpush1.msra.mxu0 %v1959
    %2140 = vmatprep.subr.mxu0 0.0
    %2141 = vmatpush1.msra.mxu0 %v1964
    %2142 = vmatprep.subr.mxu0 0.0
    %2143 = vmatpush1.msra.mxu0 %v1969
    %2144 = vmatprep.subr.mxu0 0.0
    %2145 = vmatpush1.msra.mxu0 %v1974
    %2146 = vmatprep.subr.mxu0 0.0
    %2147 = vmatpush1.msra.mxu0 0.0
    %2148 = vmatprep.subr.mxu0 0.0
    %2149 = vmatpush1.msra.mxu0 0.0
    %2150 = vmatprep.subr.mxu0 0.0
    %2151 = vmatpush1.msra.mxu0 0.0
    %2152 = vmatprep.subr.mxu0 0.0
    %2153 = vmatpush1.msra.mxu0 0.0
    %2154 = vmatprep.subr.mxu0 0.0
    %2155 = vmatpush1.msra.mxu0 0.0
    %2156 = vmatprep.subr.mxu0 0.0
    %2157 = vmatpush1.msra.mxu0 0.0
    %2158 = vmatprep.subr.mxu0 0.0
    %2159 = vmatpush1.msra.mxu0 0.0
    %2160 = vmatprep.subr.mxu0 0.0
    %2161 = vmatpush1.msra.mxu0 0.0
    %2162 = vmatprep.subr.mxu0 0.0
    %2163 = vmatpush1.msra.mxu0 0.0
    %2164 = vmatprep.subr.mxu0 0.0
    %2165 = vmatpush1.msra.mxu0 0.0
    %2166 = vmatprep.subr.mxu0 0.0
    %2167 = vmatpush1.msra.mxu0 0.0
    %2168 = vmatprep.subr.mxu0 0.0
    %2169 = vmatpush1.msra.mxu0 0.0
    %2170 = vmatprep.subr.mxu0 0.0
    %2171 = vmatpush1.msra.mxu0 0.0
    %2172 = vmatprep.subr.mxu0 0.0
    %2173 = vmatpush1.msra.mxu0 0.0
    %2174 = vmatprep.subr.mxu0 0.0
    %2175 = vmatpush1.msra.mxu0 0.0
    %2176 = vmatprep.subr.mxu0 0.0
    %2177 = vmatpush1.msra.mxu0 0.0
    %2178 = vmatprep.subr.mxu0 0.0
    %2179 = vmatpush1.msra.mxu0 0.0
    %2180 = vmatprep.subr.mxu0 0.0
    %2181 = vmatpush1.msra.mxu0 0.0
    %2182 = vmatprep.subr.mxu0 0.0
    %2183 = vmatpush1.msra.mxu0 0.0
    %2184 = vmatprep.subr.mxu0 0.0
    %2185 = vmatpush1.msra.mxu0 0.0
    %2186 = vmatprep.subr.mxu0 0.0
    %2187 = vmatpush1.msra.mxu0 0.0
    %2188 = vmatprep.subr.mxu0 0.0
    %2189 = vmatpush1.msra.mxu0 0.0
    %2190 = vmatprep.subr.mxu0 0.0
    %2191 = vmatpush1.msra.mxu0 0.0
    %2192 = vmatprep.subr.mxu0 0.0
    %2193 = vmatpush1.msra.mxu0 0.0
    %2194 = vmatprep.subr.mxu0 0.0
    %2195 = vmatpush1.msra.mxu0 0.0
    %2196 = vmatprep.subr.mxu0 0.0
    %2197 = vmatpush1.msra.mxu0 0.0
    %2198 = vmatprep.subr.mxu0 0.0
    %2199 = vmatpush1.msra.mxu0 0.0
    %2200 = vmatprep.subr.mxu0 0.0
    %2201 = vmatpush1.msra.mxu0 0.0
    %2202 = vmatprep.mubr.f32.mxu0 0.0
    %2203 = vmatmul.mubr.f32.gmra.mrb[0].mxu0 %v2029
    %v2204 = vpop.f32.mrb[0].mxu0
    %v2205 = vadd.f32 %v2024, %v2204
    %v2206 = vpop.f32.mrb[0].mxu0
    %2207 = vmatprep.mubr.f32.mxu0 0.0
    %2208 = vmatmul.mubr.f32.gmra.mrb[0].mxu0 %v2032
    %v2209 = vpop.f32.mrb[0].mxu0
    %v2210 = vadd.f32 %v2024, %v2209
    %v2211 = vpop.f32.mrb[0].mxu0
    %2212 = vmatprep.mubr.f32.mxu0 0.0
    %2213 = vmatmul.mubr.f32.gmra.mrb[0].mxu0 %v2035
    %v2214 = vpop.f32.mrb[0].mxu0
    %v2215 = vadd.f32 %v2024, %v2214
    %v2216 = vpop.f32.mrb[0].mxu0
    %2217 = vmatprep.mubr.f32.mxu0 0.0
    %2218 = vmatmul.mubr.f32.gmra.mrb[0].mxu0 %v2038
    %v2219 = vpop.f32.mrb[0].mxu0
    %v2220 = vadd.f32 %v2024, %v2219
    %v2221 = vpop.f32.mrb[0].mxu0
    %2222 = vmatprep.mubr.f32.mxu0 0.0
    %2223 = vmatmul.mubr.f32.gmra.mrb[0].mxu0 %v2041
    %v2224 = vpop.f32.mrb[0].mxu0
    %v2225 = vadd.f32 %v2024, %v2224
    %v2226 = vpop.f32.mrb[0].mxu0
    %2227 = vdwg.mxu0
    %v2228 = vld [vmem:[%s3] sm:$0xff]
    %v2229 = vld [vmem:[%s3 + $0x8] sm:$0xff]
    %v2230 = vld [vmem:[%s3 + $0x10] sm:$0xff]
    %v2231 = vld [vmem:[%s3 + $0x18] sm:$0xff]
    %v2232 = vld [vmem:[%s3 + $0x20] sm:$0xff]
    %v2234 = vlaneseq
    %v2235 = vshrl.u32 %v2234, 7
    %v2236 = vsub.s32 0, %v2235
    %v2237 = vrot.slane %v1802, %v2236
    %v2238 = vlaneseq
    %v2239 = vshrl.u32 %v2238, 7
    %v2240 = vsub.s32 1, %v2239
    %v2241 = vrot.slane %v1802, %v2240
    %v2242 = vlaneseq
    %v2243 = vshrl.u32 %v2242, 7
    %v2244 = vsub.s32 2, %v2243
    %v2245 = vrot.slane %v1802, %v2244
    %2249 = vmatprep.subr.mxu0 %v1754
    %2250 = vmatpush1.msra.mxu0 %v1753
    %2251 = vmatprep.subr.mxu0 %v1757
    %2252 = vmatpush1.msra.mxu0 %v1756
    %2253 = vmatprep.subr.mxu0 %v1760
    %2254 = vmatpush1.msra.mxu0 %v1759
    %2255 = vmatprep.subr.mxu0 %v1763
    %2256 = vmatpush1.msra.mxu0 %v1762
    %2257 = vmatprep.subr.mxu0 %v1766
    %2258 = vmatpush1.msra.mxu0 %v1765
    %2259 = vmatprep.subr.mxu0 %v1769
    %2260 = vmatpush1.msra.mxu0 %v1768
    %2261 = vmatprep.subr.mxu0 %v1772
    %2262 = vmatpush1.msra.mxu0 %v1771
    %2263 = vmatprep.subr.mxu0 %v1775
    %2264 = vmatpush1.msra.mxu0 %v1774
    %2265 = vmatprep.subr.mxu0 %v1778
    %2266 = vmatpush1.msra.mxu0 %v1777
    %2267 = vmatprep.subr.mxu0 %v1781
    %2268 = vmatpush1.msra.mxu0 %v1780
    %2269 = vmatprep.subr.mxu0 %v1784
    %2270 = vmatpush1.msra.mxu0 %v1783
    %2271 = vmatprep.subr.mxu0 %v1787
    %2272 = vmatpush1.msra.mxu0 %v1786
    %2273 = vmatprep.subr.mxu0 %v1790
    %2274 = vmatpush1.msra.mxu0 %v1789
    %2275 = vmatprep.subr.mxu0 %v1793
    %2276 = vmatpush1.msra.mxu0 %v1792
    %2277 = vmatprep.subr.mxu0 %v1796
    %2278 = vmatpush1.msra.mxu0 %v1795
    %2279 = vmatprep.subr.mxu0 %v1799
    %2280 = vmatpush1.msra.mxu0 %v1798
    %2281 = vmatprep.subr.mxu0 0.0
    %2282 = vmatpush1.msra.mxu0 0.0
    %2283 = vmatprep.subr.mxu0 0.0
    %2284 = vmatpush1.msra.mxu0 0.0
    %2285 = vmatprep.subr.mxu0 0.0
    %2286 = vmatpush1.msra.mxu0 0.0
    %2287 = vmatprep.subr.mxu0 0.0
    %2288 = vmatpush1.msra.mxu0 0.0
    %2289 = vmatprep.subr.mxu0 0.0
    %2290 = vmatpush1.msra.mxu0 0.0
    %2291 = vmatprep.subr.mxu0 0.0
    %2292 = vmatpush1.msra.mxu0 0.0
    %2293 = vmatprep.subr.mxu0 0.0
    %2294 = vmatpush1.msra.mxu0 0.0
    %2295 = vmatprep.subr.mxu0 0.0
    %2296 = vmatpush1.msra.mxu0 0.0
    %2297 = vmatprep.subr.mxu0 0.0
    %2298 = vmatpush1.msra.mxu0 0.0
    %2299 = vmatprep.subr.mxu0 0.0
    %2300 = vmatpush1.msra.mxu0 0.0
    %2301 = vmatprep.subr.mxu0 0.0
    %2302 = vmatpush1.msra.mxu0 0.0
    %2303 = vmatprep.subr.mxu0 0.0
    %2304 = vmatpush1.msra.mxu0 0.0
    %2305 = vmatprep.subr.mxu0 0.0
    %2306 = vmatpush1.msra.mxu0 0.0
    %2307 = vmatprep.subr.mxu0 0.0
    %2308 = vmatpush1.msra.mxu0 0.0
    %2309 = vmatprep.subr.mxu0 0.0
    %2310 = vmatpush1.msra.mxu0 0.0
    %2311 = vmatprep.subr.mxu0 0.0
    %2312 = vmatpush1.msra.mxu0 0.0
    %2313 = vmatprep.mubr.f32.mxu0 0.0
    %2314 = vmatmul.mubr.f32.gmra.mrb[0].mxu0 0.0
    %v2315 = vpop.f32.mrb[0].mxu0
    %v2316 = vadd.f32 %v2237, %v2315
    %v2317 = vpop.f32.mrb[0].mxu0
    %v2318 = vadd.f32 %v2241, %v2317
    %2319 = vdwg.mxu0
    %2320 = vmatprep.subr.mxu0 0.0
    %2321 = vmatpush1.msra.mxu0 %v1755
    %2322 = vmatprep.subr.mxu0 0.0
    %2323 = vmatpush1.msra.mxu0 %v1758
    %2324 = vmatprep.subr.mxu0 0.0
    %2325 = vmatpush1.msra.mxu0 %v1761
    %2326 = vmatprep.subr.mxu0 0.0
    %2327 = vmatpush1.msra.mxu0 %v1764
    %2328 = vmatprep.subr.mxu0 0.0
    %2329 = vmatpush1.msra.mxu0 %v1767
    %2330 = vmatprep.subr.mxu0 0.0
    %2331 = vmatpush1.msra.mxu0 %v1770
    %2332 = vmatprep.subr.mxu0 0.0
    %2333 = vmatpush1.msra.mxu0 %v1773
    %2334 = vmatprep.subr.mxu0 0.0
    %2335 = vmatpush1.msra.mxu0 %v1776
    %2336 = vmatprep.subr.mxu0 0.0
    %2337 = vmatpush1.msra.mxu0 %v1779
    %2338 = vmatprep.subr.mxu0 0.0
    %2339 = vmatpush1.msra.mxu0 %v1782
    %2340 = vmatprep.subr.mxu0 0.0
    %2341 = vmatpush1.msra.mxu0 %v1785
    %2342 = vmatprep.subr.mxu0 0.0
    %2343 = vmatpush1.msra.mxu0 %v1788
    %2344 = vmatprep.subr.mxu0 0.0
    %2345 = vmatpush1.msra.mxu0 %v1791
    %2346 = vmatprep.subr.mxu0 0.0
    %2347 = vmatpush1.msra.mxu0 %v1794
    %2348 = vmatprep.subr.mxu0 0.0
    %2349 = vmatpush1.msra.mxu0 %v1797
    %2350 = vmatprep.subr.mxu0 0.0
    %2351 = vmatpush1.msra.mxu0 %v1800
    %2352 = vmatprep.subr.mxu0 0.0
    %2353 = vmatpush1.msra.mxu0 0.0
    %2354 = vmatprep.subr.mxu0 0.0
    %2355 = vmatpush1.msra.mxu0 0.0
    %2356 = vmatprep.subr.mxu0 0.0
    %2357 = vmatpush1.msra.mxu0 0.0
    %2358 = vmatprep.subr.mxu0 0.0
    %2359 = vmatpush1.msra.mxu0 0.0
    %2360 = vmatprep.subr.mxu0 0.0
    %2361 = vmatpush1.msra.mxu0 0.0
    %2362 = vmatprep.subr.mxu0 0.0
    %2363 = vmatpush1.msra.mxu0 0.0
    %2364 = vmatprep.subr.mxu0 0.0
    %2365 = vmatpush1.msra.mxu0 0.0
    %2366 = vmatprep.subr.mxu0 0.0
    %2367 = vmatpush1.msra.mxu0 0.0
    %2368 = vmatprep.subr.mxu0 0.0
    %2369 = vmatpush1.msra.mxu0 0.0
    %2370 = vmatprep.subr.mxu0 0.0
    %2371 = vmatpush1.msra.mxu0 0.0
    %2372 = vmatprep.subr.mxu0 0.0
    %2373 = vmatpush1.msra.mxu0 0.0
    %2374 = vmatprep.subr.mxu0 0.0
    %2375 = vmatpush1.msra.mxu0 0.0
    %2376 = vmatprep.subr.mxu0 0.0
    %2377 = vmatpush1.msra.mxu0 0.0
    %2378 = vmatprep.subr.mxu0 0.0
    %2379 = vmatpush1.msra.mxu0 0.0
    %2380 = vmatprep.subr.mxu0 0.0
    %2381 = vmatpush1.msra.mxu0 0.0
    %2382 = vmatprep.subr.mxu0 0.0
    %2383 = vmatpush1.msra.mxu0 0.0
    %2384 = vmatprep.mubr.f32.mxu0 0.0
    %2385 = vmatmul.mubr.f32.gmra.mrb[0].mxu0 0.0
    %v2386 = vpop.f32.mrb[0].mxu0
    %v2387 = vadd.f32 %v2245, %v2386
    %v2388 = vpop.f32.mrb[0].mxu0
    %2389 = vdwg.mxu0
    %v2390 = vadd.f32 %v2110, %v2316
    %v2391 = vxor.u32 %v2390, 2147483648
    %v2392 = vmul.f32 %v2391, 1.442695
    %v2393 = vpow.pop %v2392
    %v2394 = vadd.f32 %v2393, 1.0
    %v2395 = vrcp.pop %v2394
    %v2396 = vmul.f32 1.0, %v2395
    %v2397 = vadd.f32 %v2112, %v2318
    %v2398 = vxor.u32 %v2397, 2147483648
    %v2399 = vmul.f32 %v2398, 1.442695
    %v2400 = vpow.pop %v2399
    %v2401 = vadd.f32 %v2400, 1.0
    %v2402 = vrcp.pop %v2401
    %v2403 = vmul.f32 1.0, %v2402
    %v2404 = vmul.f32 %v2396, %v2387
    %v2405 = vadd.f32 %v2205, %v2404
    %v2406 = vtanh.pop %v2405
    %v2407 = vsub.f32 1.0, %v2403
    %v2408 = vmul.f32 %v2407, %v2406
    %v2409 = vmul.f32 %v2403, 0.0
    %v2410 = vadd.f32 %v2408, %v2409
    %2412 = vset.pattern.permute.xlu0 0
    %2413 = vperm.xlu0 %2412, %v2228
    %v2414 = vpop.permute.xlu0 %2413
    %v2416 = vmul.f32 %v2414, %v2410
    %v2417 = vadd.f32 %v2416, 0.0
    %2418 = vmatprep.subr.mxu0 %v1754
    %2419 = vmatpush1.msra.mxu0 %v1753
    %2420 = vmatprep.subr.mxu0 %v1757
    %2421 = vmatpush1.msra.mxu0 %v1756
    %2422 = vmatprep.subr.mxu0 %v1760
    %2423 = vmatpush1.msra.mxu0 %v1759
    %2424 = vmatprep.subr.mxu0 %v1763
    %2425 = vmatpush1.msra.mxu0 %v1762
    %2426 = vmatprep.subr.mxu0 %v1766
    %2427 = vmatpush1.msra.mxu0 %v1765
    %2428 = vmatprep.subr.mxu0 %v1769
    %2429 = vmatpush1.msra.mxu0 %v1768
    %2430 = vmatprep.subr.mxu0 %v1772
    %2431 = vmatpush1.msra.mxu0 %v1771
    %2432 = vmatprep.subr.mxu0 %v1775
    %2433 = vmatpush1.msra.mxu0 %v1774
    %2434 = vmatprep.subr.mxu0 %v1778
    %2435 = vmatpush1.msra.mxu0 %v1777
    %2436 = vmatprep.subr.mxu0 %v1781
    %2437 = vmatpush1.msra.mxu0 %v1780
    %2438 = vmatprep.subr.mxu0 %v1784
    %2439 = vmatpush1.msra.mxu0 %v1783
    %2440 = vmatprep.subr.mxu0 %v1787
    %2441 = vmatpush1.msra.mxu0 %v1786
    %2442 = vmatprep.subr.mxu0 %v1790
    %2443 = vmatpush1.msra.mxu0 %v1789
    %2444 = vmatprep.subr.mxu0 %v1793
    %2445 = vmatpush1.msra.mxu0 %v1792
    %2446 = vmatprep.subr.mxu0 %v1796
    %2447 = vmatpush1.msra.mxu0 %v1795
    %2448 = vmatprep.subr.mxu0 %v1799
    %2449 = vmatpush1.msra.mxu0 %v1798
    %2450 = vmatprep.subr.mxu0 0.0
    %2451 = vmatpush1.msra.mxu0 0.0
    %2452 = vmatprep.subr.mxu0 0.0
    %2453 = vmatpush1.msra.mxu0 0.0
    %2454 = vmatprep.subr.mxu0 0.0
    %2455 = vmatpush1.msra.mxu0 0.0
    %2456 = vmatprep.subr.mxu0 0.0
    %2457 = vmatpush1.msra.mxu0 0.0
    %2458 = vmatprep.subr.mxu0 0.0
    %2459 = vmatpush1.msra.mxu0 0.0
    %2460 = vmatprep.subr.mxu0 0.0
    %2461 = vmatpush1.msra.mxu0 0.0
    %2462 = vmatprep.subr.mxu0 0.0
    %2463 = vmatpush1.msra.mxu0 0.0
    %2464 = vmatprep.subr.mxu0 0.0
    %2465 = vmatpush1.msra.mxu0 0.0
    %2466 = vmatprep.subr.mxu0 0.0
    %2467 = vmatpush1.msra.mxu0 0.0
    %2468 = vmatprep.subr.mxu0 0.0
    %2469 = vmatpush1.msra.mxu0 0.0
    %2470 = vmatprep.subr.mxu0 0.0
    %2471 = vmatpush1.msra.mxu0 0.0
    %2472 = vmatprep.subr.mxu0 0.0
    %2473 = vmatpush1.msra.mxu0 0.0
    %2474 = vmatprep.subr.mxu0 0.0
    %2475 = vmatpush1.msra.mxu0 0.0
    %2476 = vmatprep.subr.mxu0 0.0
    %2477 = vmatpush1.msra.mxu0 0.0
    %2478 = vmatprep.subr.mxu0 0.0
    %2479 = vmatpush1.msra.mxu0 0.0
    %2480 = vmatprep.subr.mxu0 0.0
    %2481 = vmatpush1.msra.mxu0 0.0
    %2482 = vmatprep.mubr.f32.mxu0 0.0
    %2483 = vmatmul.mubr.f32.gmra.mrb[0].mxu0 %v2417
    %v2484 = vpop.f32.mrb[0].mxu0
    %v2485 = vadd.f32 %v2237, %v2484
    %v2486 = vpop.f32.mrb[0].mxu0
    %v2487 = vadd.f32 %v2241, %v2486
    %2488 = vdwg.mxu0
    %2489 = vmatprep.subr.mxu0 0.0
    %2490 = vmatpush1.msra.mxu0 %v1755
    %2491 = vmatprep.subr.mxu0 0.0
    %2492 = vmatpush1.msra.mxu0 %v1758
    %2493 = vmatprep.subr.mxu0 0.0
    %2494 = vmatpush1.msra.mxu0 %v1761
    %2495 = vmatprep.subr.mxu0 0.0
    %2496 = vmatpush1.msra.mxu0 %v1764
    %2497 = vmatprep.subr.mxu0 0.0
    %2498 = vmatpush1.msra.mxu0 %v1767
    %2499 = vmatprep.subr.mxu0 0.0
    %2500 = vmatpush1.msra.mxu0 %v1770
    %2501 = vmatprep.subr.mxu0 0.0
    %2502 = vmatpush1.msra.mxu0 %v1773
    %2503 = vmatprep.subr.mxu0 0.0
    %2504 = vmatpush1.msra.mxu0 %v1776
    %2505 = vmatprep.subr.mxu0 0.0
    %2506 = vmatpush1.msra.mxu0 %v1779
    %2507 = vmatprep.subr.mxu0 0.0
    %2508 = vmatpush1.msra.mxu0 %v1782
    %2509 = vmatprep.subr.mxu0 0.0
    %2510 = vmatpush1.msra.mxu0 %v1785
    %2511 = vmatprep.subr.mxu0 0.0
    %2512 = vmatpush1.msra.mxu0 %v1788
    %2513 = vmatprep.subr.mxu0 0.0
    %2514 = vmatpush1.msra.mxu0 %v1791
    %2515 = vmatprep.subr.mxu0 0.0
    %2516 = vmatpush1.msra.mxu0 %v1794
    %2517 = vmatprep.subr.mxu0 0.0
    %2518 = vmatpush1.msra.mxu0 %v1797
    %2519 = vmatprep.subr.mxu0 0.0
    %2520 = vmatpush1.msra.mxu0 %v1800
    %2521 = vmatprep.subr.mxu0 0.0
    %2522 = vmatpush1.msra.mxu0 0.0
    %2523 = vmatprep.subr.mxu0 0.0
    %2524 = vmatpush1.msra.mxu0 0.0
    %2525 = vmatprep.subr.mxu0 0.0
    %2526 = vmatpush1.msra.mxu0 0.0
    %2527 = vmatprep.subr.mxu0 0.0
    %2528 = vmatpush1.msra.mxu0 0.0
    %2529 = vmatprep.subr.mxu0 0.0
    %2530 = vmatpush1.msra.mxu0 0.0
    %2531 = vmatprep.subr.mxu0 0.0
    %2532 = vmatpush1.msra.mxu0 0.0
    %2533 = vmatprep.subr.mxu0 0.0
    %2534 = vmatpush1.msra.mxu0 0.0
    %2535 = vmatprep.subr.mxu0 0.0
    %2536 = vmatpush1.msra.mxu0 0.0
    %2537 = vmatprep.subr.mxu0 0.0
    %2538 = vmatpush1.msra.mxu0 0.0
    %2539 = vmatprep.subr.mxu0 0.0
    %2540 = vmatpush1.msra.mxu0 0.0
    %2541 = vmatprep.subr.mxu0 0.0
    %2542 = vmatpush1.msra.mxu0 0.0
    %2543 = vmatprep.subr.mxu0 0.0
    %2544 = vmatpush1.msra.mxu0 0.0
    %2545 = vmatprep.subr.mxu0 0.0
    %2546 = vmatpush1.msra.mxu0 0.0
    %2547 = vmatprep.subr.mxu0 0.0
    %2548 = vmatpush1.msra.mxu0 0.0
    %2549 = vmatprep.subr.mxu0 0.0
    %2550 = vmatpush1.msra.mxu0 0.0
    %2551 = vmatprep.subr.mxu0 0.0
    %2552 = vmatpush1.msra.mxu0 0.0
    %2553 = vmatprep.mubr.f32.mxu0 0.0
    %2554 = vmatmul.mubr.f32.gmra.mrb[0].mxu0 %v2417
    %v2555 = vpop.f32.mrb[0].mxu0
    %v2556 = vadd.f32 %v2245, %v2555
    %v2557 = vpop.f32.mrb[0].mxu0
    %2558 = vdwg.mxu0
    %v2559 = vadd.f32 %v2116, %v2485
    %v2560 = vxor.u32 %v2559, 2147483648
    %v2561 = vmul.f32 %v2560, 1.442695
    %v2562 = vpow.pop %v2561
    %v2563 = vadd.f32 %v2562, 1.0
    %v2564 = vrcp.pop %v2563
    %v2565 = vmul.f32 1.0, %v2564
    %v2566 = vadd.f32 %v2118, %v2487
    %v2567 = vxor.u32 %v2566, 2147483648
    %v2568 = vmul.f32 %v2567, 1.442695
    %v2569 = vpow.pop %v2568
    %v2570 = vadd.f32 %v2569, 1.0
    %v2571 = vrcp.pop %v2570
    %v2572 = vmul.f32 1.0, %v2571
    %v2573 = vmul.f32 %v2565, %v2556
    %v2574 = vadd.f32 %v2210, %v2573
    %v2575 = vtanh.pop %v2574
    %v2576 = vsub.f32 1.0, %v2572
    %v2577 = vmul.f32 %v2576, %v2575
    %v2578 = vmul.f32 %v2572, %v2417
    %v2579 = vadd.f32 %v2577, %v2578
    %v2580 = vsub.f32 %v2579, %v2417
    %2582 = vset.pattern.permute.xlu0 0
    %2583 = vperm.xlu0 %2582, %v2229
    %v2584 = vpop.permute.xlu0 %2583
    %v2586 = vmul.f32 %v2584, %v2580
    %v2587 = vadd.f32 %v2417, %v2586
    %2588 = vmatprep.subr.mxu0 %v1754
    %2589 = vmatpush1.msra.mxu0 %v1753
    %2590 = vmatprep.subr.mxu0 %v1757
    %2591 = vmatpush1.msra.mxu0 %v1756
    %2592 = vmatprep.subr.mxu0 %v1760
    %2593 = vmatpush1.msra.mxu0 %v1759
    %2594 = vmatprep.subr.mxu0 %v1763
    %2595 = vmatpush1.msra.mxu0 %v1762
    %2596 = vmatprep.subr.mxu0 %v1766
    %2597 = vmatpush1.msra.mxu0 %v1765
    %2598 = vmatprep.subr.mxu0 %v1769
    %2599 = vmatpush1.msra.mxu0 %v1768
    %2600 = vmatprep.subr.mxu0 %v1772
    %2601 = vmatpush1.msra.mxu0 %v1771
    %2602 = vmatprep.subr.mxu0 %v1775
    %2603 = vmatpush1.msra.mxu0 %v1774
    %2604 = vmatprep.subr.mxu0 %v1778
    %2605 = vmatpush1.msra.mxu0 %v1777
    %2606 = vmatprep.subr.mxu0 %v1781
    %2607 = vmatpush1.msra.mxu0 %v1780
    %2608 = vmatprep.subr.mxu0 %v1784
    %2609 = vmatpush1.msra.mxu0 %v1783
    %2610 = vmatprep.subr.mxu0 %v1787
    %2611 = vmatpush1.msra.mxu0 %v1786
    %2612 = vmatprep.subr.mxu0 %v1790
    %2613 = vmatpush1.msra.mxu0 %v1789
    %2614 = vmatprep.subr.mxu0 %v1793
    %2615 = vmatpush1.msra.mxu0 %v1792
    %2616 = vmatprep.subr.mxu0 %v1796
    %2617 = vmatpush1.msra.mxu0 %v1795
    %2618 = vmatprep.subr.mxu0 %v1799
    %2619 = vmatpush1.msra.mxu0 %v1798
    %2620 = vmatprep.subr.mxu0 0.0
    %2621 = vmatpush1.msra.mxu0 0.0
    %2622 = vmatprep.subr.mxu0 0.0
    %2623 = vmatpush1.msra.mxu0 0.0
    %2624 = vmatprep.subr.mxu0 0.0
    %2625 = vmatpush1.msra.mxu0 0.0
    %2626 = vmatprep.subr.mxu0 0.0
    %2627 = vmatpush1.msra.mxu0 0.0
    %2628 = vmatprep.subr.mxu0 0.0
    %2629 = vmatpush1.msra.mxu0 0.0
    %2630 = vmatprep.subr.mxu0 0.0
    %2631 = vmatpush1.msra.mxu0 0.0
    %2632 = vmatprep.subr.mxu0 0.0
    %2633 = vmatpush1.msra.mxu0 0.0
    %2634 = vmatprep.subr.mxu0 0.0
    %2635 = vmatpush1.msra.mxu0 0.0
    %2636 = vmatprep.subr.mxu0 0.0
    %2637 = vmatpush1.msra.mxu0 0.0
    %2638 = vmatprep.subr.mxu0 0.0
    %2639 = vmatpush1.msra.mxu0 0.0
    %2640 = vmatprep.subr.mxu0 0.0
    %2641 = vmatpush1.msra.mxu0 0.0
    %2642 = vmatprep.subr.mxu0 0.0
    %2643 = vmatpush1.msra.mxu0 0.0
    %2644 = vmatprep.subr.mxu0 0.0
    %2645 = vmatpush1.msra.mxu0 0.0
    %2646 = vmatprep.subr.mxu0 0.0
    %2647 = vmatpush1.msra.mxu0 0.0
    %2648 = vmatprep.subr.mxu0 0.0
    %2649 = vmatpush1.msra.mxu0 0.0
    %2650 = vmatprep.subr.mxu0 0.0
    %2651 = vmatpush1.msra.mxu0 0.0
    %2652 = vmatprep.mubr.f32.mxu0 0.0
    %2653 = vmatmul.mubr.f32.gmra.mrb[0].mxu0 %v2587
    %v2654 = vpop.f32.mrb[0].mxu0
    %v2655 = vadd.f32 %v2237, %v2654
    %v2656 = vpop.f32.mrb[0].mxu0
    %v2657 = vadd.f32 %v2241, %v2656
    %2658 = vdwg.mxu0
    %2659 = vmatprep.subr.mxu0 0.0
    %2660 = vmatpush1.msra.mxu0 %v1755
    %2661 = vmatprep.subr.mxu0 0.0
    %2662 = vmatpush1.msra.mxu0 %v1758
    %2663 = vmatprep.subr.mxu0 0.0
    %2664 = vmatpush1.msra.mxu0 %v1761
    %2665 = vmatprep.subr.mxu0 0.0
    %2666 = vmatpush1.msra.mxu0 %v1764
    %2667 = vmatprep.subr.mxu0 0.0
    %2668 = vmatpush1.msra.mxu0 %v1767
    %2669 = vmatprep.subr.mxu0 0.0
    %2670 = vmatpush1.msra.mxu0 %v1770
    %2671 = vmatprep.subr.mxu0 0.0
    %2672 = vmatpush1.msra.mxu0 %v1773
    %2673 = vmatprep.subr.mxu0 0.0
    %2674 = vmatpush1.msra.mxu0 %v1776
    %2675 = vmatprep.subr.mxu0 0.0
    %2676 = vmatpush1.msra.mxu0 %v1779
    %2677 = vmatprep.subr.mxu0 0.0
    %2678 = vmatpush1.msra.mxu0 %v1782
    %2679 = vmatprep.subr.mxu0 0.0
    %2680 = vmatpush1.msra.mxu0 %v1785
    %2681 = vmatprep.subr.mxu0 0.0
    %2682 = vmatpush1.msra.mxu0 %v1788
    %2683 = vmatprep.subr.mxu0 0.0
    %2684 = vmatpush1.msra.mxu0 %v1791
    %2685 = vmatprep.subr.mxu0 0.0
    %2686 = vmatpush1.msra.mxu0 %v1794
    %2687 = vmatprep.subr.mxu0 0.0
    %2688 = vmatpush1.msra.mxu0 %v1797
    %2689 = vmatprep.subr.mxu0 0.0
    %2690 = vmatpush1.msra.mxu0 %v1800
    %2691 = vmatprep.subr.mxu0 0.0
    %2692 = vmatpush1.msra.mxu0 0.0
    %2693 = vmatprep.subr.mxu0 0.0
    %2694 = vmatpush1.msra.mxu0 0.0
    %2695 = vmatprep.subr.mxu0 0.0
    %2696 = vmatpush1.msra.mxu0 0.0
    %2697 = vmatprep.subr.mxu0 0.0
    %2698 = vmatpush1.msra.mxu0 0.0
    %2699 = vmatprep.subr.mxu0 0.0
    %2700 = vmatpush1.msra.mxu0 0.0
    %2701 = vmatprep.subr.mxu0 0.0
    %2702 = vmatpush1.msra.mxu0 0.0
    %2703 = vmatprep.subr.mxu0 0.0
    %2704 = vmatpush1.msra.mxu0 0.0
    %2705 = vmatprep.subr.mxu0 0.0
    %2706 = vmatpush1.msra.mxu0 0.0
    %2707 = vmatprep.subr.mxu0 0.0
    %2708 = vmatpush1.msra.mxu0 0.0
    %2709 = vmatprep.subr.mxu0 0.0
    %2710 = vmatpush1.msra.mxu0 0.0
    %2711 = vmatprep.subr.mxu0 0.0
    %2712 = vmatpush1.msra.mxu0 0.0
    %2713 = vmatprep.subr.mxu0 0.0
    %2714 = vmatpush1.msra.mxu0 0.0
    %2715 = vmatprep.subr.mxu0 0.0
    %2716 = vmatpush1.msra.mxu0 0.0
    %2717 = vmatprep.subr.mxu0 0.0
    %2718 = vmatpush1.msra.mxu0 0.0
    %2719 = vmatprep.subr.mxu0 0.0
    %2720 = vmatpush1.msra.mxu0 0.0
    %2721 = vmatprep.subr.mxu0 0.0
    %2722 = vmatpush1.msra.mxu0 0.0
    %2723 = vmatprep.mubr.f32.mxu0 0.0
    %2724 = vmatmul.mubr.f32.gmra.mrb[0].mxu0 %v2587
    %v2725 = vpop.f32.mrb[0].mxu0
    %v2726 = vadd.f32 %v2245, %v2725
    %v2727 = vpop.f32.mrb[0].mxu0
    %2728 = vdwg.mxu0
    %v2729 = vadd.f32 %v2122, %v2655
    %v2730 = vxor.u32 %v2729, 2147483648
    %v2731 = vmul.f32 %v2730, 1.442695
    %v2732 = vpow.pop %v2731
    %v2733 = vadd.f32 %v2732, 1.0
    %v2734 = vrcp.pop %v2733
    %v2735 = vmul.f32 1.0, %v2734
    %v2736 = vadd.f32 %v2124, %v2657
    %v2737 = vxor.u32 %v2736, 2147483648
    %v2738 = vmul.f32 %v2737, 1.442695
    %v2739 = vpow.pop %v2738
    %v2740 = vadd.f32 %v2739, 1.0
    %v2741 = vrcp.pop %v2740
    %v2742 = vmul.f32 1.0, %v2741
    %v2743 = vmul.f32 %v2735, %v2726
    %v2744 = vadd.f32 %v2215, %v2743
    %v2745 = vtanh.pop %v2744
    %v2746 = vsub.f32 1.0, %v2742
    %v2747 = vmul.f32 %v2746, %v2745
    %v2748 = vmul.f32 %v2742, %v2587
    %v2749 = vadd.f32 %v2747, %v2748
    %v2750 = vsub.f32 %v2749, %v2587
    %2752 = vset.pattern.permute.xlu0 0
    %2753 = vperm.xlu0 %2752, %v2230
    %v2754 = vpop.permute.xlu0 %2753
    %v2756 = vmul.f32 %v2754, %v2750
    %v2757 = vadd.f32 %v2587, %v2756
    %2758 = vmatprep.subr.mxu0 %v1754
    %2759 = vmatpush1.msra.mxu0 %v1753
    %2760 = vmatprep.subr.mxu0 %v1757
    %2761 = vmatpush1.msra.mxu0 %v1756
    %2762 = vmatprep.subr.mxu0 %v1760
    %2763 = vmatpush1.msra.mxu0 %v1759
    %2764 = vmatprep.subr.mxu0 %v1763
    %2765 = vmatpush1.msra.mxu0 %v1762
    %2766 = vmatprep.subr.mxu0 %v1766
    %2767 = vmatpush1.msra.mxu0 %v1765
    %2768 = vmatprep.subr.mxu0 %v1769
    %2769 = vmatpush1.msra.mxu0 %v1768
    %2770 = vmatprep.subr.mxu0 %v1772
    %2771 = vmatpush1.msra.mxu0 %v1771
    %2772 = vmatprep.subr.mxu0 %v1775
    %2773 = vmatpush1.msra.mxu0 %v1774
    %2774 = vmatprep.subr.mxu0 %v1778
    %2775 = vmatpush1.msra.mxu0 %v1777
    %2776 = vmatprep.subr.mxu0 %v1781
    %2777 = vmatpush1.msra.mxu0 %v1780
    %2778 = vmatprep.subr.mxu0 %v1784
    %2779 = vmatpush1.msra.mxu0 %v1783
    %2780 = vmatprep.subr.mxu0 %v1787
    %2781 = vmatpush1.msra.mxu0 %v1786
    %2782 = vmatprep.subr.mxu0 %v1790
    %2783 = vmatpush1.msra.mxu0 %v1789
    %2784 = vmatprep.subr.mxu0 %v1793
    %2785 = vmatpush1.msra.mxu0 %v1792
    %2786 = vmatprep.subr.mxu0 %v1796
    %2787 = vmatpush1.msra.mxu0 %v1795
    %2788 = vmatprep.subr.mxu0 %v1799
    %2789 = vmatpush1.msra.mxu0 %v1798
    %2790 = vmatprep.subr.mxu0 0.0
    %2791 = vmatpush1.msra.mxu0 0.0
    %2792 = vmatprep.subr.mxu0 0.0
    %2793 = vmatpush1.msra.mxu0 0.0
    %2794 = vmatprep.subr.mxu0 0.0
    %2795 = vmatpush1.msra.mxu0 0.0
    %2796 = vmatprep.subr.mxu0 0.0
    %2797 = vmatpush1.msra.mxu0 0.0
    %2798 = vmatprep.subr.mxu0 0.0
    %2799 = vmatpush1.msra.mxu0 0.0
    %2800 = vmatprep.subr.mxu0 0.0
    %2801 = vmatpush1.msra.mxu0 0.0
    %2802 = vmatprep.subr.mxu0 0.0
    %2803 = vmatpush1.msra.mxu0 0.0
    %2804 = vmatprep.subr.mxu0 0.0
    %2805 = vmatpush1.msra.mxu0 0.0
    %2806 = vmatprep.subr.mxu0 0.0
    %2807 = vmatpush1.msra.mxu0 0.0
    %2808 = vmatprep.subr.mxu0 0.0
    %2809 = vmatpush1.msra.mxu0 0.0
    %2810 = vmatprep.subr.mxu0 0.0
    %2811 = vmatpush1.msra.mxu0 0.0
    %2812 = vmatprep.subr.mxu0 0.0
    %2813 = vmatpush1.msra.mxu0 0.0
    %2814 = vmatprep.subr.mxu0 0.0
    %2815 = vmatpush1.msra.mxu0 0.0
    %2816 = vmatprep.subr.mxu0 0.0
    %2817 = vmatpush1.msra.mxu0 0.0
    %2818 = vmatprep.subr.mxu0 0.0
    %2819 = vmatpush1.msra.mxu0 0.0
    %2820 = vmatprep.subr.mxu0 0.0
    %2821 = vmatpush1.msra.mxu0 0.0
    %2822 = vmatprep.mubr.f32.mxu0 0.0
    %2823 = vmatmul.mubr.f32.gmra.mrb[0].mxu0 %v2757
    %v2824 = vpop.f32.mrb[0].mxu0
    %v2825 = vadd.f32 %v2237, %v2824
    %v2826 = vpop.f32.mrb[0].mxu0
    %v2827 = vadd.f32 %v2241, %v2826
    %2828 = vdwg.mxu0
    %2829 = vmatprep.subr.mxu0 0.0
    %2830 = vmatpush1.msra.mxu0 %v1755
    %2831 = vmatprep.subr.mxu0 0.0
    %2832 = vmatpush1.msra.mxu0 %v1758
    %2833 = vmatprep.subr.mxu0 0.0
    %2834 = vmatpush1.msra.mxu0 %v1761
    %2835 = vmatprep.subr.mxu0 0.0
    %2836 = vmatpush1.msra.mxu0 %v1764
    %2837 = vmatprep.subr.mxu0 0.0
    %2838 = vmatpush1.msra.mxu0 %v1767
    %2839 = vmatprep.subr.mxu0 0.0
    %2840 = vmatpush1.msra.mxu0 %v1770
    %2841 = vmatprep.subr.mxu0 0.0
    %2842 = vmatpush1.msra.mxu0 %v1773
    %2843 = vmatprep.subr.mxu0 0.0
    %2844 = vmatpush1.msra.mxu0 %v1776
    %2845 = vmatprep.subr.mxu0 0.0
    %2846 = vmatpush1.msra.mxu0 %v1779
    %2847 = vmatprep.subr.mxu0 0.0
    %2848 = vmatpush1.msra.mxu0 %v1782
    %2849 = vmatprep.subr.mxu0 0.0
    %2850 = vmatpush1.msra.mxu0 %v1785
    %2851 = vmatprep.subr.mxu0 0.0
    %2852 = vmatpush1.msra.mxu0 %v1788
    %2853 = vmatprep.subr.mxu0 0.0
    %2854 = vmatpush1.msra.mxu0 %v1791
    %2855 = vmatprep.subr.mxu0 0.0
    %2856 = vmatpush1.msra.mxu0 %v1794
    %2857 = vmatprep.subr.mxu0 0.0
    %2858 = vmatpush1.msra.mxu0 %v1797
    %2859 = vmatprep.subr.mxu0 0.0
    %2860 = vmatpush1.msra.mxu0 %v1800
    %2861 = vmatprep.subr.mxu0 0.0
    %2862 = vmatpush1.msra.mxu0 0.0
    %2863 = vmatprep.subr.mxu0 0.0
    %2864 = vmatpush1.msra.mxu0 0.0
    %2865 = vmatprep.subr.mxu0 0.0
    %2866 = vmatpush1.msra.mxu0 0.0
    %2867 = vmatprep.subr.mxu0 0.0
    %2868 = vmatpush1.msra.mxu0 0.0
    %2869 = vmatprep.subr.mxu0 0.0
    %2870 = vmatpush1.msra.mxu0 0.0
    %2871 = vmatprep.subr.mxu0 0.0
    %2872 = vmatpush1.msra.mxu0 0.0
    %2873 = vmatprep.subr.mxu0 0.0
    %2874 = vmatpush1.msra.mxu0 0.0
    %2875 = vmatprep.subr.mxu0 0.0
    %2876 = vmatpush1.msra.mxu0 0.0
    %2877 = vmatprep.subr.mxu0 0.0
    %2878 = vmatpush1.msra.mxu0 0.0
    %2879 = vmatprep.subr.mxu0 0.0
    %2880 = vmatpush1.msra.mxu0 0.0
    %2881 = vmatprep.subr.mxu0 0.0
    %2882 = vmatpush1.msra.mxu0 0.0
    %2883 = vmatprep.subr.mxu0 0.0
    %2884 = vmatpush1.msra.mxu0 0.0
    %2885 = vmatprep.subr.mxu0 0.0
    %2886 = vmatpush1.msra.mxu0 0.0
    %2887 = vmatprep.subr.mxu0 0.0
    %2888 = vmatpush1.msra.mxu0 0.0
    %2889 = vmatprep.subr.mxu0 0.0
    %2890 = vmatpush1.msra.mxu0 0.0
    %2891 = vmatprep.subr.mxu0 0.0
    %2892 = vmatpush1.msra.mxu0 0.0
    %2893 = vmatprep.mubr.f32.mxu0 0.0
    %2894 = vmatmul.mubr.f32.gmra.mrb[0].mxu0 %v2757
    %v2895 = vpop.f32.mrb[0].mxu0
    %v2896 = vadd.f32 %v2245, %v2895
    %v2897 = vpop.f32.mrb[0].mxu0
    %2898 = vdwg.mxu0
    %v2899 = vadd.f32 %v2128, %v2825
    %v2900 = vxor.u32 %v2899, 2147483648
    %v2901 = vmul.f32 %v2900, 1.442695
    %v2902 = vpow.pop %v2901
    %v2903 = vadd.f32 %v2902, 1.0
    %v2904 = vrcp.pop %v2903
    %v2905 = vmul.f32 1.0, %v2904
    %v2906 = vadd.f32 %v2130, %v2827
    %v2907 = vxor.u32 %v2906, 2147483648
    %v2908 = vmul.f32 %v2907, 1.442695
    %v2909 = vpow.pop %v2908
    %v2910 = vadd.f32 %v2909, 1.0
    %v2911 = vrcp.pop %v2910
    %v2912 = vmul.f32 1.0, %v2911
    %v2913 = vmul.f32 %v2905, %v2896
    %v2914 = vadd.f32 %v2220, %v2913
    %v2915 = vtanh.pop %v2914
    %v2916 = vsub.f32 1.0, %v2912
    %v2917 = vmul.f32 %v2916, %v2915
    %v2918 = vmul.f32 %v2912, %v2757
    %v2919 = vadd.f32 %v2917, %v2918
    %v2920 = vsub.f32 %v2919, %v2757
    %2922 = vset.pattern.permute.xlu0 0
    %2923 = vperm.xlu0 %2922, %v2231
    %v2924 = vpop.permute.xlu0 %2923
    %v2926 = vmul.f32 %v2924, %v2920
    %v2927 = vadd.f32 %v2757, %v2926
    %2928 = vmatprep.subr.mxu0 %v1754
    %2929 = vmatpush1.msra.mxu0 %v1753
    %2930 = vmatprep.subr.mxu0 %v1757
    %2931 = vmatpush1.msra.mxu0 %v1756
    %2932 = vmatprep.subr.mxu0 %v1760
    %2933 = vmatpush1.msra.mxu0 %v1759
    %2934 = vmatprep.subr.mxu0 %v1763
    %2935 = vmatpush1.msra.mxu0 %v1762
    %2936 = vmatprep.subr.mxu0 %v1766
    %2937 = vmatpush1.msra.mxu0 %v1765
    %2938 = vmatprep.subr.mxu0 %v1769
    %2939 = vmatpush1.msra.mxu0 %v1768
    %2940 = vmatprep.subr.mxu0 %v1772
    %2941 = vmatpush1.msra.mxu0 %v1771
    %2942 = vmatprep.subr.mxu0 %v1775
    %2943 = vmatpush1.msra.mxu0 %v1774
    %2944 = vmatprep.subr.mxu0 %v1778
    %2945 = vmatpush1.msra.mxu0 %v1777
    %2946 = vmatprep.subr.mxu0 %v1781
    %2947 = vmatpush1.msra.mxu0 %v1780
    %2948 = vmatprep.subr.mxu0 %v1784
    %2949 = vmatpush1.msra.mxu0 %v1783
    %2950 = vmatprep.subr.mxu0 %v1787
    %2951 = vmatpush1.msra.mxu0 %v1786
    %2952 = vmatprep.subr.mxu0 %v1790
    %2953 = vmatpush1.msra.mxu0 %v1789
    %2954 = vmatprep.subr.mxu0 %v1793
    %2955 = vmatpush1.msra.mxu0 %v1792
    %2956 = vmatprep.subr.mxu0 %v1796
    %2957 = vmatpush1.msra.mxu0 %v1795
    %2958 = vmatprep.subr.mxu0 %v1799
    %2959 = vmatpush1.msra.mxu0 %v1798
    %2960 = vmatprep.subr.mxu0 0.0
    %2961 = vmatpush1.msra.mxu0 0.0
    %2962 = vmatprep.subr.mxu0 0.0
    %2963 = vmatpush1.msra.mxu0 0.0
    %2964 = vmatprep.subr.mxu0 0.0
    %2965 = vmatpush1.msra.mxu0 0.0
    %2966 = vmatprep.subr.mxu0 0.0
    %2967 = vmatpush1.msra.mxu0 0.0
    %2968 = vmatprep.subr.mxu0 0.0
    %2969 = vmatpush1.msra.mxu0 0.0
    %2970 = vmatprep.subr.mxu0 0.0
    %2971 = vmatpush1.msra.mxu0 0.0
    %2972 = vmatprep.subr.mxu0 0.0
    %2973 = vmatpush1.msra.mxu0 0.0
    %2974 = vmatprep.subr.mxu0 0.0
    %2975 = vmatpush1.msra.mxu0 0.0
    %2976 = vmatprep.subr.mxu0 0.0
    %2977 = vmatpush1.msra.mxu0 0.0
    %2978 = vmatprep.subr.mxu0 0.0
    %2979 = vmatpush1.msra.mxu0 0.0
    %2980 = vmatprep.subr.mxu0 0.0
    %2981 = vmatpush1.msra.mxu0 0.0
    %2982 = vmatprep.subr.mxu0 0.0
    %2983 = vmatpush1.msra.mxu0 0.0
    %2984 = vmatprep.subr.mxu0 0.0
    %2985 = vmatpush1.msra.mxu0 0.0
    %2986 = vmatprep.subr.mxu0 0.0
    %2987 = vmatpush1.msra.mxu0 0.0
    %2988 = vmatprep.subr.mxu0 0.0
    %2989 = vmatpush1.msra.mxu0 0.0
    %2990 = vmatprep.subr.mxu0 0.0
    %2991 = vmatpush1.msra.mxu0 0.0
    %2992 = vmatprep.mubr.f32.mxu0 0.0
    %2993 = vmatmul.mubr.f32.gmra.mrb[0].mxu0 %v2927
    %v2994 = vpop.f32.mrb[0].mxu0
    %v2995 = vadd.f32 %v2237, %v2994
    %v2996 = vpop.f32.mrb[0].mxu0
    %v2997 = vadd.f32 %v2241, %v2996
    %2998 = vdwg.mxu0
    %2999 = vmatprep.subr.mxu0 0.0
    %3000 = vmatpush1.msra.mxu0 %v1755
    %3001 = vmatprep.subr.mxu0 0.0
    %3002 = vmatpush1.msra.mxu0 %v1758
    %3003 = vmatprep.subr.mxu0 0.0
    %3004 = vmatpush1.msra.mxu0 %v1761
    %3005 = vmatprep.subr.mxu0 0.0
    %3006 = vmatpush1.msra.mxu0 %v1764
    %3007 = vmatprep.subr.mxu0 0.0
    %3008 = vmatpush1.msra.mxu0 %v1767
    %3009 = vmatprep.subr.mxu0 0.0
    %3010 = vmatpush1.msra.mxu0 %v1770
    %3011 = vmatprep.subr.mxu0 0.0
    %3012 = vmatpush1.msra.mxu0 %v1773
    %3013 = vmatprep.subr.mxu0 0.0
    %3014 = vmatpush1.msra.mxu0 %v1776
    %3015 = vmatprep.subr.mxu0 0.0
    %3016 = vmatpush1.msra.mxu0 %v1779
    %3017 = vmatprep.subr.mxu0 0.0
    %3018 = vmatpush1.msra.mxu0 %v1782
    %3019 = vmatprep.subr.mxu0 0.0
    %3020 = vmatpush1.msra.mxu0 %v1785
    %3021 = vmatprep.subr.mxu0 0.0
    %3022 = vmatpush1.msra.mxu0 %v1788
    %3023 = vmatprep.subr.mxu0 0.0
    %3024 = vmatpush1.msra.mxu0 %v1791
    %3025 = vmatprep.subr.mxu0 0.0
    %3026 = vmatpush1.msra.mxu0 %v1794
    %3027 = vmatprep.subr.mxu0 0.0
    %3028 = vmatpush1.msra.mxu0 %v1797
    %3029 = vmatprep.subr.mxu0 0.0
    %3030 = vmatpush1.msra.mxu0 %v1800
    %3031 = vmatprep.subr.mxu0 0.0
    %3032 = vmatpush1.msra.mxu0 0.0
    %3033 = vmatprep.subr.mxu0 0.0
    %3034 = vmatpush1.msra.mxu0 0.0
    %3035 = vmatprep.subr.mxu0 0.0
    %3036 = vmatpush1.msra.mxu0 0.0
    %3037 = vmatprep.subr.mxu0 0.0
    %3038 = vmatpush1.msra.mxu0 0.0
    %3039 = vmatprep.subr.mxu0 0.0
    %3040 = vmatpush1.msra.mxu0 0.0
    %3041 = vmatprep.subr.mxu0 0.0
    %3042 = vmatpush1.msra.mxu0 0.0
    %3043 = vmatprep.subr.mxu0 0.0
    %3044 = vmatpush1.msra.mxu0 0.0
    %3045 = vmatprep.subr.mxu0 0.0
    %3046 = vmatpush1.msra.mxu0 0.0
    %3047 = vmatprep.subr.mxu0 0.0
    %3048 = vmatpush1.msra.mxu0 0.0
    %3049 = vmatprep.subr.mxu0 0.0
    %3050 = vmatpush1.msra.mxu0 0.0
    %3051 = vmatprep.subr.mxu0 0.0
    %3052 = vmatpush1.msra.mxu0 0.0
    %3053 = vmatprep.subr.mxu0 0.0
    %3054 = vmatpush1.msra.mxu0 0.0
    %3055 = vmatprep.subr.mxu0 0.0
    %3056 = vmatpush1.msra.mxu0 0.0
    %3057 = vmatprep.subr.mxu0 0.0
    %3058 = vmatpush1.msra.mxu0 0.0
    %3059 = vmatprep.subr.mxu0 0.0
    %3060 = vmatpush1.msra.mxu0 0.0
    %3061 = vmatprep.subr.mxu0 0.0
    %3062 = vmatpush1.msra.mxu0 0.0
    %3063 = vmatprep.mubr.f32.mxu0 0.0
    %3064 = vmatmul.mubr.f32.gmra.mrb[0].mxu0 %v2927
    %v3065 = vpop.f32.mrb[0].mxu0
    %v3066 = vadd.f32 %v2245, %v3065
    %v3067 = vpop.f32.mrb[0].mxu0
    %3068 = vdwg.mxu0
    %v3069 = vadd.f32 %v2134, %v2995
    %v3070 = vxor.u32 %v3069, 2147483648
    %v3071 = vmul.f32 %v3070, 1.442695
    %v3072 = vpow.pop %v3071
    %v3073 = vadd.f32 %v3072, 1.0
    %v3074 = vrcp.pop %v3073
    %v3075 = vmul.f32 1.0, %v3074
    %v3076 = vadd.f32 %v2136, %v2997
    %v3077 = vxor.u32 %v3076, 2147483648
    %v3078 = vmul.f32 %v3077, 1.442695
    %v3079 = vpow.pop %v3078
    %v3080 = vadd.f32 %v3079, 1.0
    %v3081 = vrcp.pop %v3080
    %v3082 = vmul.f32 1.0, %v3081
    %v3083 = vmul.f32 %v3075, %v3066
    %v3084 = vadd.f32 %v2225, %v3083
    %v3085 = vtanh.pop %v3084
    %v3086 = vsub.f32 1.0, %v3082
    %v3087 = vmul.f32 %v3086, %v3085
    %v3088 = vmul.f32 %v3082, %v2927
    %v3089 = vadd.f32 %v3087, %v3088
    %v3090 = vsub.f32 %v3089, %v2927
    %3092 = vset.pattern.permute.xlu0 0
    %3093 = vperm.xlu0 %3092, %v2232
    %v3094 = vpop.permute.xlu0 %3093
    %v3096 = vmul.f32 %v3094, %v3090
    %v3097 = vadd.f32 %v2927, %v3096
    %v3099 = vcombine.high %v1746, %v1746
    %v3101 = vld [vmem:[%s4] sm:$0x3]
    %v3104 = vunpack.c.l.s4 1966171168
    %v3105 = vunpack.c.0.s8 %v3104
    %v3106 = vlaneseq
    %v3107 = vshrl.u32 %v3106, 7
    %v3108 = vsub.s32 %v3105, %v3107
    %v3109 = vrot.slane %v3097, %v3108
    %v3110 = vcombine.high %v3109, %v3109
    %v3112 = vunpack.c.l.s4 1966171168
    %v3113 = vunpack.c.0.s8 %v3112
    %v3114 = vlaneseq
    %v3115 = vshrl.u32 %v3114, 7
    %v3116 = vsub.s32 %v3113, %v3115
    %v3117 = vrot.slane %v3109, %v3116
    %v3119 = vunpack.c.l.s4 1966171168
    %v3120 = vunpack.c.0.s8 %v3119
    %v3121 = vlaneseq
    %v3122 = vshrl.u32 %v3121, 7
    %v3123 = vsub.s32 %v3120, %v3122
    %v3124 = vrot.slane %v3110, %v3123
    %v3125 = vlaneseq
    %v3126 = vshrl.u32 %v3125, 7
    %v3127 = vsub.s32 0, %v3126
    %v3128 = vrot.slane %v3117, %v3127
    %v3129 = vlaneseq
    %v3130 = vshrl.u32 %v3129, 7
    %v3131 = vsub.s32 0, %v3130
    %v3132 = vrot.slane %v3124, %v3131
    %v3135 = vmul.f32 %v1746, %v3128
    %v3136 = vmul.f32 %v3099, %v3132
    %v3137 = vsub.f32 %v1746, %v3128
    %v3138 = vsub.f32 %v3099, %v3132
    %v3139 = vand.u32 2147483647, %v3137
    %v3140 = vand.u32 2147483647, %v3138
    %v3143 = vcombine.low %v3135, %v3136
    %v3147 = vcombine.low %v3139, %v3140
    %v3149 = vld [vmem:[%s14] sm:$0xff]
    %v3150 = vld [vmem:[%s14 + $0x8] sm:$0xff]
    %v3151 = vld [vmem:[%s14 + $0x10] sm:$0xff]
    %v3152 = vld [vmem:[%s14 + $0x18] sm:$0xff]
    %v3153 = vld [vmem:[%s14 + $0x20] sm:$0xff]
    %v3154 = vld [vmem:[%s14 + $0x28] sm:$0xff]
    %v3155 = vld [vmem:[%s14 + $0x30] sm:$0xff]
    %v3156 = vld [vmem:[%s14 + $0x38] sm:$0xff]
    %v3157 = vld [vmem:[%s14 + $0x40] sm:$0xff]
    %v3158 = vld [vmem:[%s14 + $0x48] sm:$0xff]
    %v3159 = vld [vmem:[%s14 + $0x50] sm:$0xff]
    %v3160 = vld [vmem:[%s14 + $0x58] sm:$0xff]
    %v3161 = vld [vmem:[%s14 + $0x60] sm:$0xff]
    %v3162 = vld [vmem:[%s14 + $0x68] sm:$0xff]
    %v3163 = vld [vmem:[%s14 + $0x70] sm:$0xff]
    %v3164 = vld [vmem:[%s14 + $0x78] sm:$0xff]
    %v3165 = vld [vmem:[%s14 + $0x80] sm:$0xff]
    %v3166 = vld [vmem:[%s14 + $0x88] sm:$0xff]
    %v3167 = vld [vmem:[%s14 + $0x90] sm:$0xff]
    %v3168 = vld [vmem:[%s14 + $0x98] sm:$0xff]
    %v3169 = vld [vmem:[%s14 + $0xa0] sm:$0xff]
    %v3170 = vld [vmem:[%s14 + $0xa8] sm:$0xff]
    %v3171 = vld [vmem:[%s14 + $0xb0] sm:$0xff]
    %v3172 = vld [vmem:[%s14 + $0xb8] sm:$0xff]
    %v3173 = vld [vmem:[%s14 + $0xc0] sm:$0xff]
    %v3174 = vld [vmem:[%s14 + $0xc8] sm:$0xff]
    %v3175 = vld [vmem:[%s14 + $0xd0] sm:$0xff]
    %v3176 = vld [vmem:[%s14 + $0xd8] sm:$0xff]
    %v3177 = vld [vmem:[%s14 + $0xe0] sm:$0xff]
    %v3178 = vld [vmem:[%s14 + $0xe8] sm:$0xff]
    %v3179 = vld [vmem:[%s14 + $0xf0] sm:$0xff]
    %v3180 = vld [vmem:[%s14 + $0xf8] sm:$0xff]
    %v3181 = vld [vmem:[#allocation8] sm:$0x1]
    %v3183 = vlaneseq
    %v3184 = vshrl.u32 %v3183, 7
    %v3185 = vsub.s32 0, %v3184
    %v3186 = vrot.slane %v3181, %v3185
    %3188 = vmatprep.subr.mxu0 0.0
    %3189 = vmatpush1.msra.mxu0 %v3149
    %3190 = vmatprep.subr.mxu0 0.0
    %3191 = vmatpush1.msra.mxu0 %v3150
    %3192 = vmatprep.subr.mxu0 0.0
    %3193 = vmatpush1.msra.mxu0 %v3151
    %3194 = vmatprep.subr.mxu0 0.0
    %3195 = vmatpush1.msra.mxu0 %v3152
    %3196 = vmatprep.subr.mxu0 0.0
    %3197 = vmatpush1.msra.mxu0 %v3153
    %3198 = vmatprep.subr.mxu0 0.0
    %3199 = vmatpush1.msra.mxu0 %v3154
    %3200 = vmatprep.subr.mxu0 0.0
    %3201 = vmatpush1.msra.mxu0 %v3155
    %3202 = vmatprep.subr.mxu0 0.0
    %3203 = vmatpush1.msra.mxu0 %v3156
    %3204 = vmatprep.subr.mxu0 0.0
    %3205 = vmatpush1.msra.mxu0 %v3157
    %3206 = vmatprep.subr.mxu0 0.0
    %3207 = vmatpush1.msra.mxu0 %v3158
    %3208 = vmatprep.subr.mxu0 0.0
    %3209 = vmatpush1.msra.mxu0 %v3159
    %3210 = vmatprep.subr.mxu0 0.0
    %3211 = vmatpush1.msra.mxu0 %v3160
    %3212 = vmatprep.subr.mxu0 0.0
    %3213 = vmatpush1.msra.mxu0 %v3161
    %3214 = vmatprep.subr.mxu0 0.0
    %3215 = vmatpush1.msra.mxu0 %v3162
    %3216 = vmatprep.subr.mxu0 0.0
    %3217 = vmatpush1.msra.mxu0 %v3163
    %3218 = vmatprep.subr.mxu0 0.0
    %3219 = vmatpush1.msra.mxu0 %v3164
    %3220 = vmatprep.subr.mxu0 0.0
    %3221 = vmatpush1.msra.mxu0 %v3165
    %3222 = vmatprep.subr.mxu0 0.0
    %3223 = vmatpush1.msra.mxu0 %v3166
    %3224 = vmatprep.subr.mxu0 0.0
    %3225 = vmatpush1.msra.mxu0 %v3167
    %3226 = vmatprep.subr.mxu0 0.0
    %3227 = vmatpush1.msra.mxu0 %v3168
    %3228 = vmatprep.subr.mxu0 0.0
    %3229 = vmatpush1.msra.mxu0 %v3169
    %3230 = vmatprep.subr.mxu0 0.0
    %3231 = vmatpush1.msra.mxu0 %v3170
    %3232 = vmatprep.subr.mxu0 0.0
    %3233 = vmatpush1.msra.mxu0 %v3171
    %3234 = vmatprep.subr.mxu0 0.0
    %3235 = vmatpush1.msra.mxu0 %v3172
    %3236 = vmatprep.subr.mxu0 0.0
    %3237 = vmatpush1.msra.mxu0 %v3173
    %3238 = vmatprep.subr.mxu0 0.0
    %3239 = vmatpush1.msra.mxu0 %v3174
    %3240 = vmatprep.subr.mxu0 0.0
    %3241 = vmatpush1.msra.mxu0 %v3175
    %3242 = vmatprep.subr.mxu0 0.0
    %3243 = vmatpush1.msra.mxu0 %v3176
    %3244 = vmatprep.subr.mxu0 0.0
    %3245 = vmatpush1.msra.mxu0 %v3177
    %3246 = vmatprep.subr.mxu0 0.0
    %3247 = vmatpush1.msra.mxu0 %v3178
    %3248 = vmatprep.subr.mxu0 0.0
    %3249 = vmatpush1.msra.mxu0 %v3179
    %3250 = vmatprep.subr.mxu0 0.0
    %3251 = vmatpush1.msra.mxu0 %v3180
    %3252 = vmatprep.mubr.f32.mxu0 %v3147
    %3253 = vmatmul.mubr.f32.gmra.mrb[0].mxu0 %v3143
    %v3254 = vpop.f32.mrb[0].mxu0
    %v3255 = vadd.f32 %v3186, %v3254
    %v3256 = vpop.f32.mrb[0].mxu0
    %3257 = vdwg.mxu0
    %v3258 = vld [vmem:[%s15] sm:$0xff]
    %v3259 = vld [vmem:[%s15 + $0x8] sm:$0xff]
    %v3260 = vld [vmem:[%s15 + $0x10] sm:$0xff]
    %v3261 = vld [vmem:[%s15 + $0x18] sm:$0xff]
    %v3262 = vld [vmem:[%s15 + $0x20] sm:$0xff]
    %v3263 = vld [vmem:[%s15 + $0x28] sm:$0xff]
    %v3264 = vld [vmem:[%s15 + $0x30] sm:$0xff]
    %v3265 = vld [vmem:[%s15 + $0x38] sm:$0xff]
    %v3266 = vld [vmem:[%s15 + $0x40] sm:$0xff]
    %v3267 = vld [vmem:[%s15 + $0x48] sm:$0xff]
    %v3268 = vld [vmem:[%s15 + $0x50] sm:$0xff]
    %v3269 = vld [vmem:[%s15 + $0x58] sm:$0xff]
    %v3270 = vld [vmem:[%s15 + $0x60] sm:$0xff]
    %v3271 = vld [vmem:[%s15 + $0x68] sm:$0xff]
    %v3272 = vld [vmem:[%s15 + $0x70] sm:$0xff]
    %v3273 = vld [vmem:[%s15 + $0x78] sm:$0xff]
    %v3274 = vld [vmem:[%s15 + $0x80] sm:$0xff]
    %v3275 = vld [vmem:[%s15 + $0x88] sm:$0xff]
    %v3276 = vld [vmem:[%s15 + $0x90] sm:$0xff]
    %v3277 = vld [vmem:[%s15 + $0x98] sm:$0xff]
    %v3278 = vld [vmem:[%s15 + $0xa0] sm:$0xff]
    %v3279 = vld [vmem:[%s15 + $0xa8] sm:$0xff]
    %v3280 = vld [vmem:[%s15 + $0xb0] sm:$0xff]
    %v3281 = vld [vmem:[%s15 + $0xb8] sm:$0xff]
    %v3282 = vld [vmem:[%s15 + $0xc0] sm:$0xff]
    %v3283 = vld [vmem:[%s15 + $0xc8] sm:$0xff]
    %v3284 = vld [vmem:[%s15 + $0xd0] sm:$0xff]
    %v3285 = vld [vmem:[%s15 + $0xd8] sm:$0xff]
    %v3286 = vld [vmem:[%s15 + $0xe0] sm:$0xff]
    %v3287 = vld [vmem:[%s15 + $0xe8] sm:$0xff]
    %v3288 = vld [vmem:[%s15 + $0xf0] sm:$0xff]
    %v3289 = vld [vmem:[%s15 + $0xf8] sm:$0xff]
    %v3290 = vld [vmem:[#allocation9] sm:$0x1]
    %v3291 = vld [vmem:[#allocation2] sm:$0x1]
    %v3292 = vld [vmem:[#allocation11] sm:$0xff]
    %v3293 = vld [vmem:[#allocation11 + $0x8] sm:$0xff]
    %v3294 = vld [vmem:[#allocation11 + $0x10] sm:$0xff]
    %v3295 = vld [vmem:[#allocation11 + $0x18] sm:$0xff]
    %v3296 = vld [vmem:[#allocation11 + $0x20] sm:$0xff]
    %v3297 = vld [vmem:[#allocation11 + $0x28] sm:$0xff]
    %v3298 = vld [vmem:[#allocation11 + $0x30] sm:$0xff]
    %v3299 = vld [vmem:[#allocation11 + $0x38] sm:$0xff]
    %v3300 = vld [vmem:[#allocation11 + $0x40] sm:$0xff]
    %v3301 = vld [vmem:[#allocation11 + $0x48] sm:$0xff]
    %v3302 = vld [vmem:[#allocation11 + $0x50] sm:$0xff]
    %v3303 = vld [vmem:[#allocation11 + $0x58] sm:$0xff]
    %v3304 = vld [vmem:[#allocation11 + $0x60] sm:$0xff]
    %v3305 = vld [vmem:[#allocation11 + $0x68] sm:$0xff]
    %v3306 = vld [vmem:[#allocation11 + $0x70] sm:$0xff]
    %v3307 = vld [vmem:[#allocation11 + $0x78] sm:$0xff]
    %v3308 = vld [vmem:[#allocation11 + $0x80] sm:$0xff]
    %v3309 = vld [vmem:[#allocation11 + $0x88] sm:$0xff]
    %v3310 = vld [vmem:[#allocation11 + $0x90] sm:$0xff]
    %v3311 = vld [vmem:[#allocation11 + $0x98] sm:$0xff]
    %v3312 = vld [vmem:[#allocation11 + $0xa0] sm:$0xff]
    %v3313 = vld [vmem:[#allocation11 + $0xa8] sm:$0xff]
    %v3314 = vld [vmem:[#allocation11 + $0xb0] sm:$0xff]
    %v3315 = vld [vmem:[#allocation11 + $0xb8] sm:$0xff]
    %v3316 = vld [vmem:[#allocation11 + $0xc0] sm:$0xff]
    %v3317 = vld [vmem:[#allocation11 + $0xc8] sm:$0xff]
    %v3318 = vld [vmem:[#allocation11 + $0xd0] sm:$0xff]
    %v3319 = vld [vmem:[#allocation11 + $0xd8] sm:$0xff]
    %v3320 = vld [vmem:[#allocation11 + $0xe0] sm:$0xff]
    %v3321 = vld [vmem:[#allocation11 + $0xe8] sm:$0xff]
    %v3322 = vld [vmem:[#allocation11 + $0xf0] sm:$0xff]
    %v3323 = vld [vmem:[#allocation11 + $0xf8] sm:$0xff]
    %v3324 = vld [vmem:[#allocation11 + $0x100] sm:$0xff]
    %v3325 = vld [vmem:[#allocation11 + $0x108] sm:$0xff]
    %v3326 = vld [vmem:[#allocation11 + $0x110] sm:$0xff]
    %v3327 = vld [vmem:[#allocation11 + $0x118] sm:$0xff]
    %v3328 = vld [vmem:[#allocation11 + $0x120] sm:$0xff]
    %v3329 = vld [vmem:[#allocation11 + $0x128] sm:$0xff]
    %v3330 = vld [vmem:[#allocation11 + $0x130] sm:$0xff]
    %v3331 = vld [vmem:[#allocation11 + $0x138] sm:$0xff]
    %v3332 = vld [vmem:[#allocation11 + $0x140] sm:$0xff]
    %v3333 = vld [vmem:[#allocation11 + $0x148] sm:$0xff]
    %v3334 = vld [vmem:[#allocation11 + $0x150] sm:$0xff]
    %v3335 = vld [vmem:[#allocation11 + $0x158] sm:$0xff]
    %v3336 = vld [vmem:[#allocation11 + $0x160] sm:$0xff]
    %v3337 = vld [vmem:[#allocation11 + $0x168] sm:$0xff]
    %v3338 = vld [vmem:[#allocation11 + $0x170] sm:$0xff]
    %v3339 = vld [vmem:[#allocation11 + $0x178] sm:$0xff]
    %v3340 = vld [vmem:[#allocation12] sm:$0xff]
    %v3341 = vld [vmem:[#allocation12 + $0x8] sm:$0xff]
    %v3342 = vld [vmem:[#allocation12 + $0x10] sm:$0xff]
    %v3343 = vld [vmem:[#allocation12 + $0x18] sm:$0xff]
    %v3344 = vld [vmem:[#allocation12 + $0x20] sm:$0xff]
    %v3345 = vld [vmem:[#allocation12 + $0x28] sm:$0xff]
    %v3346 = vld [vmem:[#allocation12 + $0x30] sm:$0xff]
    %v3347 = vld [vmem:[#allocation12 + $0x38] sm:$0xff]
    %v3348 = vld [vmem:[#allocation12 + $0x40] sm:$0xff]
    %v3349 = vld [vmem:[#allocation12 + $0x48] sm:$0xff]
    %v3350 = vld [vmem:[#allocation12 + $0x50] sm:$0xff]
    %v3351 = vld [vmem:[#allocation12 + $0x58] sm:$0xff]
    %v3352 = vld [vmem:[#allocation12 + $0x60] sm:$0xff]
    %v3353 = vld [vmem:[#allocation12 + $0x68] sm:$0xff]
    %v3354 = vld [vmem:[#allocation12 + $0x70] sm:$0xff]
    %v3355 = vld [vmem:[#allocation12 + $0x78] sm:$0xff]
    %v3356 = vld [vmem:[#allocation12 + $0x80] sm:$0xff]
    %v3357 = vld [vmem:[#allocation12 + $0x88] sm:$0xff]
    %v3358 = vld [vmem:[#allocation12 + $0x90] sm:$0xff]
    %v3359 = vld [vmem:[#allocation12 + $0x98] sm:$0xff]
    %v3360 = vld [vmem:[#allocation12 + $0xa0] sm:$0xff]
    %v3361 = vld [vmem:[#allocation12 + $0xa8] sm:$0xff]
    %v3362 = vld [vmem:[#allocation12 + $0xb0] sm:$0xff]
    %v3363 = vld [vmem:[#allocation12 + $0xb8] sm:$0xff]
    %v3364 = vld [vmem:[#allocation12 + $0xc0] sm:$0xff]
    %v3365 = vld [vmem:[#allocation12 + $0xc8] sm:$0xff]
    %v3366 = vld [vmem:[#allocation12 + $0xd0] sm:$0xff]
    %v3367 = vld [vmem:[#allocation12 + $0xd8] sm:$0xff]
    %v3368 = vld [vmem:[#allocation12 + $0xe0] sm:$0xff]
    %v3369 = vld [vmem:[#allocation12 + $0xe8] sm:$0xff]
    %v3370 = vld [vmem:[#allocation12 + $0xf0] sm:$0xff]
    %v3371 = vld [vmem:[#allocation12 + $0xf8] sm:$0xff]
    %v3372 = vld [vmem:[#allocation12 + $0x100] sm:$0xff]
    %v3373 = vld [vmem:[#allocation12 + $0x108] sm:$0xff]
    %v3374 = vld [vmem:[#allocation12 + $0x110] sm:$0xff]
    %v3375 = vld [vmem:[#allocation12 + $0x118] sm:$0xff]
    %v3376 = vld [vmem:[#allocation12 + $0x120] sm:$0xff]
    %v3377 = vld [vmem:[#allocation12 + $0x128] sm:$0xff]
    %v3378 = vld [vmem:[#allocation12 + $0x130] sm:$0xff]
    %v3379 = vld [vmem:[#allocation12 + $0x138] sm:$0xff]
    %v3380 = vld [vmem:[#allocation12 + $0x140] sm:$0xff]
    %v3381 = vld [vmem:[#allocation12 + $0x148] sm:$0xff]
    %v3382 = vld [vmem:[#allocation12 + $0x150] sm:$0xff]
    %v3383 = vld [vmem:[#allocation12 + $0x158] sm:$0xff]
    %v3384 = vld [vmem:[#allocation12 + $0x160] sm:$0xff]
    %v3385 = vld [vmem:[#allocation12 + $0x168] sm:$0xff]
    %v3386 = vld [vmem:[#allocation12 + $0x170] sm:$0xff]
    %v3387 = vld [vmem:[#allocation12 + $0x178] sm:$0xff]
    %v3388 = vld [vmem:[%s21] sm:$0x7]
    %v3389 = vld [vmem:[%s22] sm:$0x7]
    %3390 = vmatprep.subr.mxu0 0.0
    %3391 = vmatpush1.msra.mxu0 %v3258
    %3392 = vmatprep.subr.mxu0 0.0
    %3393 = vmatpush1.msra.mxu0 %v3259
    %3394 = vmatprep.subr.mxu0 0.0
    %3395 = vmatpush1.msra.mxu0 %v3260
    %3396 = vmatprep.subr.mxu0 0.0
    %3397 = vmatpush1.msra.mxu0 %v3261
    %3398 = vmatprep.subr.mxu0 0.0
    %3399 = vmatpush1.msra.mxu0 %v3262
    %3400 = vmatprep.subr.mxu0 0.0
    %3401 = vmatpush1.msra.mxu0 %v3263
    %3402 = vmatprep.subr.mxu0 0.0
    %3403 = vmatpush1.msra.mxu0 %v3264
    %3404 = vmatprep.subr.mxu0 0.0
    %3405 = vmatpush1.msra.mxu0 %v3265
    %3406 = vmatprep.subr.mxu0 0.0
    %3407 = vmatpush1.msra.mxu0 %v3266
    %3408 = vmatprep.subr.mxu0 0.0
    %3409 = vmatpush1.msra.mxu0 %v3267
    %3410 = vmatprep.subr.mxu0 0.0
    %3411 = vmatpush1.msra.mxu0 %v3268
    %3412 = vmatprep.subr.mxu0 0.0
    %3413 = vmatpush1.msra.mxu0 %v3269
    %3414 = vmatprep.subr.mxu0 0.0
    %3415 = vmatpush1.msra.mxu0 %v3270
    %3416 = vmatprep.subr.mxu0 0.0
    %3417 = vmatpush1.msra.mxu0 %v3271
    %3418 = vmatprep.subr.mxu0 0.0
    %3419 = vmatpush1.msra.mxu0 %v3272
    %3420 = vmatprep.subr.mxu0 0.0
    %3421 = vmatpush1.msra.mxu0 %v3273
    %3422 = vmatprep.subr.mxu0 0.0
    %3423 = vmatpush1.msra.mxu0 %v3274
    %3424 = vmatprep.subr.mxu0 0.0
    %3425 = vmatpush1.msra.mxu0 %v3275
    %3426 = vmatprep.subr.mxu0 0.0
    %3427 = vmatpush1.msra.mxu0 %v3276
    %3428 = vmatprep.subr.mxu0 0.0
    %3429 = vmatpush1.msra.mxu0 %v3277
    %3430 = vmatprep.subr.mxu0 0.0
    %3431 = vmatpush1.msra.mxu0 %v3278
    %3432 = vmatprep.subr.mxu0 0.0
    %3433 = vmatpush1.msra.mxu0 %v3279
    %3434 = vmatprep.subr.mxu0 0.0
    %3435 = vmatpush1.msra.mxu0 %v3280
    %3436 = vmatprep.subr.mxu0 0.0
    %3437 = vmatpush1.msra.mxu0 %v3281
    %3438 = vmatprep.subr.mxu0 0.0
    %3439 = vmatpush1.msra.mxu0 %v3282
    %3440 = vmatprep.subr.mxu0 0.0
    %3441 = vmatpush1.msra.mxu0 %v3283
    %3442 = vmatprep.subr.mxu0 0.0
    %3443 = vmatpush1.msra.mxu0 %v3284
    %3444 = vmatprep.subr.mxu0 0.0
    %3445 = vmatpush1.msra.mxu0 %v3285
    %3446 = vmatprep.subr.mxu0 0.0
    %3447 = vmatpush1.msra.mxu0 %v3286
    %3448 = vmatprep.subr.mxu0 0.0
    %3449 = vmatpush1.msra.mxu0 %v3287
    %3450 = vmatprep.subr.mxu0 0.0
    %3451 = vmatpush1.msra.mxu0 %v3288
    %3452 = vmatprep.subr.mxu0 0.0
    %3453 = vmatpush1.msra.mxu0 %v3289
    %3454 = vmatprep.mubr.f32.mxu0 %v3147
    %3455 = vmatmul.mubr.f32.gmra.mrb[0].mxu0 %v3143
    %v3456 = vpop.f32.mrb[0].mxu0
    %v3457 = vadd.f32 0.0, %v3456
    %v3458 = vpop.f32.mrb[0].mxu0
    %3459 = vdwg.mxu0
    %v3460 = vadd.f32 %v3255, %v3457
    %v3461 = vtanh.pop %v3460
    %v3463 = vcombine.high %v3461, %v3461
    %v3466 = vlaneseq
    %v3467 = vshrl.u32 %v3466, 7
    %v3468 = vsub.s32 0, %v3467
    %v3469 = vrot.slane %v3290, %v3468
    %v3471 = vmul.f32 %v3461, %v3469
    %v3472 = vmul.f32 %v3463, %v3469
    %vm3473 = vcmask 257024
    %v3474 = vsel %vm3473, %v3471, 0.0
    %3475 = vadd.xlane.f32.xlu0 %v3474
    %v3476 = vpop.xlane.xlu0 %3475
    %v3477 = vsel %vm3473, %v3472, 0.0
    %3478 = vadd.xlane.f32.xlu0 %v3477
    %v3479 = vpop.xlane.xlu0 %3478
    %v3481 = vlaneseq
    %v3482 = vshrl.u32 %v3481, 7
    %v3483 = vsub.s32 0, %v3482
    %v3484 = vrot.slane %v3291, %v3483
    %3485 = vset.pattern.permute.xlu0 0
    %3486 = vperm.xlu0 %3485, %v3484
    %v3487 = vpop.permute.xlu0 %3486
    %v3489 = vadd.f32 %v3476, %v3487
    %v3490 = vadd.f32 %v3479, %v3487
    %vm3491 = vcmp.gt.f32.partialorder %v3101, 0.0
    %v3494 = vlaneseq
    %v3495 = vshrl.u32 %v3494, 7
    %v3496 = vsub.s32 %v438, %v3495
    %v3497 = vrot.slane %v3489, %v3496
    %v3498 = vlaneseq
    %v3499 = vshrl.u32 %v3498, 7
    %v3500 = vsub.s32 %v438, %v3499
    %v3501 = vrot.slane %v3490, %v3500
    %vm3502 = vcmask 1041409
    %v3503 = vsel %vm3502, %v3501, %v3497
    %v3505 = vsel %vm3491, %v3503, -1e+30
    %vm3506 = vcmask 25600
    %v3507 = vsel %vm3506, %v3505, -inf
    %3508 = vmax.xlane.f32.xlu0 %v3507
    %v3509 = vpop.xlane.xlu0 %3508
    %v3510 = vsub.f32 %v3505, %v3509
    %v3511 = vmul.f32 %v3510, 1.442695
    %v3512 = vpow.pop %v3511
    %v3513 = vsel %vm3506, %v3512, 0.0
    %3514 = vadd.xlane.f32.xlu0 %v3513
    %v3515 = vpop.xlane.xlu0 %3514
    %v3516 = vrcp.pop %v3515
    %v3517 = vmul.f32 %v3512, %v3516
    %vm3518 = vcmask 31744
    %v3519 = vsel %vm3518, %v3517, 0.0
    %3520 = vst [vmem:[%s25] sm:$0x3] %v3519
    %v3521 = vlaneseq
    %v3522 = vshrl.u32 %v3521, 7
    %v3523 = vsub.s32 0, %v3522
    %v3524 = vrot.slane %v3517, %v3523
    %3526 = vbcast.lane.b32.xlu0 %v3524, 256
    %v3527 = vpop.permute.xlu0 %3526
    %v3528 = vlaneseq
    %v3529 = vshrl.u32 %v3528, 7
    %v3530 = vsub.s32 1, %v3529
    %v3531 = vrot.slane %v3517, %v3530
    %3533 = vbcast.lane.b32.xlu0 %v3531, 256
    %v3534 = vpop.permute.xlu0 %3533
    %v3535 = vmul.f32 %v3527, %v1746
    %v3536 = vmul.f32 %v3534, %v3099
    %vm3537 = vcmask 1043456
    %v3538 = vsel %vm3537, %v3535, 0.0
    %v3539 = vrot.slane %v3538, 4
    %v3540 = vadd.f32 %v3538, %v3539
    %v3541 = vrot.slane %v3540, 2
    %v3542 = vadd.f32 %v3540, %v3541
    %v3543 = vrot.slane %v3542, 1
    %v3544 = vadd.f32 %v3542, %v3543
    %v3545 = vsel %vm3537, %v3536, 0.0
    %v3546 = vrot.slane %v3545, 4
    %v3547 = vadd.f32 %v3545, %v3546
    %v3548 = vrot.slane %v3547, 2
    %v3549 = vadd.f32 %v3547, %v3548
    %v3550 = vrot.slane %v3549, 1
    %v3551 = vadd.f32 %v3549, %v3550
    %v3553 = vlaneseq
    %v3554 = vshrl.u32 %v3553, 7
    %v3555 = vsub.s32 0, %v3554
    %v3556 = vrot.slane %v3388, %v3555
    %v3557 = vlaneseq
    %v3558 = vshrl.u32 %v3557, 7
    %v3559 = vsub.s32 1, %v3558
    %v3560 = vrot.slane %v3388, %v3559
    %v3561 = vlaneseq
    %v3562 = vshrl.u32 %v3561, 7
    %v3563 = vsub.s32 2, %v3562
    %v3564 = vrot.slane %v3388, %v3563
    %v3570 = vsel %vm3502, %v3551, %v3544
    %3572 = vmatprep.subr.mxu0 %v3293
    %3573 = vmatpush1.msra.mxu0 %v3292
    %3574 = vmatprep.subr.mxu0 %v3296
    %3575 = vmatpush1.msra.mxu0 %v3295
    %3576 = vmatprep.subr.mxu0 %v3299
    %3577 = vmatpush1.msra.mxu0 %v3298
    %3578 = vmatprep.subr.mxu0 %v3302
    %3579 = vmatpush1.msra.mxu0 %v3301
    %3580 = vmatprep.subr.mxu0 %v3305
    %3581 = vmatpush1.msra.mxu0 %v3304
    %3582 = vmatprep.subr.mxu0 %v3308
    %3583 = vmatpush1.msra.mxu0 %v3307
    %3584 = vmatprep.subr.mxu0 %v3311
    %3585 = vmatpush1.msra.mxu0 %v3310
    %3586 = vmatprep.subr.mxu0 %v3314
    %3587 = vmatpush1.msra.mxu0 %v3313
    %3588 = vmatprep.subr.mxu0 %v3317
    %3589 = vmatpush1.msra.mxu0 %v3316
    %3590 = vmatprep.subr.mxu0 %v3320
    %3591 = vmatpush1.msra.mxu0 %v3319
    %3592 = vmatprep.subr.mxu0 %v3323
    %3593 = vmatpush1.msra.mxu0 %v3322
    %3594 = vmatprep.subr.mxu0 %v3326
    %3595 = vmatpush1.msra.mxu0 %v3325
    %3596 = vmatprep.subr.mxu0 %v3329
    %3597 = vmatpush1.msra.mxu0 %v3328
    %3598 = vmatprep.subr.mxu0 %v3332
    %3599 = vmatpush1.msra.mxu0 %v3331
    %3600 = vmatprep.subr.mxu0 %v3335
    %3601 = vmatpush1.msra.mxu0 %v3334
    %3602 = vmatprep.subr.mxu0 %v3338
    %3603 = vmatpush1.msra.mxu0 %v3337
    %3604 = vmatprep.subr.mxu0 0.0
    %3605 = vmatpush1.msra.mxu0 0.0
    %3606 = vmatprep.subr.mxu0 0.0
    %3607 = vmatpush1.msra.mxu0 0.0
    %3608 = vmatprep.subr.mxu0 0.0
    %3609 = vmatpush1.msra.mxu0 0.0
    %3610 = vmatprep.subr.mxu0 0.0
    %3611 = vmatpush1.msra.mxu0 0.0
    %3612 = vmatprep.subr.mxu0 0.0
    %3613 = vmatpush1.msra.mxu0 0.0
    %3614 = vmatprep.subr.mxu0 0.0
    %3615 = vmatpush1.msra.mxu0 0.0
    %3616 = vmatprep.subr.mxu0 0.0
    %3617 = vmatpush1.msra.mxu0 0.0
    %3618 = vmatprep.subr.mxu0 0.0
    %3619 = vmatpush1.msra.mxu0 0.0
    %3620 = vmatprep.subr.mxu0 0.0
    %3621 = vmatpush1.msra.mxu0 0.0
    %3622 = vmatprep.subr.mxu0 0.0
    %3623 = vmatpush1.msra.mxu0 0.0
    %3624 = vmatprep.subr.mxu0 0.0
    %3625 = vmatpush1.msra.mxu0 0.0
    %3626 = vmatprep.subr.mxu0 0.0
    %3627 = vmatpush1.msra.mxu0 0.0
    %3628 = vmatprep.subr.mxu0 0.0
    %3629 = vmatpush1.msra.mxu0 0.0
    %3630 = vmatprep.subr.mxu0 0.0
    %3631 = vmatpush1.msra.mxu0 0.0
    %3632 = vmatprep.subr.mxu0 0.0
    %3633 = vmatpush1.msra.mxu0 0.0
    %3634 = vmatprep.subr.mxu0 0.0
    %3635 = vmatpush1.msra.mxu0 0.0
    %3636 = vmatprep.mubr.f32.mxu0 0.0
    %3637 = vmatmul.mubr.f32.gmra.mrb[0].mxu0 %v3570
    %v3638 = vpop.f32.mrb[0].mxu0
    %v3639 = vadd.f32 %v3556, %v3638
    %v3640 = vpop.f32.mrb[0].mxu0
    %v3641 = vadd.f32 %v3560, %v3640
    %3642 = vdwg.mxu0
    %3643 = vmatprep.subr.mxu0 0.0
    %3644 = vmatpush1.msra.mxu0 %v3294
    %3645 = vmatprep.subr.mxu0 0.0
    %3646 = vmatpush1.msra.mxu0 %v3297
    %3647 = vmatprep.subr.mxu0 0.0
    %3648 = vmatpush1.msra.mxu0 %v3300
    %3649 = vmatprep.subr.mxu0 0.0
    %3650 = vmatpush1.msra.mxu0 %v3303
    %3651 = vmatprep.subr.mxu0 0.0
    %3652 = vmatpush1.msra.mxu0 %v3306
    %3653 = vmatprep.subr.mxu0 0.0
    %3654 = vmatpush1.msra.mxu0 %v3309
    %3655 = vmatprep.subr.mxu0 0.0
    %3656 = vmatpush1.msra.mxu0 %v3312
    %3657 = vmatprep.subr.mxu0 0.0
    %3658 = vmatpush1.msra.mxu0 %v3315
    %3659 = vmatprep.subr.mxu0 0.0
    %3660 = vmatpush1.msra.mxu0 %v3318
    %3661 = vmatprep.subr.mxu0 0.0
    %3662 = vmatpush1.msra.mxu0 %v3321
    %3663 = vmatprep.subr.mxu0 0.0
    %3664 = vmatpush1.msra.mxu0 %v3324
    %3665 = vmatprep.subr.mxu0 0.0
    %3666 = vmatpush1.msra.mxu0 %v3327
    %3667 = vmatprep.subr.mxu0 0.0
    %3668 = vmatpush1.msra.mxu0 %v3330
    %3669 = vmatprep.subr.mxu0 0.0
    %3670 = vmatpush1.msra.mxu0 %v3333
    %3671 = vmatprep.subr.mxu0 0.0
    %3672 = vmatpush1.msra.mxu0 %v3336
    %3673 = vmatprep.subr.mxu0 0.0
    %3674 = vmatpush1.msra.mxu0 %v3339
    %3675 = vmatprep.subr.mxu0 0.0
    %3676 = vmatpush1.msra.mxu0 0.0
    %3677 = vmatprep.subr.mxu0 0.0
    %3678 = vmatpush1.msra.mxu0 0.0
    %3679 = vmatprep.subr.mxu0 0.0
    %3680 = vmatpush1.msra.mxu0 0.0
    %3681 = vmatprep.subr.mxu0 0.0
    %3682 = vmatpush1.msra.mxu0 0.0
    %3683 = vmatprep.subr.mxu0 0.0
    %3684 = vmatpush1.msra.mxu0 0.0
    %3685 = vmatprep.subr.mxu0 0.0
    %3686 = vmatpush1.msra.mxu0 0.0
    %3687 = vmatprep.subr.mxu0 0.0
    %3688 = vmatpush1.msra.mxu0 0.0
    %3689 = vmatprep.subr.mxu0 0.0
    %3690 = vmatpush1.msra.mxu0 0.0
    %3691 = vmatprep.subr.mxu0 0.0
    %3692 = vmatpush1.msra.mxu0 0.0
    %3693 = vmatprep.subr.mxu0 0.0
    %3694 = vmatpush1.msra.mxu0 0.0
    %3695 = vmatprep.subr.mxu0 0.0
    %3696 = vmatpush1.msra.mxu0 0.0
    %3697 = vmatprep.subr.mxu0 0.0
    %3698 = vmatpush1.msra.mxu0 0.0
    %3699 = vmatprep.subr.mxu0 0.0
    %3700 = vmatpush1.msra.mxu0 0.0
    %3701 = vmatprep.subr.mxu0 0.0
    %3702 = vmatpush1.msra.mxu0 0.0
    %3703 = vmatprep.subr.mxu0 0.0
    %3704 = vmatpush1.msra.mxu0 0.0
    %3705 = vmatprep.subr.mxu0 0.0
    %3706 = vmatpush1.msra.mxu0 0.0
    %3707 = vmatprep.mubr.f32.mxu0 0.0
    %3708 = vmatmul.mubr.f32.gmra.mrb[0].mxu0 %v3570
    %v3709 = vpop.f32.mrb[0].mxu0
    %v3710 = vadd.f32 %v3564, %v3709
    %v3711 = vpop.f32.mrb[0].mxu0
    %3712 = vdwg.mxu0
    %v3714 = vlaneseq
    %v3715 = vshrl.u32 %v3714, 7
    %v3716 = vsub.s32 0, %v3715
    %v3717 = vrot.slane %v3389, %v3716
    %v3718 = vlaneseq
    %v3719 = vshrl.u32 %v3718, 7
    %v3720 = vsub.s32 1, %v3719
    %v3721 = vrot.slane %v3389, %v3720
    %v3722 = vlaneseq
    %v3723 = vshrl.u32 %v3722, 7
    %v3724 = vsub.s32 2, %v3723
    %v3725 = vrot.slane %v3389, %v3724
    %3729 = vmatprep.subr.mxu0 %v3341
    %3730 = vmatpush1.msra.mxu0 %v3340
    %3731 = vmatprep.subr.mxu0 %v3344
    %3732 = vmatpush1.msra.mxu0 %v3343
    %3733 = vmatprep.subr.mxu0 %v3347
    %3734 = vmatpush1.msra.mxu0 %v3346
    %3735 = vmatprep.subr.mxu0 %v3350
    %3736 = vmatpush1.msra.mxu0 %v3349
    %3737 = vmatprep.subr.mxu0 %v3353
    %3738 = vmatpush1.msra.mxu0 %v3352
    %3739 = vmatprep.subr.mxu0 %v3356
    %3740 = vmatpush1.msra.mxu0 %v3355
    %3741 = vmatprep.subr.mxu0 %v3359
    %3742 = vmatpush1.msra.mxu0 %v3358
    %3743 = vmatprep.subr.mxu0 %v3362
    %3744 = vmatpush1.msra.mxu0 %v3361
    %3745 = vmatprep.subr.mxu0 %v3365
    %3746 = vmatpush1.msra.mxu0 %v3364
    %3747 = vmatprep.subr.mxu0 %v3368
    %3748 = vmatpush1.msra.mxu0 %v3367
    %3749 = vmatprep.subr.mxu0 %v3371
    %3750 = vmatpush1.msra.mxu0 %v3370
    %3751 = vmatprep.subr.mxu0 %v3374
    %3752 = vmatpush1.msra.mxu0 %v3373
    %3753 = vmatprep.subr.mxu0 %v3377
    %3754 = vmatpush1.msra.mxu0 %v3376
    %3755 = vmatprep.subr.mxu0 %v3380
    %3756 = vmatpush1.msra.mxu0 %v3379
    %3757 = vmatprep.subr.mxu0 %v3383
    %3758 = vmatpush1.msra.mxu0 %v3382
    %3759 = vmatprep.subr.mxu0 %v3386
    %3760 = vmatpush1.msra.mxu0 %v3385
    %3761 = vmatprep.subr.mxu0 0.0
    %3762 = vmatpush1.msra.mxu0 0.0
    %3763 = vmatprep.subr.mxu0 0.0
    %3764 = vmatpush1.msra.mxu0 0.0
    %3765 = vmatprep.subr.mxu0 0.0
    %3766 = vmatpush1.msra.mxu0 0.0
    %3767 = vmatprep.subr.mxu0 0.0
    %3768 = vmatpush1.msra.mxu0 0.0
    %3769 = vmatprep.subr.mxu0 0.0
    %3770 = vmatpush1.msra.mxu0 0.0
    %3771 = vmatprep.subr.mxu0 0.0
    %3772 = vmatpush1.msra.mxu0 0.0
    %3773 = vmatprep.subr.mxu0 0.0
    %3774 = vmatpush1.msra.mxu0 0.0
    %3775 = vmatprep.subr.mxu0 0.0
    %3776 = vmatpush1.msra.mxu0 0.0
    %3777 = vmatprep.subr.mxu0 0.0
    %3778 = vmatpush1.msra.mxu0 0.0
    %3779 = vmatprep.subr.mxu0 0.0
    %3780 = vmatpush1.msra.mxu0 0.0
    %3781 = vmatprep.subr.mxu0 0.0
    %3782 = vmatpush1.msra.mxu0 0.0
    %3783 = vmatprep.subr.mxu0 0.0
    %3784 = vmatpush1.msra.mxu0 0.0
    %3785 = vmatprep.subr.mxu0 0.0
    %3786 = vmatpush1.msra.mxu0 0.0
    %3787 = vmatprep.subr.mxu0 0.0
    %3788 = vmatpush1.msra.mxu0 0.0
    %3789 = vmatprep.subr.mxu0 0.0
    %3790 = vmatpush1.msra.mxu0 0.0
    %3791 = vmatprep.subr.mxu0 0.0
    %3792 = vmatpush1.msra.mxu0 0.0
    %3793 = vmatprep.mubr.f32.mxu0 0.0
    %3794 = vmatmul.mubr.f32.gmra.mrb[0].mxu0 %v3097
    %v3795 = vpop.f32.mrb[0].mxu0
    %v3796 = vadd.f32 %v3717, %v3795
    %v3797 = vpop.f32.mrb[0].mxu0
    %v3798 = vadd.f32 %v3721, %v3797
    %3799 = vdwg.mxu0
    %3800 = vmatprep.subr.mxu0 0.0
    %3801 = vmatpush1.msra.mxu0 %v3342
    %3802 = vmatprep.subr.mxu0 0.0
    %3803 = vmatpush1.msra.mxu0 %v3345
    %3804 = vmatprep.subr.mxu0 0.0
    %3805 = vmatpush1.msra.mxu0 %v3348
    %3806 = vmatprep.subr.mxu0 0.0
    %3807 = vmatpush1.msra.mxu0 %v3351
    %3808 = vmatprep.subr.mxu0 0.0
    %3809 = vmatpush1.msra.mxu0 %v3354
    %3810 = vmatprep.subr.mxu0 0.0
    %3811 = vmatpush1.msra.mxu0 %v3357
    %3812 = vmatprep.subr.mxu0 0.0
    %3813 = vmatpush1.msra.mxu0 %v3360
    %3814 = vmatprep.subr.mxu0 0.0
    %3815 = vmatpush1.msra.mxu0 %v3363
    %3816 = vmatprep.subr.mxu0 0.0
    %3817 = vmatpush1.msra.mxu0 %v3366
    %3818 = vmatprep.subr.mxu0 0.0
    %3819 = vmatpush1.msra.mxu0 %v3369
    %3820 = vmatprep.subr.mxu0 0.0
    %3821 = vmatpush1.msra.mxu0 %v3372
    %3822 = vmatprep.subr.mxu0 0.0
    %3823 = vmatpush1.msra.mxu0 %v3375
    %3824 = vmatprep.subr.mxu0 0.0
    %3825 = vmatpush1.msra.mxu0 %v3378
    %3826 = vmatprep.subr.mxu0 0.0
    %3827 = vmatpush1.msra.mxu0 %v3381
    %3828 = vmatprep.subr.mxu0 0.0
    %3829 = vmatpush1.msra.mxu0 %v3384
    %3830 = vmatprep.subr.mxu0 0.0
    %3831 = vmatpush1.msra.mxu0 %v3387
    %3832 = vmatprep.subr.mxu0 0.0
    %3833 = vmatpush1.msra.mxu0 0.0
    %3834 = vmatprep.subr.mxu0 0.0
    %3835 = vmatpush1.msra.mxu0 0.0
    %3836 = vmatprep.subr.mxu0 0.0
    %3837 = vmatpush1.msra.mxu0 0.0
    %3838 = vmatprep.subr.mxu0 0.0
    %3839 = vmatpush1.msra.mxu0 0.0
    %3840 = vmatprep.subr.mxu0 0.0
    %3841 = vmatpush1.msra.mxu0 0.0
    %3842 = vmatprep.subr.mxu0 0.0
    %3843 = vmatpush1.msra.mxu0 0.0
    %3844 = vmatprep.subr.mxu0 0.0
    %3845 = vmatpush1.msra.mxu0 0.0
    %3846 = vmatprep.subr.mxu0 0.0
    %3847 = vmatpush1.msra.mxu0 0.0
    %3848 = vmatprep.subr.mxu0 0.0
    %3849 = vmatpush1.msra.mxu0 0.0
    %3850 = vmatprep.subr.mxu0 0.0
    %3851 = vmatpush1.msra.mxu0 0.0
    %3852 = vmatprep.subr.mxu0 0.0
    %3853 = vmatpush1.msra.mxu0 0.0
    %3854 = vmatprep.subr.mxu0 0.0
    %3855 = vmatpush1.msra.mxu0 0.0
    %3856 = vmatprep.subr.mxu0 0.0
    %3857 = vmatpush1.msra.mxu0 0.0
    %3858 = vmatprep.subr.mxu0 0.0
    %3859 = vmatpush1.msra.mxu0 0.0
    %3860 = vmatprep.subr.mxu0 0.0
    %3861 = vmatpush1.msra.mxu0 0.0
    %3862 = vmatprep.subr.mxu0 0.0
    %3863 = vmatpush1.msra.mxu0 0.0
    %3864 = vmatprep.mubr.f32.mxu0 0.0
    %3865 = vmatmul.mubr.f32.gmra.mrb[0].mxu0 %v3097
    %v3866 = vpop.f32.mrb[0].mxu0
    %v3867 = vadd.f32 %v3725, %v3866
    %v3868 = vpop.f32.mrb[0].mxu0
    %3869 = vdwg.mxu0
    %v3870 = vadd.f32 %v3639, %v3796
    %v3871 = vxor.u32 %v3870, 2147483648
    %v3872 = vmul.f32 %v3871, 1.442695
    %v3873 = vpow.pop %v3872
    %v3874 = vadd.f32 %v3873, 1.0
    %v3875 = vrcp.pop %v3874
    %v3876 = vmul.f32 1.0, %v3875
    %v3877 = vadd.f32 %v3641, %v3798
    %v3878 = vxor.u32 %v3877, 2147483648
    %v3879 = vmul.f32 %v3878, 1.442695
    %v3880 = vpow.pop %v3879
    %v3881 = vadd.f32 %v3880, 1.0
    %v3882 = vrcp.pop %v3881
    %v3883 = vmul.f32 1.0, %v3882
    %v3884 = vmul.f32 %v3876, %v3867
    %v3885 = vadd.f32 %v3710, %v3884
    %v3886 = vtanh.pop %v3885
    %v3887 = vsub.f32 1.0, %v3883
    %v3888 = vmul.f32 %v3887, %v3886
    %v3889 = vmul.f32 %v3883, %v3097
    %v3890 = vadd.f32 %v3888, %v3889
    %v3893 = vunpack.c.l.s4 1966171168
    %v3894 = vunpack.c.0.s8 %v3893
    %v3895 = vlaneseq
    %v3896 = vshrl.u32 %v3895, 7
    %v3897 = vsub.s32 %v3894, %v3896
    %v3898 = vrot.slane %v3890, %v3897
    %v3899 = vcombine.high %v3898, %v3898
    %v3901 = vunpack.c.l.s4 1966171168
    %v3902 = vunpack.c.0.s8 %v3901
    %v3903 = vlaneseq
    %v3904 = vshrl.u32 %v3903, 7
    %v3905 = vsub.s32 %v3902, %v3904
    %v3906 = vrot.slane %v3898, %v3905
    %v3908 = vunpack.c.l.s4 1966171168
    %v3909 = vunpack.c.0.s8 %v3908
    %v3910 = vlaneseq
    %v3911 = vshrl.u32 %v3910, 7
    %v3912 = vsub.s32 %v3909, %v3911
    %v3913 = vrot.slane %v3899, %v3912
    %v3914 = vlaneseq
    %v3915 = vshrl.u32 %v3914, 7
    %v3916 = vsub.s32 0, %v3915
    %v3917 = vrot.slane %v3906, %v3916
    %v3918 = vlaneseq
    %v3919 = vshrl.u32 %v3918, 7
    %v3920 = vsub.s32 0, %v3919
    %v3921 = vrot.slane %v3913, %v3920
    %v3924 = vmul.f32 %v1746, %v3917
    %v3925 = vmul.f32 %v3099, %v3921
    %v3926 = vsub.f32 %v1746, %v3917
    %v3927 = vsub.f32 %v3099, %v3921
    %v3928 = vand.u32 2147483647, %v3926
    %v3929 = vand.u32 2147483647, %v3927
    %v3932 = vcombine.low %v3924, %v3925
    %v3936 = vcombine.low %v3928, %v3929
    %3938 = vmatprep.subr.mxu0 0.0
    %3939 = vmatpush1.msra.mxu0 %v3258
    %3940 = vmatprep.subr.mxu0 0.0
    %3941 = vmatpush1.msra.mxu0 %v3259
    %3942 = vmatprep.subr.mxu0 0.0
    %3943 = vmatpush1.msra.mxu0 %v3260
    %3944 = vmatprep.subr.mxu0 0.0
    %3945 = vmatpush1.msra.mxu0 %v3261
    %3946 = vmatprep.subr.mxu0 0.0
    %3947 = vmatpush1.msra.mxu0 %v3262
    %3948 = vmatprep.subr.mxu0 0.0
    %3949 = vmatpush1.msra.mxu0 %v3263
    %3950 = vmatprep.subr.mxu0 0.0
    %3951 = vmatpush1.msra.mxu0 %v3264
    %3952 = vmatprep.subr.mxu0 0.0
    %3953 = vmatpush1.msra.mxu0 %v3265
    %3954 = vmatprep.subr.mxu0 0.0
    %3955 = vmatpush1.msra.mxu0 %v3266
    %3956 = vmatprep.subr.mxu0 0.0
    %3957 = vmatpush1.msra.mxu0 %v3267
    %3958 = vmatprep.subr.mxu0 0.0
    %3959 = vmatpush1.msra.mxu0 %v3268
    %3960 = vmatprep.subr.mxu0 0.0
    %3961 = vmatpush1.msra.mxu0 %v3269
    %3962 = vmatprep.subr.mxu0 0.0
    %3963 = vmatpush1.msra.mxu0 %v3270
    %3964 = vmatprep.subr.mxu0 0.0
    %3965 = vmatpush1.msra.mxu0 %v3271
    %3966 = vmatprep.subr.mxu0 0.0
    %3967 = vmatpush1.msra.mxu0 %v3272
    %3968 = vmatprep.subr.mxu0 0.0
    %3969 = vmatpush1.msra.mxu0 %v3273
    %3970 = vmatprep.subr.mxu0 0.0
    %3971 = vmatpush1.msra.mxu0 %v3274
    %3972 = vmatprep.subr.mxu0 0.0
    %3973 = vmatpush1.msra.mxu0 %v3275
    %3974 = vmatprep.subr.mxu0 0.0
    %3975 = vmatpush1.msra.mxu0 %v3276
    %3976 = vmatprep.subr.mxu0 0.0
    %3977 = vmatpush1.msra.mxu0 %v3277
    %3978 = vmatprep.subr.mxu0 0.0
    %3979 = vmatpush1.msra.mxu0 %v3278
    %3980 = vmatprep.subr.mxu0 0.0
    %3981 = vmatpush1.msra.mxu0 %v3279
    %3982 = vmatprep.subr.mxu0 0.0
    %3983 = vmatpush1.msra.mxu0 %v3280
    %3984 = vmatprep.subr.mxu0 0.0
    %3985 = vmatpush1.msra.mxu0 %v3281
    %3986 = vmatprep.subr.mxu0 0.0
    %3987 = vmatpush1.msra.mxu0 %v3282
    %3988 = vmatprep.subr.mxu0 0.0
    %3989 = vmatpush1.msra.mxu0 %v3283
    %3990 = vmatprep.subr.mxu0 0.0
    %3991 = vmatpush1.msra.mxu0 %v3284
    %3992 = vmatprep.subr.mxu0 0.0
    %3993 = vmatpush1.msra.mxu0 %v3285
    %3994 = vmatprep.subr.mxu0 0.0
    %3995 = vmatpush1.msra.mxu0 %v3286
    %3996 = vmatprep.subr.mxu0 0.0
    %3997 = vmatpush1.msra.mxu0 %v3287
    %3998 = vmatprep.subr.mxu0 0.0
    %3999 = vmatpush1.msra.mxu0 %v3288
    %4000 = vmatprep.subr.mxu0 0.0
    %4001 = vmatpush1.msra.mxu0 %v3289
    %4002 = vmatprep.mubr.f32.mxu0 %v3936
    %4003 = vmatmul.mubr.f32.gmra.mrb[0].mxu0 %v3932
    %v4004 = vpop.f32.mrb[0].mxu0
    %v4005 = vadd.f32 0.0, %v4004
    %v4006 = vpop.f32.mrb[0].mxu0
    %4007 = vdwg.mxu0
    %v4008 = vadd.f32 %v3255, %v4005
    %v4009 = vtanh.pop %v4008
    %v4011 = vcombine.high %v4009, %v4009
    %v4013 = vmul.f32 %v4009, %v3469
    %v4014 = vmul.f32 %v4011, %v3469
    %v4015 = vsel %vm3473, %v4013, 0.0
    %4016 = vadd.xlane.f32.xlu0 %v4015
    %v4017 = vpop.xlane.xlu0 %4016
    %v4018 = vsel %vm3473, %v4014, 0.0
    %4019 = vadd.xlane.f32.xlu0 %v4018
    %v4020 = vpop.xlane.xlu0 %4019
    %v4021 = vadd.f32 %v4017, %v3487
    %v4022 = vadd.f32 %v4020, %v3487
    %v4025 = vlaneseq
    %v4026 = vshrl.u32 %v4025, 7
    %v4027 = vsub.s32 %v438, %v4026
    %v4028 = vrot.slane %v4021, %v4027
    %v4029 = vlaneseq
    %v4030 = vshrl.u32 %v4029, 7
    %v4031 = vsub.s32 %v438, %v4030
    %v4032 = vrot.slane %v4022, %v4031
    %v4033 = vsel %vm3502, %v4032, %v4028
    %v4035 = vsel %vm3491, %v4033, -1e+30
    %v4036 = vsel %vm3506, %v4035, -inf
    %4037 = vmax.xlane.f32.xlu0 %v4036
    %v4038 = vpop.xlane.xlu0 %4037
    %v4039 = vsub.f32 %v4035, %v4038
    %v4040 = vmul.f32 %v4039, 1.442695
    %v4041 = vpow.pop %v4040
    %v4042 = vsel %vm3506, %v4041, 0.0
    %4043 = vadd.xlane.f32.xlu0 %v4042
    %v4044 = vpop.xlane.xlu0 %4043
    %v4045 = vrcp.pop %v4044
    %v4046 = vmul.f32 %v4041, %v4045
    %v4047 = vsel %vm3518, %v4046, 0.0
    %s4048 = scalar_lea.vmem %s25, 2
    %4049 = vst [vmem:[%s4048] sm:$0x3] %v4047
    %v4050 = vlaneseq
    %v4051 = vshrl.u32 %v4050, 7
    %v4052 = vsub.s32 0, %v4051
    %v4053 = vrot.slane %v4046, %v4052
    %4055 = vbcast.lane.b32.xlu0 %v4053, 256
    %v4056 = vpop.permute.xlu0 %4055
    %v4057 = vlaneseq
    %v4058 = vshrl.u32 %v4057, 7
    %v4059 = vsub.s32 1, %v4058
    %v4060 = vrot.slane %v4046, %v4059
    %4062 = vbcast.lane.b32.xlu0 %v4060, 256
    %v4063 = vpop.permute.xlu0 %4062
    %v4064 = vmul.f32 %v4056, %v1746
    %v4065 = vmul.f32 %v4063, %v3099
    %v4066 = vsel %vm3537, %v4064, 0.0
    %v4067 = vrot.slane %v4066, 4
    %v4068 = vadd.f32 %v4066, %v4067
    %v4069 = vrot.slane %v4068, 2
    %v4070 = vadd.f32 %v4068, %v4069
    %v4071 = vrot.slane %v4070, 1
    %v4072 = vadd.f32 %v4070, %v4071
    %v4073 = vsel %vm3537, %v4065, 0.0
    %v4074 = vrot.slane %v4073, 4
    %v4075 = vadd.f32 %v4073, %v4074
    %v4076 = vrot.slane %v4075, 2
    %v4077 = vadd.f32 %v4075, %v4076
    %v4078 = vrot.slane %v4077, 1
    %v4079 = vadd.f32 %v4077, %v4078
    %v4082 = vsel %vm3502, %v4079, %v4072
    %4084 = vmatprep.subr.mxu0 %v3293
    %4085 = vmatpush1.msra.mxu0 %v3292
    %4086 = vmatprep.subr.mxu0 %v3296
    %4087 = vmatpush1.msra.mxu0 %v3295
    %4088 = vmatprep.subr.mxu0 %v3299
    %4089 = vmatpush1.msra.mxu0 %v3298
    %4090 = vmatprep.subr.mxu0 %v3302
    %4091 = vmatpush1.msra.mxu0 %v3301
    %4092 = vmatprep.subr.mxu0 %v3305
    %4093 = vmatpush1.msra.mxu0 %v3304
    %4094 = vmatprep.subr.mxu0 %v3308
    %4095 = vmatpush1.msra.mxu0 %v3307
    %4096 = vmatprep.subr.mxu0 %v3311
    %4097 = vmatpush1.msra.mxu0 %v3310
    %4098 = vmatprep.subr.mxu0 %v3314
    %4099 = vmatpush1.msra.mxu0 %v3313
    %4100 = vmatprep.subr.mxu0 %v3317
    %4101 = vmatpush1.msra.mxu0 %v3316
    %4102 = vmatprep.subr.mxu0 %v3320
    %4103 = vmatpush1.msra.mxu0 %v3319
    %4104 = vmatprep.subr.mxu0 %v3323
    %4105 = vmatpush1.msra.mxu0 %v3322
    %4106 = vmatprep.subr.mxu0 %v3326
    %4107 = vmatpush1.msra.mxu0 %v3325
    %4108 = vmatprep.subr.mxu0 %v3329
    %4109 = vmatpush1.msra.mxu0 %v3328
    %4110 = vmatprep.subr.mxu0 %v3332
    %4111 = vmatpush1.msra.mxu0 %v3331
    %4112 = vmatprep.subr.mxu0 %v3335
    %4113 = vmatpush1.msra.mxu0 %v3334
    %4114 = vmatprep.subr.mxu0 %v3338
    %4115 = vmatpush1.msra.mxu0 %v3337
    %4116 = vmatprep.subr.mxu0 0.0
    %4117 = vmatpush1.msra.mxu0 0.0
    %4118 = vmatprep.subr.mxu0 0.0
    %4119 = vmatpush1.msra.mxu0 0.0
    %4120 = vmatprep.subr.mxu0 0.0
    %4121 = vmatpush1.msra.mxu0 0.0
    %4122 = vmatprep.subr.mxu0 0.0
    %4123 = vmatpush1.msra.mxu0 0.0
    %4124 = vmatprep.subr.mxu0 0.0
    %4125 = vmatpush1.msra.mxu0 0.0
    %4126 = vmatprep.subr.mxu0 0.0
    %4127 = vmatpush1.msra.mxu0 0.0
    %4128 = vmatprep.subr.mxu0 0.0
    %4129 = vmatpush1.msra.mxu0 0.0
    %4130 = vmatprep.subr.mxu0 0.0
    %4131 = vmatpush1.msra.mxu0 0.0
    %4132 = vmatprep.subr.mxu0 0.0
    %4133 = vmatpush1.msra.mxu0 0.0
    %4134 = vmatprep.subr.mxu0 0.0
    %4135 = vmatpush1.msra.mxu0 0.0
    %4136 = vmatprep.subr.mxu0 0.0
    %4137 = vmatpush1.msra.mxu0 0.0
    %4138 = vmatprep.subr.mxu0 0.0
    %4139 = vmatpush1.msra.mxu0 0.0
    %4140 = vmatprep.subr.mxu0 0.0
    %4141 = vmatpush1.msra.mxu0 0.0
    %4142 = vmatprep.subr.mxu0 0.0
    %4143 = vmatpush1.msra.mxu0 0.0
    %4144 = vmatprep.subr.mxu0 0.0
    %4145 = vmatpush1.msra.mxu0 0.0
    %4146 = vmatprep.subr.mxu0 0.0
    %4147 = vmatpush1.msra.mxu0 0.0
    %4148 = vmatprep.mubr.f32.mxu0 0.0
    %4149 = vmatmul.mubr.f32.gmra.mrb[0].mxu0 %v4082
    %v4150 = vpop.f32.mrb[0].mxu0
    %v4151 = vadd.f32 %v3556, %v4150
    %v4152 = vpop.f32.mrb[0].mxu0
    %v4153 = vadd.f32 %v3560, %v4152
    %4154 = vdwg.mxu0
    %4155 = vmatprep.subr.mxu0 0.0
    %4156 = vmatpush1.msra.mxu0 %v3294
    %4157 = vmatprep.subr.mxu0 0.0
    %4158 = vmatpush1.msra.mxu0 %v3297
    %4159 = vmatprep.subr.mxu0 0.0
    %4160 = vmatpush1.msra.mxu0 %v3300
    %4161 = vmatprep.subr.mxu0 0.0
    %4162 = vmatpush1.msra.mxu0 %v3303
    %4163 = vmatprep.subr.mxu0 0.0
    %4164 = vmatpush1.msra.mxu0 %v3306
    %4165 = vmatprep.subr.mxu0 0.0
    %4166 = vmatpush1.msra.mxu0 %v3309
    %4167 = vmatprep.subr.mxu0 0.0
    %4168 = vmatpush1.msra.mxu0 %v3312
    %4169 = vmatprep.subr.mxu0 0.0
    %4170 = vmatpush1.msra.mxu0 %v3315
    %4171 = vmatprep.subr.mxu0 0.0
    %4172 = vmatpush1.msra.mxu0 %v3318
    %4173 = vmatprep.subr.mxu0 0.0
    %4174 = vmatpush1.msra.mxu0 %v3321
    %4175 = vmatprep.subr.mxu0 0.0
    %4176 = vmatpush1.msra.mxu0 %v3324
    %4177 = vmatprep.subr.mxu0 0.0
    %4178 = vmatpush1.msra.mxu0 %v3327
    %4179 = vmatprep.subr.mxu0 0.0
    %4180 = vmatpush1.msra.mxu0 %v3330
    %4181 = vmatprep.subr.mxu0 0.0
    %4182 = vmatpush1.msra.mxu0 %v3333
    %4183 = vmatprep.subr.mxu0 0.0
    %4184 = vmatpush1.msra.mxu0 %v3336
    %4185 = vmatprep.subr.mxu0 0.0
    %4186 = vmatpush1.msra.mxu0 %v3339
    %4187 = vmatprep.subr.mxu0 0.0
    %4188 = vmatpush1.msra.mxu0 0.0
    %4189 = vmatprep.subr.mxu0 0.0
    %4190 = vmatpush1.msra.mxu0 0.0
    %4191 = vmatprep.subr.mxu0 0.0
    %4192 = vmatpush1.msra.mxu0 0.0
    %4193 = vmatprep.subr.mxu0 0.0
    %4194 = vmatpush1.msra.mxu0 0.0
    %4195 = vmatprep.subr.mxu0 0.0
    %4196 = vmatpush1.msra.mxu0 0.0
    %4197 = vmatprep.subr.mxu0 0.0
    %4198 = vmatpush1.msra.mxu0 0.0
    %4199 = vmatprep.subr.mxu0 0.0
    %4200 = vmatpush1.msra.mxu0 0.0
    %4201 = vmatprep.subr.mxu0 0.0
    %4202 = vmatpush1.msra.mxu0 0.0
    %4203 = vmatprep.subr.mxu0 0.0
    %4204 = vmatpush1.msra.mxu0 0.0
    %4205 = vmatprep.subr.mxu0 0.0
    %4206 = vmatpush1.msra.mxu0 0.0
    %4207 = vmatprep.subr.mxu0 0.0
    %4208 = vmatpush1.msra.mxu0 0.0
    %4209 = vmatprep.subr.mxu0 0.0
    %4210 = vmatpush1.msra.mxu0 0.0
    %4211 = vmatprep.subr.mxu0 0.0
    %4212 = vmatpush1.msra.mxu0 0.0
    %4213 = vmatprep.subr.mxu0 0.0
    %4214 = vmatpush1.msra.mxu0 0.0
    %4215 = vmatprep.subr.mxu0 0.0
    %4216 = vmatpush1.msra.mxu0 0.0
    %4217 = vmatprep.subr.mxu0 0.0
    %4218 = vmatpush1.msra.mxu0 0.0
    %4219 = vmatprep.mubr.f32.mxu0 0.0
    %4220 = vmatmul.mubr.f32.gmra.mrb[0].mxu0 %v4082
    %v4221 = vpop.f32.mrb[0].mxu0
    %v4222 = vadd.f32 %v3564, %v4221
    %v4223 = vpop.f32.mrb[0].mxu0
    %4224 = vdwg.mxu0
    %4225 = vmatprep.subr.mxu0 %v3341
    %4226 = vmatpush1.msra.mxu0 %v3340
    %4227 = vmatprep.subr.mxu0 %v3344
    %4228 = vmatpush1.msra.mxu0 %v3343
    %4229 = vmatprep.subr.mxu0 %v3347
    %4230 = vmatpush1.msra.mxu0 %v3346
    %4231 = vmatprep.subr.mxu0 %v3350
    %4232 = vmatpush1.msra.mxu0 %v3349
    %4233 = vmatprep.subr.mxu0 %v3353
    %4234 = vmatpush1.msra.mxu0 %v3352
    %4235 = vmatprep.subr.mxu0 %v3356
    %4236 = vmatpush1.msra.mxu0 %v3355
    %4237 = vmatprep.subr.mxu0 %v3359
    %4238 = vmatpush1.msra.mxu0 %v3358
    %4239 = vmatprep.subr.mxu0 %v3362
    %4240 = vmatpush1.msra.mxu0 %v3361
    %4241 = vmatprep.subr.mxu0 %v3365
    %4242 = vmatpush1.msra.mxu0 %v3364
    %4243 = vmatprep.subr.mxu0 %v3368
    %4244 = vmatpush1.msra.mxu0 %v3367
    %4245 = vmatprep.subr.mxu0 %v3371
    %4246 = vmatpush1.msra.mxu0 %v3370
    %4247 = vmatprep.subr.mxu0 %v3374
    %4248 = vmatpush1.msra.mxu0 %v3373
    %4249 = vmatprep.subr.mxu0 %v3377
    %4250 = vmatpush1.msra.mxu0 %v3376
    %4251 = vmatprep.subr.mxu0 %v3380
    %4252 = vmatpush1.msra.mxu0 %v3379
    %4253 = vmatprep.subr.mxu0 %v3383
    %4254 = vmatpush1.msra.mxu0 %v3382
    %4255 = vmatprep.subr.mxu0 %v3386
    %4256 = vmatpush1.msra.mxu0 %v3385
    %4257 = vmatprep.subr.mxu0 0.0
    %4258 = vmatpush1.msra.mxu0 0.0
    %4259 = vmatprep.subr.mxu0 0.0
    %4260 = vmatpush1.msra.mxu0 0.0
    %4261 = vmatprep.subr.mxu0 0.0
    %4262 = vmatpush1.msra.mxu0 0.0
    %4263 = vmatprep.subr.mxu0 0.0
    %4264 = vmatpush1.msra.mxu0 0.0
    %4265 = vmatprep.subr.mxu0 0.0
    %4266 = vmatpush1.msra.mxu0 0.0
    %4267 = vmatprep.subr.mxu0 0.0
    %4268 = vmatpush1.msra.mxu0 0.0
    %4269 = vmatprep.subr.mxu0 0.0
    %4270 = vmatpush1.msra.mxu0 0.0
    %4271 = vmatprep.subr.mxu0 0.0
    %4272 = vmatpush1.msra.mxu0 0.0
    %4273 = vmatprep.subr.mxu0 0.0
    %4274 = vmatpush1.msra.mxu0 0.0
    %4275 = vmatprep.subr.mxu0 0.0
    %4276 = vmatpush1.msra.mxu0 0.0
    %4277 = vmatprep.subr.mxu0 0.0
    %4278 = vmatpush1.msra.mxu0 0.0
    %4279 = vmatprep.subr.mxu0 0.0
    %4280 = vmatpush1.msra.mxu0 0.0
    %4281 = vmatprep.subr.mxu0 0.0
    %4282 = vmatpush1.msra.mxu0 0.0
    %4283 = vmatprep.subr.mxu0 0.0
    %4284 = vmatpush1.msra.mxu0 0.0
    %4285 = vmatprep.subr.mxu0 0.0
    %4286 = vmatpush1.msra.mxu0 0.0
    %4287 = vmatprep.subr.mxu0 0.0
    %4288 = vmatpush1.msra.mxu0 0.0
    %4289 = vmatprep.mubr.f32.mxu0 0.0
    %4290 = vmatmul.mubr.f32.gmra.mrb[0].mxu0 %v3890
    %v4291 = vpop.f32.mrb[0].mxu0
    %v4292 = vadd.f32 %v3717, %v4291
    %v4293 = vpop.f32.mrb[0].mxu0
    %v4294 = vadd.f32 %v3721, %v4293
    %4295 = vdwg.mxu0
    %4296 = vmatprep.subr.mxu0 0.0
    %4297 = vmatpush1.msra.mxu0 %v3342
    %4298 = vmatprep.subr.mxu0 0.0
    %4299 = vmatpush1.msra.mxu0 %v3345
    %4300 = vmatprep.subr.mxu0 0.0
    %4301 = vmatpush1.msra.mxu0 %v3348
    %4302 = vmatprep.subr.mxu0 0.0
    %4303 = vmatpush1.msra.mxu0 %v3351
    %4304 = vmatprep.subr.mxu0 0.0
    %4305 = vmatpush1.msra.mxu0 %v3354
    %4306 = vmatprep.subr.mxu0 0.0
    %4307 = vmatpush1.msra.mxu0 %v3357
    %4308 = vmatprep.subr.mxu0 0.0
    %4309 = vmatpush1.msra.mxu0 %v3360
    %4310 = vmatprep.subr.mxu0 0.0
    %4311 = vmatpush1.msra.mxu0 %v3363
    %4312 = vmatprep.subr.mxu0 0.0
    %4313 = vmatpush1.msra.mxu0 %v3366
    %4314 = vmatprep.subr.mxu0 0.0
    %4315 = vmatpush1.msra.mxu0 %v3369
    %4316 = vmatprep.subr.mxu0 0.0
    %4317 = vmatpush1.msra.mxu0 %v3372
    %4318 = vmatprep.subr.mxu0 0.0
    %4319 = vmatpush1.msra.mxu0 %v3375
    %4320 = vmatprep.subr.mxu0 0.0
    %4321 = vmatpush1.msra.mxu0 %v3378
    %4322 = vmatprep.subr.mxu0 0.0
    %4323 = vmatpush1.msra.mxu0 %v3381
    %4324 = vmatprep.subr.mxu0 0.0
    %4325 = vmatpush1.msra.mxu0 %v3384
    %4326 = vmatprep.subr.mxu0 0.0
    %4327 = vmatpush1.msra.mxu0 %v3387
    %4328 = vmatprep.subr.mxu0 0.0
    %4329 = vmatpush1.msra.mxu0 0.0
    %4330 = vmatprep.subr.mxu0 0.0
    %4331 = vmatpush1.msra.mxu0 0.0
    %4332 = vmatprep.subr.mxu0 0.0
    %4333 = vmatpush1.msra.mxu0 0.0
    %4334 = vmatprep.subr.mxu0 0.0
    %4335 = vmatpush1.msra.mxu0 0.0
    %4336 = vmatprep.subr.mxu0 0.0
    %4337 = vmatpush1.msra.mxu0 0.0
    %4338 = vmatprep.subr.mxu0 0.0
    %4339 = vmatpush1.msra.mxu0 0.0
    %4340 = vmatprep.subr.mxu0 0.0
    %4341 = vmatpush1.msra.mxu0 0.0
    %4342 = vmatprep.subr.mxu0 0.0
    %4343 = vmatpush1.msra.mxu0 0.0
    %4344 = vmatprep.subr.mxu0 0.0
    %4345 = vmatpush1.msra.mxu0 0.0
    %4346 = vmatprep.subr.mxu0 0.0
    %4347 = vmatpush1.msra.mxu0 0.0
    %4348 = vmatprep.subr.mxu0 0.0
    %4349 = vmatpush1.msra.mxu0 0.0
    %4350 = vmatprep.subr.mxu0 0.0
    %4351 = vmatpush1.msra.mxu0 0.0
    %4352 = vmatprep.subr.mxu0 0.0
    %4353 = vmatpush1.msra.mxu0 0.0
    %4354 = vmatprep.subr.mxu0 0.0
    %4355 = vmatpush1.msra.mxu0 0.0
    %4356 = vmatprep.subr.mxu0 0.0
    %4357 = vmatpush1.msra.mxu0 0.0
    %4358 = vmatprep.subr.mxu0 0.0
    %4359 = vmatpush1.msra.mxu0 0.0
    %4360 = vmatprep.mubr.f32.mxu0 0.0
    %4361 = vmatmul.mubr.f32.gmra.mrb[0].mxu0 %v3890
    %v4362 = vpop.f32.mrb[0].mxu0
    %v4363 = vadd.f32 %v3725, %v4362
    %v4364 = vpop.f32.mrb[0].mxu0
    %4365 = vdwg.mxu0
    %v4366 = vadd.f32 %v4151, %v4292
    %v4367 = vxor.u32 %v4366, 2147483648
    %v4368 = vmul.f32 %v4367, 1.442695
    %v4369 = vpow.pop %v4368
    %v4370 = vadd.f32 %v4369, 1.0
    %v4371 = vrcp.pop %v4370
    %v4372 = vmul.f32 1.0, %v4371
    %v4373 = vadd.f32 %v4153, %v4294
    %v4374 = vxor.u32 %v4373, 2147483648
    %v4375 = vmul.f32 %v4374, 1.442695
    %v4376 = vpow.pop %v4375
    %v4377 = vadd.f32 %v4376, 1.0
    %v4378 = vrcp.pop %v4377
    %v4379 = vmul.f32 1.0, %v4378
    %v4380 = vmul.f32 %v4372, %v4363
    %v4381 = vadd.f32 %v4222, %v4380
    %v4382 = vtanh.pop %v4381
    %v4383 = vsub.f32 1.0, %v4379
    %v4384 = vmul.f32 %v4383, %v4382
    %v4385 = vmul.f32 %v4379, %v3890
    %v4386 = vadd.f32 %v4384, %v4385
    %v4389 = vunpack.c.l.s4 1966171168
    %v4390 = vunpack.c.0.s8 %v4389
    %v4391 = vlaneseq
    %v4392 = vshrl.u32 %v4391, 7
    %v4393 = vsub.s32 %v4390, %v4392
    %v4394 = vrot.slane %v4386, %v4393
    %v4395 = vcombine.high %v4394, %v4394
    %v4397 = vunpack.c.l.s4 1966171168
    %v4398 = vunpack.c.0.s8 %v4397
    %v4399 = vlaneseq
    %v4400 = vshrl.u32 %v4399, 7
    %v4401 = vsub.s32 %v4398, %v4400
    %v4402 = vrot.slane %v4394, %v4401
    %v4404 = vunpack.c.l.s4 1966171168
    %v4405 = vunpack.c.0.s8 %v4404
    %v4406 = vlaneseq
    %v4407 = vshrl.u32 %v4406, 7
    %v4408 = vsub.s32 %v4405, %v4407
    %v4409 = vrot.slane %v4395, %v4408
    %v4410 = vlaneseq
    %v4411 = vshrl.u32 %v4410, 7
    %v4412 = vsub.s32 0, %v4411
    %v4413 = vrot.slane %v4402, %v4412
    %v4414 = vlaneseq
    %v4415 = vshrl.u32 %v4414, 7
    %v4416 = vsub.s32 0, %v4415
    %v4417 = vrot.slane %v4409, %v4416
    %v4420 = vmul.f32 %v1746, %v4413
    %v4421 = vmul.f32 %v3099, %v4417
    %v4422 = vsub.f32 %v1746, %v4413
    %v4423 = vsub.f32 %v3099, %v4417
    %v4424 = vand.u32 2147483647, %v4422
    %v4425 = vand.u32 2147483647, %v4423
    %v4428 = vcombine.low %v4420, %v4421
    %v4432 = vcombine.low %v4424, %v4425
    %4434 = vmatprep.subr.mxu0 0.0
    %4435 = vmatpush1.msra.mxu0 %v3258
    %4436 = vmatprep.subr.mxu0 0.0
    %4437 = vmatpush1.msra.mxu0 %v3259
    %4438 = vmatprep.subr.mxu0 0.0
    %4439 = vmatpush1.msra.mxu0 %v3260
    %4440 = vmatprep.subr.mxu0 0.0
    %4441 = vmatpush1.msra.mxu0 %v3261
    %4442 = vmatprep.subr.mxu0 0.0
    %4443 = vmatpush1.msra.mxu0 %v3262
    %4444 = vmatprep.subr.mxu0 0.0
    %4445 = vmatpush1.msra.mxu0 %v3263
    %4446 = vmatprep.subr.mxu0 0.0
    %4447 = vmatpush1.msra.mxu0 %v3264
    %4448 = vmatprep.subr.mxu0 0.0
    %4449 = vmatpush1.msra.mxu0 %v3265
    %4450 = vmatprep.subr.mxu0 0.0
    %4451 = vmatpush1.msra.mxu0 %v3266
    %4452 = vmatprep.subr.mxu0 0.0
    %4453 = vmatpush1.msra.mxu0 %v3267
    %4454 = vmatprep.subr.mxu0 0.0
    %4455 = vmatpush1.msra.mxu0 %v3268
    %4456 = vmatprep.subr.mxu0 0.0
    %4457 = vmatpush1.msra.mxu0 %v3269
    %4458 = vmatprep.subr.mxu0 0.0
    %4459 = vmatpush1.msra.mxu0 %v3270
    %4460 = vmatprep.subr.mxu0 0.0
    %4461 = vmatpush1.msra.mxu0 %v3271
    %4462 = vmatprep.subr.mxu0 0.0
    %4463 = vmatpush1.msra.mxu0 %v3272
    %4464 = vmatprep.subr.mxu0 0.0
    %4465 = vmatpush1.msra.mxu0 %v3273
    %4466 = vmatprep.subr.mxu0 0.0
    %4467 = vmatpush1.msra.mxu0 %v3274
    %4468 = vmatprep.subr.mxu0 0.0
    %4469 = vmatpush1.msra.mxu0 %v3275
    %4470 = vmatprep.subr.mxu0 0.0
    %4471 = vmatpush1.msra.mxu0 %v3276
    %4472 = vmatprep.subr.mxu0 0.0
    %4473 = vmatpush1.msra.mxu0 %v3277
    %4474 = vmatprep.subr.mxu0 0.0
    %4475 = vmatpush1.msra.mxu0 %v3278
    %4476 = vmatprep.subr.mxu0 0.0
    %4477 = vmatpush1.msra.mxu0 %v3279
    %4478 = vmatprep.subr.mxu0 0.0
    %4479 = vmatpush1.msra.mxu0 %v3280
    %4480 = vmatprep.subr.mxu0 0.0
    %4481 = vmatpush1.msra.mxu0 %v3281
    %4482 = vmatprep.subr.mxu0 0.0
    %4483 = vmatpush1.msra.mxu0 %v3282
    %4484 = vmatprep.subr.mxu0 0.0
    %4485 = vmatpush1.msra.mxu0 %v3283
    %4486 = vmatprep.subr.mxu0 0.0
    %4487 = vmatpush1.msra.mxu0 %v3284
    %4488 = vmatprep.subr.mxu0 0.0
    %4489 = vmatpush1.msra.mxu0 %v3285
    %4490 = vmatprep.subr.mxu0 0.0
    %4491 = vmatpush1.msra.mxu0 %v3286
    %4492 = vmatprep.subr.mxu0 0.0
    %4493 = vmatpush1.msra.mxu0 %v3287
    %4494 = vmatprep.subr.mxu0 0.0
    %4495 = vmatpush1.msra.mxu0 %v3288
    %4496 = vmatprep.subr.mxu0 0.0
    %4497 = vmatpush1.msra.mxu0 %v3289
    %4498 = vmatprep.mubr.f32.mxu0 %v4432
    %4499 = vmatmul.mubr.f32.gmra.mrb[0].mxu0 %v4428
    %v4500 = vpop.f32.mrb[0].mxu0
    %v4501 = vadd.f32 0.0, %v4500
    %v4502 = vpop.f32.mrb[0].mxu0
    %4503 = vdwg.mxu0
    %v4504 = vadd.f32 %v3255, %v4501
    %v4505 = vtanh.pop %v4504
    %v4507 = vcombine.high %v4505, %v4505
    %v4509 = vmul.f32 %v4505, %v3469
    %v4510 = vmul.f32 %v4507, %v3469
    %v4511 = vsel %vm3473, %v4509, 0.0
    %4512 = vadd.xlane.f32.xlu0 %v4511
    %v4513 = vpop.xlane.xlu0 %4512
    %v4514 = vsel %vm3473, %v4510, 0.0
    %4515 = vadd.xlane.f32.xlu0 %v4514
    %v4516 = vpop.xlane.xlu0 %4515
    %v4517 = vadd.f32 %v4513, %v3487
    %v4518 = vadd.f32 %v4516, %v3487
    %v4521 = vlaneseq
    %v4522 = vshrl.u32 %v4521, 7
    %v4523 = vsub.s32 %v438, %v4522
    %v4524 = vrot.slane %v4517, %v4523
    %v4525 = vlaneseq
    %v4526 = vshrl.u32 %v4525, 7
    %v4527 = vsub.s32 %v438, %v4526
    %v4528 = vrot.slane %v4518, %v4527
    %v4529 = vsel %vm3502, %v4528, %v4524
    %v4531 = vsel %vm3491, %v4529, -1e+30
    %v4532 = vsel %vm3506, %v4531, -inf
    %4533 = vmax.xlane.f32.xlu0 %v4532
    %v4534 = vpop.xlane.xlu0 %4533
    %v4535 = vsub.f32 %v4531, %v4534
    %v4536 = vmul.f32 %v4535, 1.442695
    %v4537 = vpow.pop %v4536
    %v4538 = vsel %vm3506, %v4537, 0.0
    %4539 = vadd.xlane.f32.xlu0 %v4538
    %v4540 = vpop.xlane.xlu0 %4539
    %v4541 = vrcp.pop %v4540
    %v4542 = vmul.f32 %v4537, %v4541
    %v4543 = vsel %vm3518, %v4542, 0.0
    %s4544 = scalar_lea.vmem %s25, 4
    %4545 = vst [vmem:[%s4544] sm:$0x3] %v4543
    %v4546 = vlaneseq
    %v4547 = vshrl.u32 %v4546, 7
    %v4548 = vsub.s32 0, %v4547
    %v4549 = vrot.slane %v4542, %v4548
    %4551 = vbcast.lane.b32.xlu0 %v4549, 256
    %v4552 = vpop.permute.xlu0 %4551
    %v4553 = vlaneseq
    %v4554 = vshrl.u32 %v4553, 7
    %v4555 = vsub.s32 1, %v4554
    %v4556 = vrot.slane %v4542, %v4555
    %4558 = vbcast.lane.b32.xlu0 %v4556, 256
    %v4559 = vpop.permute.xlu0 %4558
    %v4560 = vmul.f32 %v4552, %v1746
    %v4561 = vmul.f32 %v4559, %v3099
    %v4562 = vsel %vm3537, %v4560, 0.0
    %v4563 = vrot.slane %v4562, 4
    %v4564 = vadd.f32 %v4562, %v4563
    %v4565 = vrot.slane %v4564, 2
    %v4566 = vadd.f32 %v4564, %v4565
    %v4567 = vrot.slane %v4566, 1
    %v4568 = vadd.f32 %v4566, %v4567
    %v4569 = vsel %vm3537, %v4561, 0.0
    %v4570 = vrot.slane %v4569, 4
    %v4571 = vadd.f32 %v4569, %v4570
    %v4572 = vrot.slane %v4571, 2
    %v4573 = vadd.f32 %v4571, %v4572
    %v4574 = vrot.slane %v4573, 1
    %v4575 = vadd.f32 %v4573, %v4574
    %v4578 = vsel %vm3502, %v4575, %v4568
    %4580 = vmatprep.subr.mxu0 %v3293
    %4581 = vmatpush1.msra.mxu0 %v3292
    %4582 = vmatprep.subr.mxu0 %v3296
    %4583 = vmatpush1.msra.mxu0 %v3295
    %4584 = vmatprep.subr.mxu0 %v3299
    %4585 = vmatpush1.msra.mxu0 %v3298
    %4586 = vmatprep.subr.mxu0 %v3302
    %4587 = vmatpush1.msra.mxu0 %v3301
    %4588 = vmatprep.subr.mxu0 %v3305
    %4589 = vmatpush1.msra.mxu0 %v3304
    %4590 = vmatprep.subr.mxu0 %v3308
    %4591 = vmatpush1.msra.mxu0 %v3307
    %4592 = vmatprep.subr.mxu0 %v3311
    %4593 = vmatpush1.msra.mxu0 %v3310
    %4594 = vmatprep.subr.mxu0 %v3314
    %4595 = vmatpush1.msra.mxu0 %v3313
    %4596 = vmatprep.subr.mxu0 %v3317
    %4597 = vmatpush1.msra.mxu0 %v3316
    %4598 = vmatprep.subr.mxu0 %v3320
    %4599 = vmatpush1.msra.mxu0 %v3319
    %4600 = vmatprep.subr.mxu0 %v3323
    %4601 = vmatpush1.msra.mxu0 %v3322
    %4602 = vmatprep.subr.mxu0 %v3326
    %4603 = vmatpush1.msra.mxu0 %v3325
    %4604 = vmatprep.subr.mxu0 %v3329
    %4605 = vmatpush1.msra.mxu0 %v3328
    %4606 = vmatprep.subr.mxu0 %v3332
    %4607 = vmatpush1.msra.mxu0 %v3331
    %4608 = vmatprep.subr.mxu0 %v3335
    %4609 = vmatpush1.msra.mxu0 %v3334
    %4610 = vmatprep.subr.mxu0 %v3338
    %4611 = vmatpush1.msra.mxu0 %v3337
    %4612 = vmatprep.subr.mxu0 0.0
    %4613 = vmatpush1.msra.mxu0 0.0
    %4614 = vmatprep.subr.mxu0 0.0
    %4615 = vmatpush1.msra.mxu0 0.0
    %4616 = vmatprep.subr.mxu0 0.0
    %4617 = vmatpush1.msra.mxu0 0.0
    %4618 = vmatprep.subr.mxu0 0.0
    %4619 = vmatpush1.msra.mxu0 0.0
    %4620 = vmatprep.subr.mxu0 0.0
    %4621 = vmatpush1.msra.mxu0 0.0
    %4622 = vmatprep.subr.mxu0 0.0
    %4623 = vmatpush1.msra.mxu0 0.0
    %4624 = vmatprep.subr.mxu0 0.0
    %4625 = vmatpush1.msra.mxu0 0.0
    %4626 = vmatprep.subr.mxu0 0.0
    %4627 = vmatpush1.msra.mxu0 0.0
    %4628 = vmatprep.subr.mxu0 0.0
    %4629 = vmatpush1.msra.mxu0 0.0
    %4630 = vmatprep.subr.mxu0 0.0
    %4631 = vmatpush1.msra.mxu0 0.0
    %4632 = vmatprep.subr.mxu0 0.0
    %4633 = vmatpush1.msra.mxu0 0.0
    %4634 = vmatprep.subr.mxu0 0.0
    %4635 = vmatpush1.msra.mxu0 0.0
    %4636 = vmatprep.subr.mxu0 0.0
    %4637 = vmatpush1.msra.mxu0 0.0
    %4638 = vmatprep.subr.mxu0 0.0
    %4639 = vmatpush1.msra.mxu0 0.0
    %4640 = vmatprep.subr.mxu0 0.0
    %4641 = vmatpush1.msra.mxu0 0.0
    %4642 = vmatprep.subr.mxu0 0.0
    %4643 = vmatpush1.msra.mxu0 0.0
    %4644 = vmatprep.mubr.f32.mxu0 0.0
    %4645 = vmatmul.mubr.f32.gmra.mrb[0].mxu0 %v4578
    %v4646 = vpop.f32.mrb[0].mxu0
    %v4647 = vadd.f32 %v3556, %v4646
    %v4648 = vpop.f32.mrb[0].mxu0
    %v4649 = vadd.f32 %v3560, %v4648
    %4650 = vdwg.mxu0
    %4651 = vmatprep.subr.mxu0 0.0
    %4652 = vmatpush1.msra.mxu0 %v3294
    %4653 = vmatprep.subr.mxu0 0.0
    %4654 = vmatpush1.msra.mxu0 %v3297
    %4655 = vmatprep.subr.mxu0 0.0
    %4656 = vmatpush1.msra.mxu0 %v3300
    %4657 = vmatprep.subr.mxu0 0.0
    %4658 = vmatpush1.msra.mxu0 %v3303
    %4659 = vmatprep.subr.mxu0 0.0
    %4660 = vmatpush1.msra.mxu0 %v3306
    %4661 = vmatprep.subr.mxu0 0.0
    %4662 = vmatpush1.msra.mxu0 %v3309
    %4663 = vmatprep.subr.mxu0 0.0
    %4664 = vmatpush1.msra.mxu0 %v3312
    %4665 = vmatprep.subr.mxu0 0.0
    %4666 = vmatpush1.msra.mxu0 %v3315
    %4667 = vmatprep.subr.mxu0 0.0
    %4668 = vmatpush1.msra.mxu0 %v3318
    %4669 = vmatprep.subr.mxu0 0.0
    %4670 = vmatpush1.msra.mxu0 %v3321
    %4671 = vmatprep.subr.mxu0 0.0
    %4672 = vmatpush1.msra.mxu0 %v3324
    %4673 = vmatprep.subr.mxu0 0.0
    %4674 = vmatpush1.msra.mxu0 %v3327
    %4675 = vmatprep.subr.mxu0 0.0
    %4676 = vmatpush1.msra.mxu0 %v3330
    %4677 = vmatprep.subr.mxu0 0.0
    %4678 = vmatpush1.msra.mxu0 %v3333
    %4679 = vmatprep.subr.mxu0 0.0
    %4680 = vmatpush1.msra.mxu0 %v3336
    %4681 = vmatprep.subr.mxu0 0.0
    %4682 = vmatpush1.msra.mxu0 %v3339
    %4683 = vmatprep.subr.mxu0 0.0
    %4684 = vmatpush1.msra.mxu0 0.0
    %4685 = vmatprep.subr.mxu0 0.0
    %4686 = vmatpush1.msra.mxu0 0.0
    %4687 = vmatprep.subr.mxu0 0.0
    %4688 = vmatpush1.msra.mxu0 0.0
    %4689 = vmatprep.subr.mxu0 0.0
    %4690 = vmatpush1.msra.mxu0 0.0
    %4691 = vmatprep.subr.mxu0 0.0
    %4692 = vmatpush1.msra.mxu0 0.0
    %4693 = vmatprep.subr.mxu0 0.0
    %4694 = vmatpush1.msra.mxu0 0.0
    %4695 = vmatprep.subr.mxu0 0.0
    %4696 = vmatpush1.msra.mxu0 0.0
    %4697 = vmatprep.subr.mxu0 0.0
    %4698 = vmatpush1.msra.mxu0 0.0
    %4699 = vmatprep.subr.mxu0 0.0
    %4700 = vmatpush1.msra.mxu0 0.0
    %4701 = vmatprep.subr.mxu0 0.0
    %4702 = vmatpush1.msra.mxu0 0.0
    %4703 = vmatprep.subr.mxu0 0.0
    %4704 = vmatpush1.msra.mxu0 0.0
    %4705 = vmatprep.subr.mxu0 0.0
    %4706 = vmatpush1.msra.mxu0 0.0
    %4707 = vmatprep.subr.mxu0 0.0
    %4708 = vmatpush1.msra.mxu0 0.0
    %4709 = vmatprep.subr.mxu0 0.0
    %4710 = vmatpush1.msra.mxu0 0.0
    %4711 = vmatprep.subr.mxu0 0.0
    %4712 = vmatpush1.msra.mxu0 0.0
    %4713 = vmatprep.subr.mxu0 0.0
    %4714 = vmatpush1.msra.mxu0 0.0
    %4715 = vmatprep.mubr.f32.mxu0 0.0
    %4716 = vmatmul.mubr.f32.gmra.mrb[0].mxu0 %v4578
    %v4717 = vpop.f32.mrb[0].mxu0
    %v4718 = vadd.f32 %v3564, %v4717
    %v4719 = vpop.f32.mrb[0].mxu0
    %4720 = vdwg.mxu0
    %4721 = vmatprep.subr.mxu0 %v3341
    %4722 = vmatpush1.msra.mxu0 %v3340
    %4723 = vmatprep.subr.mxu0 %v3344
    %4724 = vmatpush1.msra.mxu0 %v3343
    %4725 = vmatprep.subr.mxu0 %v3347
    %4726 = vmatpush1.msra.mxu0 %v3346
    %4727 = vmatprep.subr.mxu0 %v3350
    %4728 = vmatpush1.msra.mxu0 %v3349
    %4729 = vmatprep.subr.mxu0 %v3353
    %4730 = vmatpush1.msra.mxu0 %v3352
    %4731 = vmatprep.subr.mxu0 %v3356
    %4732 = vmatpush1.msra.mxu0 %v3355
    %4733 = vmatprep.subr.mxu0 %v3359
    %4734 = vmatpush1.msra.mxu0 %v3358
    %4735 = vmatprep.subr.mxu0 %v3362
    %4736 = vmatpush1.msra.mxu0 %v3361
    %4737 = vmatprep.subr.mxu0 %v3365
    %4738 = vmatpush1.msra.mxu0 %v3364
    %4739 = vmatprep.subr.mxu0 %v3368
    %4740 = vmatpush1.msra.mxu0 %v3367
    %4741 = vmatprep.subr.mxu0 %v3371
    %4742 = vmatpush1.msra.mxu0 %v3370
    %4743 = vmatprep.subr.mxu0 %v3374
    %4744 = vmatpush1.msra.mxu0 %v3373
    %4745 = vmatprep.subr.mxu0 %v3377
    %4746 = vmatpush1.msra.mxu0 %v3376
    %4747 = vmatprep.subr.mxu0 %v3380
    %4748 = vmatpush1.msra.mxu0 %v3379
    %4749 = vmatprep.subr.mxu0 %v3383
    %4750 = vmatpush1.msra.mxu0 %v3382
    %4751 = vmatprep.subr.mxu0 %v3386
    %4752 = vmatpush1.msra.mxu0 %v3385
    %4753 = vmatprep.subr.mxu0 0.0
    %4754 = vmatpush1.msra.mxu0 0.0
    %4755 = vmatprep.subr.mxu0 0.0
    %4756 = vmatpush1.msra.mxu0 0.0
    %4757 = vmatprep.subr.mxu0 0.0
    %4758 = vmatpush1.msra.mxu0 0.0
    %4759 = vmatprep.subr.mxu0 0.0
    %4760 = vmatpush1.msra.mxu0 0.0
    %4761 = vmatprep.subr.mxu0 0.0
    %4762 = vmatpush1.msra.mxu0 0.0
    %4763 = vmatprep.subr.mxu0 0.0
    %4764 = vmatpush1.msra.mxu0 0.0
    %4765 = vmatprep.subr.mxu0 0.0
    %4766 = vmatpush1.msra.mxu0 0.0
    %4767 = vmatprep.subr.mxu0 0.0
    %4768 = vmatpush1.msra.mxu0 0.0
    %4769 = vmatprep.subr.mxu0 0.0
    %4770 = vmatpush1.msra.mxu0 0.0
    %4771 = vmatprep.subr.mxu0 0.0
    %4772 = vmatpush1.msra.mxu0 0.0
    %4773 = vmatprep.subr.mxu0 0.0
    %4774 = vmatpush1.msra.mxu0 0.0
    %4775 = vmatprep.subr.mxu0 0.0
    %4776 = vmatpush1.msra.mxu0 0.0
    %4777 = vmatprep.subr.mxu0 0.0
    %4778 = vmatpush1.msra.mxu0 0.0
    %4779 = vmatprep.subr.mxu0 0.0
    %4780 = vmatpush1.msra.mxu0 0.0
    %4781 = vmatprep.subr.mxu0 0.0
    %4782 = vmatpush1.msra.mxu0 0.0
    %4783 = vmatprep.subr.mxu0 0.0
    %4784 = vmatpush1.msra.mxu0 0.0
    %4785 = vmatprep.mubr.f32.mxu0 0.0
    %4786 = vmatmul.mubr.f32.gmra.mrb[0].mxu0 %v4386
    %v4787 = vpop.f32.mrb[0].mxu0
    %v4788 = vadd.f32 %v3717, %v4787
    %v4789 = vpop.f32.mrb[0].mxu0
    %v4790 = vadd.f32 %v3721, %v4789
    %4791 = vdwg.mxu0
    %4792 = vmatprep.subr.mxu0 0.0
    %4793 = vmatpush1.msra.mxu0 %v3342
    %4794 = vmatprep.subr.mxu0 0.0
    %4795 = vmatpush1.msra.mxu0 %v3345
    %4796 = vmatprep.subr.mxu0 0.0
    %4797 = vmatpush1.msra.mxu0 %v3348
    %4798 = vmatprep.subr.mxu0 0.0
    %4799 = vmatpush1.msra.mxu0 %v3351
    %4800 = vmatprep.subr.mxu0 0.0
    %4801 = vmatpush1.msra.mxu0 %v3354
    %4802 = vmatprep.subr.mxu0 0.0
    %4803 = vmatpush1.msra.mxu0 %v3357
    %4804 = vmatprep.subr.mxu0 0.0
    %4805 = vmatpush1.msra.mxu0 %v3360
    %4806 = vmatprep.subr.mxu0 0.0
    %4807 = vmatpush1.msra.mxu0 %v3363
    %4808 = vmatprep.subr.mxu0 0.0
    %4809 = vmatpush1.msra.mxu0 %v3366
    %4810 = vmatprep.subr.mxu0 0.0
    %4811 = vmatpush1.msra.mxu0 %v3369
    %4812 = vmatprep.subr.mxu0 0.0
    %4813 = vmatpush1.msra.mxu0 %v3372
    %4814 = vmatprep.subr.mxu0 0.0
    %4815 = vmatpush1.msra.mxu0 %v3375
    %4816 = vmatprep.subr.mxu0 0.0
    %4817 = vmatpush1.msra.mxu0 %v3378
    %4818 = vmatprep.subr.mxu0 0.0
    %4819 = vmatpush1.msra.mxu0 %v3381
    %4820 = vmatprep.subr.mxu0 0.0
    %4821 = vmatpush1.msra.mxu0 %v3384
    %4822 = vmatprep.subr.mxu0 0.0
    %4823 = vmatpush1.msra.mxu0 %v3387
    %4824 = vmatprep.subr.mxu0 0.0
    %4825 = vmatpush1.msra.mxu0 0.0
    %4826 = vmatprep.subr.mxu0 0.0
    %4827 = vmatpush1.msra.mxu0 0.0
    %4828 = vmatprep.subr.mxu0 0.0
    %4829 = vmatpush1.msra.mxu0 0.0
    %4830 = vmatprep.subr.mxu0 0.0
    %4831 = vmatpush1.msra.mxu0 0.0
    %4832 = vmatprep.subr.mxu0 0.0
    %4833 = vmatpush1.msra.mxu0 0.0
    %4834 = vmatprep.subr.mxu0 0.0
    %4835 = vmatpush1.msra.mxu0 0.0
    %4836 = vmatprep.subr.mxu0 0.0
    %4837 = vmatpush1.msra.mxu0 0.0
    %4838 = vmatprep.subr.mxu0 0.0
    %4839 = vmatpush1.msra.mxu0 0.0
    %4840 = vmatprep.subr.mxu0 0.0
    %4841 = vmatpush1.msra.mxu0 0.0
    %4842 = vmatprep.subr.mxu0 0.0
    %4843 = vmatpush1.msra.mxu0 0.0
    %4844 = vmatprep.subr.mxu0 0.0
    %4845 = vmatpush1.msra.mxu0 0.0
    %4846 = vmatprep.subr.mxu0 0.0
    %4847 = vmatpush1.msra.mxu0 0.0
    %4848 = vmatprep.subr.mxu0 0.0
    %4849 = vmatpush1.msra.mxu0 0.0
    %4850 = vmatprep.subr.mxu0 0.0
    %4851 = vmatpush1.msra.mxu0 0.0
    %4852 = vmatprep.subr.mxu0 0.0
    %4853 = vmatpush1.msra.mxu0 0.0
    %4854 = vmatprep.subr.mxu0 0.0
    %4855 = vmatpush1.msra.mxu0 0.0
    %4856 = vmatprep.mubr.f32.mxu0 0.0
    %4857 = vmatmul.mubr.f32.gmra.mrb[0].mxu0 %v4386
    %v4858 = vpop.f32.mrb[0].mxu0
    %v4859 = vadd.f32 %v3725, %v4858
    %v4860 = vpop.f32.mrb[0].mxu0
    %4861 = vdwg.mxu0
    %v4862 = vadd.f32 %v4647, %v4788
    %v4863 = vxor.u32 %v4862, 2147483648
    %v4864 = vmul.f32 %v4863, 1.442695
    %v4865 = vpow.pop %v4864
    %v4866 = vadd.f32 %v4865, 1.0
    %v4867 = vrcp.pop %v4866
    %v4868 = vmul.f32 1.0, %v4867
    %v4869 = vadd.f32 %v4649, %v4790
    %v4870 = vxor.u32 %v4869, 2147483648
    %v4871 = vmul.f32 %v4870, 1.442695
    %v4872 = vpow.pop %v4871
    %v4873 = vadd.f32 %v4872, 1.0
    %v4874 = vrcp.pop %v4873
    %v4875 = vmul.f32 1.0, %v4874
    %v4876 = vmul.f32 %v4868, %v4859
    %v4877 = vadd.f32 %v4718, %v4876
    %v4878 = vtanh.pop %v4877
    %v4879 = vsub.f32 1.0, %v4875
    %v4880 = vmul.f32 %v4879, %v4878
    %v4881 = vmul.f32 %v4875, %v4386
    %v4882 = vadd.f32 %v4880, %v4881
    %v4883 = vld [vmem:[#allocation14] sm:$0xff]
    %v4884 = vld [vmem:[#allocation14 + $0x8] sm:$0xff]
    %v4885 = vld [vmem:[#allocation14 + $0x10] sm:$0xff]
    %v4886 = vld [vmem:[#allocation14 + $0x18] sm:$0xff]
    %v4887 = vld [vmem:[#allocation14 + $0x20] sm:$0xff]
    %v4888 = vld [vmem:[#allocation14 + $0x28] sm:$0xff]
    %v4889 = vld [vmem:[#allocation14 + $0x30] sm:$0xff]
    %v4890 = vld [vmem:[#allocation14 + $0x38] sm:$0xff]
    %v4891 = vld [vmem:[#allocation14 + $0x40] sm:$0xff]
    %v4892 = vld [vmem:[#allocation14 + $0x48] sm:$0xff]
    %v4893 = vld [vmem:[#allocation14 + $0x50] sm:$0xff]
    %v4894 = vld [vmem:[#allocation14 + $0x58] sm:$0xff]
    %v4895 = vld [vmem:[#allocation14 + $0x60] sm:$0xff]
    %v4896 = vld [vmem:[#allocation14 + $0x68] sm:$0xff]
    %v4897 = vld [vmem:[#allocation14 + $0x70] sm:$0xff]
    %v4898 = vld [vmem:[#allocation14 + $0x78] sm:$0xff]
    %v4899 = vld [vmem:[#allocation14 + $0x80] sm:$0xff]
    %v4900 = vld [vmem:[#allocation14 + $0x88] sm:$0xff]
    %v4901 = vld [vmem:[#allocation14 + $0x90] sm:$0xff]
    %v4902 = vld [vmem:[#allocation14 + $0x98] sm:$0xff]
    %v4903 = vld [vmem:[#allocation14 + $0xa0] sm:$0xff]
    %v4904 = vld [vmem:[#allocation14 + $0xa8] sm:$0xff]
    %v4905 = vld [vmem:[#allocation14 + $0xb0] sm:$0xff]
    %v4906 = vld [vmem:[#allocation14 + $0xb8] sm:$0xff]
    %v4907 = vld [vmem:[#allocation14 + $0xc0] sm:$0xff]
    %v4908 = vld [vmem:[#allocation14 + $0xc8] sm:$0xff]
    %v4909 = vld [vmem:[#allocation14 + $0xd0] sm:$0xff]
    %v4910 = vld [vmem:[#allocation14 + $0xd8] sm:$0xff]
    %v4911 = vld [vmem:[#allocation14 + $0xe0] sm:$0xff]
    %v4912 = vld [vmem:[#allocation14 + $0xe8] sm:$0xff]
    %v4913 = vld [vmem:[#allocation14 + $0xf0] sm:$0xff]
    %v4914 = vld [vmem:[#allocation14 + $0xf8] sm:$0xff]
    %v4915 = vld [vmem:[#allocation15] sm:$0x1]
    %v4917 = vlaneseq
    %v4918 = vshrl.u32 %v4917, 7
    %v4919 = vsub.s32 0, %v4918
    %v4920 = vrot.slane %v4915, %v4919
    %4922 = vmatprep.subr.mxu0 0.0
    %4923 = vmatpush1.msra.mxu0 %v4883
    %4924 = vmatprep.subr.mxu0 0.0
    %4925 = vmatpush1.msra.mxu0 %v4884
    %4926 = vmatprep.subr.mxu0 0.0
    %4927 = vmatpush1.msra.mxu0 %v4885
    %4928 = vmatprep.subr.mxu0 0.0
    %4929 = vmatpush1.msra.mxu0 %v4886
    %4930 = vmatprep.subr.mxu0 0.0
    %4931 = vmatpush1.msra.mxu0 %v4887
    %4932 = vmatprep.subr.mxu0 0.0
    %4933 = vmatpush1.msra.mxu0 %v4888
    %4934 = vmatprep.subr.mxu0 0.0
    %4935 = vmatpush1.msra.mxu0 %v4889
    %4936 = vmatprep.subr.mxu0 0.0
    %4937 = vmatpush1.msra.mxu0 %v4890
    %4938 = vmatprep.subr.mxu0 0.0
    %4939 = vmatpush1.msra.mxu0 %v4891
    %4940 = vmatprep.subr.mxu0 0.0
    %4941 = vmatpush1.msra.mxu0 %v4892
    %4942 = vmatprep.subr.mxu0 0.0
    %4943 = vmatpush1.msra.mxu0 %v4893
    %4944 = vmatprep.subr.mxu0 0.0
    %4945 = vmatpush1.msra.mxu0 %v4894
    %4946 = vmatprep.subr.mxu0 0.0
    %4947 = vmatpush1.msra.mxu0 %v4895
    %4948 = vmatprep.subr.mxu0 0.0
    %4949 = vmatpush1.msra.mxu0 %v4896
    %4950 = vmatprep.subr.mxu0 0.0
    %4951 = vmatpush1.msra.mxu0 %v4897
    %4952 = vmatprep.subr.mxu0 0.0
    %4953 = vmatpush1.msra.mxu0 %v4898
    %4954 = vmatprep.subr.mxu0 0.0
    %4955 = vmatpush1.msra.mxu0 %v4899
    %4956 = vmatprep.subr.mxu0 0.0
    %4957 = vmatpush1.msra.mxu0 %v4900
    %4958 = vmatprep.subr.mxu0 0.0
    %4959 = vmatpush1.msra.mxu0 %v4901
    %4960 = vmatprep.subr.mxu0 0.0
    %4961 = vmatpush1.msra.mxu0 %v4902
    %4962 = vmatprep.subr.mxu0 0.0
    %4963 = vmatpush1.msra.mxu0 %v4903
    %4964 = vmatprep.subr.mxu0 0.0
    %4965 = vmatpush1.msra.mxu0 %v4904
    %4966 = vmatprep.subr.mxu0 0.0
    %4967 = vmatpush1.msra.mxu0 %v4905
    %4968 = vmatprep.subr.mxu0 0.0
    %4969 = vmatpush1.msra.mxu0 %v4906
    %4970 = vmatprep.subr.mxu0 0.0
    %4971 = vmatpush1.msra.mxu0 %v4907
    %4972 = vmatprep.subr.mxu0 0.0
    %4973 = vmatpush1.msra.mxu0 %v4908
    %4974 = vmatprep.subr.mxu0 0.0
    %4975 = vmatpush1.msra.mxu0 %v4909
    %4976 = vmatprep.subr.mxu0 0.0
    %4977 = vmatpush1.msra.mxu0 %v4910
    %4978 = vmatprep.subr.mxu0 0.0
    %4979 = vmatpush1.msra.mxu0 %v4911
    %4980 = vmatprep.subr.mxu0 0.0
    %4981 = vmatpush1.msra.mxu0 %v4912
    %4982 = vmatprep.subr.mxu0 0.0
    %4983 = vmatpush1.msra.mxu0 %v4913
    %4984 = vmatprep.subr.mxu0 0.0
    %4985 = vmatpush1.msra.mxu0 %v4914
    %4986 = vmatprep.mubr.f32.mxu0 %v3097
    %4987 = vmatmul.mubr.f32.gmra.mrb[0].mxu0 %v4882
    %v4988 = vpop.f32.mrb[0].mxu0
    %v4989 = vadd.f32 %v4920, %v4988
    %v4990 = vpop.f32.mrb[0].mxu0
    %4991 = vdwg.mxu0
    %4992 = vst [vmem:[#allocation17] sm:$0x3] %v4989
    // Predicated region
    $region134: #{dmn_forward.1} parent=1 // pred_check
      _
    $region135: #{dmn_forward.1} parent=1 // pred_check_branch
      %4994 = sbr.rel (0) target = $region137
    $region136: #{dmn_forward.1} parent=1 // pred_region
      _
    $region137: #{dmn_forward.1} parent=1 // pred_fallthru
      _
    // Predicated region
    $region138: #{dmn_forward.1} parent=1 // pred_check
      _
    $region139: #{dmn_forward.1} parent=1 // pred_check_branch
      %4996 = sbr.rel (0) target = $region141
    $region140: #{dmn_forward.1} parent=1 // pred_region
      %s4998 = ssub.s32 32, 32
      %4999 = vsyncadd [#allocation5], %s4998
      %s5001 = sshll.u32 [#allocation17], 4
      %s5002 = int_to_ptr.vmem [resolvable:$true] %s5001
      %5004 = dma.vmem_to_hbm [thread:$0]  %s5002, 32, %s26, [#allocation5]
    $region141: #{dmn_forward.1} parent=1 // pred_fallthru
      _
    // Predicated region
    $region142: #{dmn_forward.1} parent=1 // pred_check
      _
    $region143: #{dmn_forward.1} parent=1 // pred_check_branch
      %5006 = sbr.rel (0) target = $region145
    $region144: #{dmn_forward.1} parent=1 // pred_region
      _
    $region145: #{dmn_forward.1} parent=1 // pred_fallthru
      _
    // Predicated region
    $region146: #{dmn_forward.1} parent=1 // pred_check
      _
    $region147: #{dmn_forward.1} parent=1 // pred_check_branch
      %5008 = sbr.rel (0) target = $region149
    $region148: #{dmn_forward.1} parent=1 // pred_region
      %5009 = dma.done [#allocation5], 32
    $region149: #{dmn_forward.1} parent=1 // pred_fallthru
      _
    %5010 = vsyncpa [#allocation4], 1
    %5011 = vsyncpa [#allocation7], 1
    %5012 = vsyncpa [#allocation10], 1
    %5013 = vsyncpa [#allocation13], 1
    %5014 = vsyncpa [#allocation16], 1
    %5015 = vsyncpa [#allocation5], 1

</llo_original>
